<compile_context>
chip_gen: v6e
topology: v6e:2x2x1
jax: 0.10.0
libtpu: 0.0.40
codegen_flags: <defaults>
</compile_context>

<pallas_src>
import functools

import jax
import jax.numpy as jnp
import numpy as np
from jax.experimental import pallas as pl
from jax.experimental.pallas import tpu as pltpu


# ----------------------------------------------------------------------------
# Fused generator kernel.
# In-kernel activation layout: 2D f32 values of shape (N*H, W*C),
# rows ordered (n, h) n-major, columns ordered (w, c) w-major.
# ----------------------------------------------------------------------------
def _generator_kernel(noise_ref, label_ref, w1n_ref, w1l_ref,
                      r2a_ref, r2b_ref, r3a_ref, r3b_ref, r4a_ref, r4b_ref,
                      bn_ref, b4row_ref, out_ref, *, n, d):
    f32 = jnp.float32
    c1 = 2 * d          # channels of each first-layer branch
    cc = 4 * d          # channels after the branch concat (ct2 input)
    c2 = 2 * d          # ct2 output channels
    c3 = d              # ct3 output channels

    def matmul(x, w_ref):
        # bf16 operands, f32 accumulation on the MXU.
        return jnp.dot(x.astype(jnp.bfloat16), w_ref[...],
                       preferred_element_type=f32)

    def batchnorm_relu(blocks, groups, ch, gamma, beta, count):
        # blocks: f32 values of shape (rows, groups*ch) that together cover the
        # layer output exactly once.  One-pass stats: var = E[x^2] - E[x]^2.
        s = ss = None
        for b in blocks:
            bs = jnp.sum(b, axis=0, keepdims=True)
            bq = jnp.sum(b * b, axis=0, keepdims=True)
            s = bs if s is None else s + bs
            ss = bq if ss is None else ss + bq
        csum = s[:, 0:ch]
        csq = ss[:, 0:ch]
        for g in range(1, groups):
            csum = csum + s[:, g * ch:(g + 1) * ch]
            csq = csq + ss[:, g * ch:(g + 1) * ch]
        mean = csum * (1.0 / count)
        var = csq * (1.0 / count) - mean * mean
        scale = gamma * jax.lax.rsqrt(var + 1e-5)          # (1, ch)
        shift = beta - mean * scale
        scale_row = jnp.concatenate([scale] * groups, axis=1)
        shift_row = jnp.concatenate([shift] * groups, axis=1)
        return [jnp.maximum(b * scale_row + shift_row, 0.0) for b in blocks]

    def shifted(x, e, h):
        # per-image row shift with zero boundary: out[n, m] = x[n, m + e]
        if e == 0:
            return x
        zero = jnp.zeros((1, x.shape[1]), f32)
        pieces = []
        for i in range(n):
            img = x[i * h:(i + 1) * h, :]
            if e == -1:
                pieces.append(zero)
                pieces.append(img[:h - 1, :])
            else:                                  # e == +1
                pieces.append(img[1:, :])
                pieces.append(zero)
        return jnp.concatenate(pieces, axis=0)

    def up_layer(x, h, ra_ref, rb_ref):
        # stride-2 / pad-1 / K=4 ConvTranspose2d: one matmul per row phase.
        xm1 = shifted(x, -1, h)
        xp1 = shifted(x, 1, h)
        y0 = matmul(jnp.concatenate([xm1, x], axis=1), ra_ref)   # even rows
        y1 = matmul(jnp.concatenate([x, xp1], axis=1), rb_ref)   # odd rows
        return y0, y1

    def interleave_rows(y0, y1, h):
        rows = []
        for i in range(n):
            for m in range(h):
                rows.append(y0[i * h + m:i * h + m + 1, :])
                rows.append(y1[i * h + m:i * h + m + 1, :])
        return jnp.concatenate(rows, axis=0)

    # BatchNorm affine params, packed row-wise in bn_ref (f32, (8, 2d)).
    g1n, b1n = bn_ref[0:1, 0:c1], bn_ref[1:2, 0:c1]
    g1l, b1l = bn_ref[2:3, 0:c1], bn_ref[3:4, 0:c1]
    g2, b2 = bn_ref[4:5, 0:c2], bn_ref[5:6, 0:c2]
    g3, b3 = bn_ref[6:7, 0:c3], bn_ref[7:8, 0:c3]

    # ---- layer 1: 1x1 -> 4x4, stride 1, pad 0  ==  plain matmul --------------
    z_n = matmul(noise_ref[...], w1n_ref)       # (N, 16*c1), cols (kh, kw, c)
    z_l = matmul(label_ref[...], w1l_ref)
    (z_n,) = batchnorm_relu([z_n], 16, c1, g1n, b1n, n * 16)
    (z_l,) = batchnorm_relu([z_l], 16, c1, g1l, b1l, n * 16)

    # channel-concat the two branches (columns stay (kh, kw, c) ordered) ...
    zc = jnp.concatenate(
        [blk for g in range(16)
         for blk in (z_n[:, g * c1:(g + 1) * c1],
                     z_l[:, g * c1:(g + 1) * c1])],
        axis=1)                                  # (N, 16*cc)
    # ... then split the kh groups into rows -> activation layout (4N, 4*cc)
    a2 = jnp.concatenate(
        [zc[i:i + 1, kh * 4 * cc:(kh + 1) * 4 * cc]
         for i in range(n) for kh in range(4)], axis=0)

    # ---- layer 2: 4x4 -> 8x8 --------------------------------------------------
    y0, y1 = up_layer(a2, 4, r2a_ref, r2b_ref)           # each (4N, 8*c2)
    y0, y1 = batchnorm_relu([y0, y1], 8, c2, g2, b2, n * 8 * 8)
    a3 = interleave_rows(y0, y1, 4)                      # (8N, 8*c2)

    # ---- layer 3: 8x8 -> 16x16 ------------------------------------------------
    y0, y1 = up_layer(a3, 8, r3a_ref, r3b_ref)           # each (8N, 16*c3)
    y0, y1 = batchnorm_relu([y0, y1], 16, c3, g3, b3, n * 16 * 16)
    a4 = interleave_rows(y0, y1, 8)                      # (16N, 16*c3)

    # ---- layer 4: 16x16 -> 32x32, bias + tanh (no BN) --------------------------
    y0, y1 = up_layer(a4, 16, r4a_ref, r4b_ref)          # each (16N, 32*c)
    bias_row = b4row_ref[...]                            # (1, 32*c), (ow, c)
    y0 = jnp.tanh(y0 + bias_row)
    y1 = jnp.tanh(y1 + bias_row)
    # lane-dense output: rows = (n, m'), cols = (row phase a, ow, c)
    out_ref[...] = jnp.concatenate([y0, y1], axis=1)


# ----------------------------------------------------------------------------
# Host-side weight packing (hoisted out of the forward pass; run once).
# ----------------------------------------------------------------------------
def _phase_matrix(w_pt, a, w_in):
    """Dense matrix for output row phase `a` of a K=4 / stride-2 / pad-1
    ConvTranspose2d acting on one pair of (row-shifted) activation rows.

    w_pt: (Cin, Cout, 4, 4) (PyTorch ConvTranspose2d layout).
    Row index:  slot*(w_in*Cin) + j_in*Cin + ci
                (slot 0: input row m+a-1 -> kernel row 3-a,
                 slot 1: input row m+a   -> kernel row 1-a)
    Col index:  ow*Cout + co              (ow = fine output column)
    """
    w_np = np.asarray(w_pt, np.float32)
    cin, cout, k, _ = w_np.shape
    w_out = 2 * w_in
    r = np.zeros((2 * w_in * cin, w_out * cout), np.float32)
    for slot in range(2):
        kh = 3 - a - 2 * slot
        for j in range(w_in):
            for ow in range(w_out):
                kw = ow - 2 * j + 1
                if 0 <= kw < k:
                    r[(slot * w_in + j) * cin:(slot * w_in + j + 1) * cin,
                      ow * cout:(ow + 1) * cout] = w_np[:, :, kh, kw]
    return r


def pack_generator_params(p, d=16, c=1, l=10):
    del l
    c1, c3 = 2 * d, d

    def w1_col(w):   # (Cin, Cout, 4, 4) -> (Cin, 16*Cout), cols (kh, kw, c)
        cin, cout = w.shape[0], w.shape[1]
        return jnp.transpose(w, (0, 2, 3, 1)).reshape(cin, 16 * cout)

    bn = np.zeros((8, c1), np.float32)
    bn[0, :c1] = np.asarray(p["bn1n_g"]); bn[1, :c1] = np.asarray(p["bn1n_b"])
    bn[2, :c1] = np.asarray(p["bn1l_g"]); bn[3, :c1] = np.asarray(p["bn1l_b"])
    bn[4, :c1] = np.asarray(p["bn2_g"]);  bn[5, :c1] = np.asarray(p["bn2_b"])
    bn[6, :c3] = np.asarray(p["bn3_g"]);  bn[7, :c3] = np.asarray(p["bn3_b"])

    bf16 = jnp.bfloat16
    return {
        "w1n": w1_col(p["ct1_noise_w"]).astype(bf16),
        "w1l": w1_col(p["ct1_label_w"]).astype(bf16),
        "r2a": jnp.asarray(_phase_matrix(p["ct2_w"], 0, 4)).astype(bf16),
        "r2b": jnp.asarray(_phase_matrix(p["ct2_w"], 1, 4)).astype(bf16),
        "r3a": jnp.asarray(_phase_matrix(p["ct3_w"], 0, 8)).astype(bf16),
        "r3b": jnp.asarray(_phase_matrix(p["ct3_w"], 1, 8)).astype(bf16),
        "r4a": jnp.asarray(_phase_matrix(p["ct4_w"], 0, 16)).astype(bf16),
        "r4b": jnp.asarray(_phase_matrix(p["ct4_w"], 1, 16)).astype(bf16),
        "bn": jnp.asarray(bn),
        "b4row": jnp.tile(jnp.asarray(p["ct4_b"], jnp.float32).reshape(1, c),
                          (1, 32)),
    }


# ----------------------------------------------------------------------------
# Forward wrapper (single pallas_call; NCHW glue only outside the kernel).
# ----------------------------------------------------------------------------
@functools.partial(jax.jit, static_argnames=("d", "c"))
def generator_forward(packed, noise_nchw, label_nchw, d=16, c=1):
    n = noise_nchw.shape[0]
    noise2d = noise_nchw.reshape(n, -1).astype(jnp.float32)
    label2d = label_nchw.reshape(n, -1).astype(jnp.float32)
    vmem = pl.BlockSpec(memory_space=pltpu.MemorySpace.VMEM)
    out2d = pl.pallas_call(
        functools.partial(_generator_kernel, n=n, d=d),
        out_shape=jax.ShapeDtypeStruct((16 * n, 2 * 32 * c), jnp.float32),
        in_specs=[vmem] * 12,
        out_specs=vmem,
    )(noise2d, label2d,
      packed["w1n"], packed["w1l"],
      packed["r2a"], packed["r2b"],
      packed["r3a"], packed["r3b"],
      packed["r4a"], packed["r4b"],
      packed["bn"], packed["b4row"])
    # rows = (n, m'), cols = (row phase a, ow, c)  ->  NCHW with oh = 2*m' + a
    t = out2d.reshape(n, 16, 2, 32, c)
    return jnp.transpose(t, (0, 4, 1, 2, 3)).reshape(n, c, 32, 32)


# ----------------------------------------------------------------------------
# Parameter init (PyTorch layout) and a plain-JAX reference of the module.
# ----------------------------------------------------------------------------
def init_generator_params(key, d=16, c=1, l=10):
    std = 0.02

    def nrm(k, shape):
        return std * jax.random.normal(k, shape, dtype=jnp.float32)

    keys = jax.random.split(key, 16)
    p = {}
    p["ct1_noise_w"] = nrm(keys[0], (100, d * 2, 4, 4))
    p["ct1_noise_b"] = nrm(keys[1], (d * 2,))
    p["ct1_label_w"] = nrm(keys[2], (l, d * 2, 4, 4))
    p["ct1_label_b"] = nrm(keys[3], (d * 2,))
    p["ct2_w"] = nrm(keys[4], (d * 4, d * 2, 4, 4))
    p["ct2_b"] = nrm(keys[5], (d * 2,))
    p["ct3_w"] = nrm(keys[6], (d * 2, d, 4, 4))
    p["ct3_b"] = nrm(keys[7], (d,))
    p["ct4_w"] = nrm(keys[8], (d, c, 4, 4))
    p["ct4_b"] = nrm(keys[9], (c,))
    p["bn1n_g"] = 1.0 + nrm(keys[10], (d * 2,))
    p["bn1n_b"] = nrm(keys[11], (d * 2,))
    p["bn1l_g"] = 1.0 + nrm(keys[12], (d * 2,))
    p["bn1l_b"] = nrm(keys[13], (d * 2,))
    p["bn2_g"] = 1.0 + nrm(keys[14], (d * 2,))
    p["bn2_b"] = jnp.zeros((d * 2,), jnp.float32)
    p["bn3_g"] = 1.0 + nrm(keys[15], (d,))
    p["bn3_b"] = jnp.zeros((d,), jnp.float32)
    return p


def _ref_conv_transpose(x_nhwc, w, b, stride, pad):
    n, h, wid, _ = x_nhwc.shape
    _, cout, k, _ = w.shape
    ho = (h - 1) * stride - 2 * pad + k
    wo = (wid - 1) * stride - 2 * pad + k
    out = jnp.zeros((n, ho + 2 * pad, wo + 2 * pad, cout), jnp.float32)
    for kh in range(k):
        for kw in range(k):
            contrib = jnp.einsum("nhwc,cd->nhwd", x_nhwc, w[:, :, kh, kw])
            out = out.at[:, kh:kh + (h - 1) * stride + 1:stride,
                         kw:kw + (wid - 1) * stride + 1:stride, :].add(contrib)
    return out[:, pad:pad + ho, pad:pad + wo, :] + b


def _ref_bn_relu(x, g, b):
    mean = jnp.mean(x, axis=(0, 1, 2), keepdims=True)
    var = jnp.mean((x - mean) ** 2, axis=(0, 1, 2), keepdims=True)
    return jnp.maximum((x - mean) * jax.lax.rsqrt(var + 1e-5) * g + b, 0.0)


def reference_forward(p, noise_nchw, label_nchw, l=10):
    n = noise_nchw.shape[0]
    noise = noise_nchw.reshape(n, 1, 1, 100)
    label = label_nchw.reshape(n, 1, 1, l)
    x = _ref_bn_relu(_ref_conv_transpose(noise, p["ct1_noise_w"],
                                         p["ct1_noise_b"], 1, 0),
                     p["bn1n_g"], p["bn1n_b"])
    y = _ref_bn_relu(_ref_conv_transpose(label, p["ct1_label_w"],
                                         p["ct1_label_b"], 1, 0),
                     p["bn1l_g"], p["bn1l_b"])
    h = jnp.concatenate([x, y], axis=-1)
    h = _ref_bn_relu(_ref_conv_transpose(h, p["ct2_w"], p["ct2_b"], 2, 1),
                     p["bn2_g"], p["bn2_b"])
    h = _ref_bn_relu(_ref_conv_transpose(h, p["ct3_w"], p["ct3_b"], 2, 1),
                     p["bn3_g"], p["bn3_b"])
    h = jnp.tanh(_ref_conv_transpose(h, p["ct4_w"], p["ct4_b"], 2, 1))
    return jnp.transpose(h, (0, 3, 1, 2))


if __name__ == "__main__":
    d, c, l, batch = 16, 1, 10, 2   # small base multiplier for a quick run

    key = jax.random.PRNGKey(0)
    kp, kn, kl = jax.random.split(key, 3)
    params = init_generator_params(kp, d=d, c=c, l=l)
    packed = pack_generator_params(params, d=d, c=c, l=l)   # hoisted, run once

    noise = jax.random.normal(kn, (batch, 100, 1, 1), dtype=jnp.float32)
    labels = jax.random.randint(kl, (batch,), 0, l)
    label_onehot = jax.nn.one_hot(labels, l, dtype=jnp.float32).reshape(batch, l, 1, 1)

    out = generator_forward(packed, noise, label_onehot, d=d, c=c)
    out = jax.block_until_ready(out)

    assert out.shape == (batch, c, 32, 32), out.shape
    assert bool(jnp.all(jnp.isfinite(out)))
    assert bool(jnp.all(jnp.abs(out) <= 1.0))   # tanh range

    # correctness vs. a plain-JAX rendering of the PyTorch module
    ref = jax.jit(functools.partial(reference_forward, l=l))(
        params, noise, label_onehot)
    max_err = float(jnp.max(jnp.abs(out - ref)))
    assert max_err < 0.2, f"mismatch vs reference: {max_err}"

    print("KERNEL_OK")
</pallas_src>

<mosaic_0001>
module attributes {stable_mosaic.version = 11 : i64} {
  func.func @_generator_kernel(%arg0: memref<2x100xf32, #tpu.memory_space<vmem>>, %arg1: memref<2x10xf32, #tpu.memory_space<vmem>>, %arg2: memref<100x512xbf16, #tpu.memory_space<vmem>>, %arg3: memref<10x512xbf16, #tpu.memory_space<vmem>>, %arg4: memref<512x256xbf16, #tpu.memory_space<vmem>>, %arg5: memref<512x256xbf16, #tpu.memory_space<vmem>>, %arg6: memref<512x256xbf16, #tpu.memory_space<vmem>>, %arg7: memref<512x256xbf16, #tpu.memory_space<vmem>>, %arg8: memref<512x32xbf16, #tpu.memory_space<vmem>>, %arg9: memref<512x32xbf16, #tpu.memory_space<vmem>>, %arg10: memref<8x32xf32, #tpu.memory_space<vmem>>, %arg11: memref<1x32xf32, #tpu.memory_space<vmem>>, %arg12: memref<32x64xf32, #tpu.memory_space<vmem>>) attributes {dimension_semantics = [], scalar_prefetch = 0 : i64, scratch_operands = 0 : i64, tpu.core_type = #tpu.core_type<tc>} {
    %c0 = arith.constant 0 : index
    %c0_0 = arith.constant 0 : index
    %0 = vector.load %arg10[%c0, %c0_0] : memref<8x32xf32, #tpu.memory_space<vmem>>, vector<1x32xf32>
    %c1 = arith.constant 1 : index
    %c0_1 = arith.constant 0 : index
    %1 = vector.load %arg10[%c1, %c0_1] : memref<8x32xf32, #tpu.memory_space<vmem>>, vector<1x32xf32>
    %c2 = arith.constant 2 : index
    %c0_2 = arith.constant 0 : index
    %2 = vector.load %arg10[%c2, %c0_2] : memref<8x32xf32, #tpu.memory_space<vmem>>, vector<1x32xf32>
    %c3 = arith.constant 3 : index
    %c0_3 = arith.constant 0 : index
    %3 = vector.load %arg10[%c3, %c0_3] : memref<8x32xf32, #tpu.memory_space<vmem>>, vector<1x32xf32>
    %c4 = arith.constant 4 : index
    %c0_4 = arith.constant 0 : index
    %4 = vector.load %arg10[%c4, %c0_4] : memref<8x32xf32, #tpu.memory_space<vmem>>, vector<1x32xf32>
    %c5 = arith.constant 5 : index
    %c0_5 = arith.constant 0 : index
    %5 = vector.load %arg10[%c5, %c0_5] : memref<8x32xf32, #tpu.memory_space<vmem>>, vector<1x32xf32>
    %c6 = arith.constant 6 : index
    %c0_6 = arith.constant 0 : index
    %6 = vector.load %arg10[%c6, %c0_6] : memref<8x32xf32, #tpu.memory_space<vmem>>, vector<1x16xf32>
    %c7 = arith.constant 7 : index
    %c0_7 = arith.constant 0 : index
    %7 = vector.load %arg10[%c7, %c0_7] : memref<8x32xf32, #tpu.memory_space<vmem>>, vector<1x16xf32>
    %c0_8 = arith.constant 0 : index
    %c0_9 = arith.constant 0 : index
    %8 = vector.load %arg0[%c0_8, %c0_9] : memref<2x100xf32, #tpu.memory_space<vmem>>, vector<2x100xf32>
    %9 = arith.truncf %8 : vector<2x100xf32> to vector<2x100xbf16>
    %c0_10 = arith.constant 0 : index
    %c0_11 = arith.constant 0 : index
    %10 = vector.load %arg2[%c0_10, %c0_11] : memref<100x512xbf16, #tpu.memory_space<vmem>>, vector<100x512xbf16>
    %cst = arith.constant dense<0.000000e+00> : vector<2x512xf32>
    %11 = tpu.matmul %9, %10, %cst {dimension_numbers = #tpu.dot_dimension_numbers<[1], [0], [0], [1], [0, 0, 1, 1], [], []>} : vector<2x100xbf16>, vector<100x512xbf16>, vector<2x512xf32> -> vector<2x512xf32>
    %c0_12 = arith.constant 0 : index
    %c0_13 = arith.constant 0 : index
    %12 = vector.load %arg1[%c0_12, %c0_13] : memref<2x10xf32, #tpu.memory_space<vmem>>, vector<2x10xf32>
    %13 = arith.truncf %12 : vector<2x10xf32> to vector<2x10xbf16>
    %c0_14 = arith.constant 0 : index
    %c0_15 = arith.constant 0 : index
    %14 = vector.load %arg3[%c0_14, %c0_15] : memref<10x512xbf16, #tpu.memory_space<vmem>>, vector<10x512xbf16>
    %cst_16 = arith.constant dense<0.000000e+00> : vector<2x512xf32>
    %15 = tpu.matmul %13, %14, %cst_16 {dimension_numbers = #tpu.dot_dimension_numbers<[1], [0], [0], [1], [0, 0, 1, 1], [], []>} : vector<2x10xbf16>, vector<10x512xbf16>, vector<2x512xf32> -> vector<2x512xf32>
    %cst_17 = arith.constant dense<0.000000e+00> : vector<512xf32>
    %16 = vector.multi_reduction <add>, %11, %cst_17 [0] : vector<2x512xf32> to vector<512xf32>
    %17 = vector.shape_cast %16 : vector<512xf32> to vector<1x512xf32>
    %18 = arith.mulf %11, %11 : vector<2x512xf32>
    %cst_18 = arith.constant dense<0.000000e+00> : vector<512xf32>
    %19 = vector.multi_reduction <add>, %18, %cst_18 [0] : vector<2x512xf32> to vector<512xf32>
    %20 = vector.shape_cast %19 : vector<512xf32> to vector<1x512xf32>
    %21 = vector.extract_strided_slice %17 {offsets = [0, 0], sizes = [1, 32], strides = [1, 1]} : vector<1x512xf32> to vector<1x32xf32>
    %22 = vector.extract_strided_slice %20 {offsets = [0, 0], sizes = [1, 32], strides = [1, 1]} : vector<1x512xf32> to vector<1x32xf32>
    %23 = vector.extract_strided_slice %17 {offsets = [0, 32], sizes = [1, 32], strides = [1, 1]} : vector<1x512xf32> to vector<1x32xf32>
    %24 = arith.addf %21, %23 : vector<1x32xf32>
    %25 = vector.extract_strided_slice %20 {offsets = [0, 32], sizes = [1, 32], strides = [1, 1]} : vector<1x512xf32> to vector<1x32xf32>
    %26 = arith.addf %22, %25 : vector<1x32xf32>
    %27 = vector.extract_strided_slice %17 {offsets = [0, 64], sizes = [1, 32], strides = [1, 1]} : vector<1x512xf32> to vector<1x32xf32>
    %28 = arith.addf %24, %27 : vector<1x32xf32>
    %29 = vector.extract_strided_slice %20 {offsets = [0, 64], sizes = [1, 32], strides = [1, 1]} : vector<1x512xf32> to vector<1x32xf32>
    %30 = arith.addf %26, %29 : vector<1x32xf32>
    %31 = vector.extract_strided_slice %17 {offsets = [0, 96], sizes = [1, 32], strides = [1, 1]} : vector<1x512xf32> to vector<1x32xf32>
    %32 = arith.addf %28, %31 : vector<1x32xf32>
    %33 = vector.extract_strided_slice %20 {offsets = [0, 96], sizes = [1, 32], strides = [1, 1]} : vector<1x512xf32> to vector<1x32xf32>
    %34 = arith.addf %30, %33 : vector<1x32xf32>
    %35 = vector.extract_strided_slice %17 {offsets = [0, 128], sizes = [1, 32], strides = [1, 1]} : vector<1x512xf32> to vector<1x32xf32>
    %36 = arith.addf %32, %35 : vector<1x32xf32>
    %37 = vector.extract_strided_slice %20 {offsets = [0, 128], sizes = [1, 32], strides = [1, 1]} : vector<1x512xf32> to vector<1x32xf32>
    %38 = arith.addf %34, %37 : vector<1x32xf32>
    %39 = vector.extract_strided_slice %17 {offsets = [0, 160], sizes = [1, 32], strides = [1, 1]} : vector<1x512xf32> to vector<1x32xf32>
    %40 = arith.addf %36, %39 : vector<1x32xf32>
    %41 = vector.extract_strided_slice %20 {offsets = [0, 160], sizes = [1, 32], strides = [1, 1]} : vector<1x512xf32> to vector<1x32xf32>
    %42 = arith.addf %38, %41 : vector<1x32xf32>
    %43 = vector.extract_strided_slice %17 {offsets = [0, 192], sizes = [1, 32], strides = [1, 1]} : vector<1x512xf32> to vector<1x32xf32>
    %44 = arith.addf %40, %43 : vector<1x32xf32>
    %45 = vector.extract_strided_slice %20 {offsets = [0, 192], sizes = [1, 32], strides = [1, 1]} : vector<1x512xf32> to vector<1x32xf32>
    %46 = arith.addf %42, %45 : vector<1x32xf32>
    %47 = vector.extract_strided_slice %17 {offsets = [0, 224], sizes = [1, 32], strides = [1, 1]} : vector<1x512xf32> to vector<1x32xf32>
    %48 = arith.addf %44, %47 : vector<1x32xf32>
    %49 = vector.extract_strided_slice %20 {offsets = [0, 224], sizes = [1, 32], strides = [1, 1]} : vector<1x512xf32> to vector<1x32xf32>
    %50 = arith.addf %46, %49 : vector<1x32xf32>
    %51 = vector.extract_strided_slice %17 {offsets = [0, 256], sizes = [1, 32], strides = [1, 1]} : vector<1x512xf32> to vector<1x32xf32>
    %52 = arith.addf %48, %51 : vector<1x32xf32>
    %53 = vector.extract_strided_slice %20 {offsets = [0, 256], sizes = [1, 32], strides = [1, 1]} : vector<1x512xf32> to vector<1x32xf32>
    %54 = arith.addf %50, %53 : vector<1x32xf32>
    %55 = vector.extract_strided_slice %17 {offsets = [0, 288], sizes = [1, 32], strides = [1, 1]} : vector<1x512xf32> to vector<1x32xf32>
    %56 = arith.addf %52, %55 : vector<1x32xf32>
    %57 = vector.extract_strided_slice %20 {offsets = [0, 288], sizes = [1, 32], strides = [1, 1]} : vector<1x512xf32> to vector<1x32xf32>
    %58 = arith.addf %54, %57 : vector<1x32xf32>
    %59 = vector.extract_strided_slice %17 {offsets = [0, 320], sizes = [1, 32], strides = [1, 1]} : vector<1x512xf32> to vector<1x32xf32>
    %60 = arith.addf %56, %59 : vector<1x32xf32>
    %61 = vector.extract_strided_slice %20 {offsets = [0, 320], sizes = [1, 32], strides = [1, 1]} : vector<1x512xf32> to vector<1x32xf32>
    %62 = arith.addf %58, %61 : vector<1x32xf32>
    %63 = vector.extract_strided_slice %17 {offsets = [0, 352], sizes = [1, 32], strides = [1, 1]} : vector<1x512xf32> to vector<1x32xf32>
    %64 = arith.addf %60, %63 : vector<1x32xf32>
    %65 = vector.extract_strided_slice %20 {offsets = [0, 352], sizes = [1, 32], strides = [1, 1]} : vector<1x512xf32> to vector<1x32xf32>
    %66 = arith.addf %62, %65 : vector<1x32xf32>
    %67 = vector.extract_strided_slice %17 {offsets = [0, 384], sizes = [1, 32], strides = [1, 1]} : vector<1x512xf32> to vector<1x32xf32>
    %68 = arith.addf %64, %67 : vector<1x32xf32>
    %69 = vector.extract_strided_slice %20 {offsets = [0, 384], sizes = [1, 32], strides = [1, 1]} : vector<1x512xf32> to vector<1x32xf32>
    %70 = arith.addf %66, %69 : vector<1x32xf32>
    %71 = vector.extract_strided_slice %17 {offsets = [0, 416], sizes = [1, 32], strides = [1, 1]} : vector<1x512xf32> to vector<1x32xf32>
    %72 = arith.addf %68, %71 : vector<1x32xf32>
    %73 = vector.extract_strided_slice %20 {offsets = [0, 416], sizes = [1, 32], strides = [1, 1]} : vector<1x512xf32> to vector<1x32xf32>
    %74 = arith.addf %70, %73 : vector<1x32xf32>
    %75 = vector.extract_strided_slice %17 {offsets = [0, 448], sizes = [1, 32], strides = [1, 1]} : vector<1x512xf32> to vector<1x32xf32>
    %76 = arith.addf %72, %75 : vector<1x32xf32>
    %77 = vector.extract_strided_slice %20 {offsets = [0, 448], sizes = [1, 32], strides = [1, 1]} : vector<1x512xf32> to vector<1x32xf32>
    %78 = arith.addf %74, %77 : vector<1x32xf32>
    %79 = vector.extract_strided_slice %17 {offsets = [0, 480], sizes = [1, 32], strides = [1, 1]} : vector<1x512xf32> to vector<1x32xf32>
    %80 = arith.addf %76, %79 : vector<1x32xf32>
    %81 = vector.extract_strided_slice %20 {offsets = [0, 480], sizes = [1, 32], strides = [1, 1]} : vector<1x512xf32> to vector<1x32xf32>
    %82 = arith.addf %78, %81 : vector<1x32xf32>
    %cst_19 = arith.constant 3.125000e-02 : f32
    %83 = vector.broadcast %cst_19 : f32 to vector<1x32xf32>
    %84 = arith.mulf %80, %83 : vector<1x32xf32>
    %cst_20 = arith.constant 3.125000e-02 : f32
    %85 = vector.broadcast %cst_20 : f32 to vector<1x32xf32>
    %86 = arith.mulf %82, %85 : vector<1x32xf32>
    %87 = arith.mulf %84, %84 : vector<1x32xf32>
    %88 = arith.subf %86, %87 : vector<1x32xf32>
    %cst_21 = arith.constant 9.99999974E-6 : f32
    %89 = vector.broadcast %cst_21 : f32 to vector<1x32xf32>
    %90 = arith.addf %88, %89 : vector<1x32xf32>
    %91 = math.rsqrt %90 : vector<1x32xf32>
    %92 = arith.mulf %0, %91 : vector<1x32xf32>
    %93 = arith.mulf %84, %92 : vector<1x32xf32>
    %94 = arith.subf %1, %93 : vector<1x32xf32>
    %95 = tpu.concatenate %92, %92, %92, %92, %92, %92, %92, %92, %92, %92, %92, %92, %92, %92, %92, %92 in 1 : vector<1x32xf32>, vector<1x32xf32>, vector<1x32xf32>, vector<1x32xf32>, vector<1x32xf32>, vector<1x32xf32>, vector<1x32xf32>, vector<1x32xf32>, vector<1x32xf32>, vector<1x32xf32>, vector<1x32xf32>, vector<1x32xf32>, vector<1x32xf32>, vector<1x32xf32>, vector<1x32xf32>, vector<1x32xf32> -> vector<1x512xf32>
    %96 = tpu.concatenate %94, %94, %94, %94, %94, %94, %94, %94, %94, %94, %94, %94, %94, %94, %94, %94 in 1 : vector<1x32xf32>, vector<1x32xf32>, vector<1x32xf32>, vector<1x32xf32>, vector<1x32xf32>, vector<1x32xf32>, vector<1x32xf32>, vector<1x32xf32>, vector<1x32xf32>, vector<1x32xf32>, vector<1x32xf32>, vector<1x32xf32>, vector<1x32xf32>, vector<1x32xf32>, vector<1x32xf32>, vector<1x32xf32> -> vector<1x512xf32>
    %97 = vector.broadcast %95 : vector<1x512xf32> to vector<2x512xf32>
    %98 = arith.mulf %11, %97 : vector<2x512xf32>
    %99 = vector.broadcast %96 : vector<1x512xf32> to vector<2x512xf32>
    %100 = arith.addf %98, %99 : vector<2x512xf32>
    %cst_22 = arith.constant 0.000000e+00 : f32
    %101 = vector.broadcast %cst_22 : f32 to vector<2x512xf32>
    %102 = arith.maximumf %100, %101 : vector<2x512xf32>
    %cst_23 = arith.constant dense<0.000000e+00> : vector<512xf32>
    %103 = vector.multi_reduction <add>, %15, %cst_23 [0] : vector<2x512xf32> to vector<512xf32>
    %104 = vector.shape_cast %103 : vector<512xf32> to vector<1x512xf32>
    %105 = arith.mulf %15, %15 : vector<2x512xf32>
    %cst_24 = arith.constant dense<0.000000e+00> : vector<512xf32>
    %106 = vector.multi_reduction <add>, %105, %cst_24 [0] : vector<2x512xf32> to vector<512xf32>
    %107 = vector.shape_cast %106 : vector<512xf32> to vector<1x512xf32>
    %108 = vector.extract_strided_slice %104 {offsets = [0, 0], sizes = [1, 32], strides = [1, 1]} : vector<1x512xf32> to vector<1x32xf32>
    %109 = vector.extract_strided_slice %107 {offsets = [0, 0], sizes = [1, 32], strides = [1, 1]} : vector<1x512xf32> to vector<1x32xf32>
    %110 = vector.extract_strided_slice %104 {offsets = [0, 32], sizes = [1, 32], strides = [1, 1]} : vector<1x512xf32> to vector<1x32xf32>
    %111 = arith.addf %108, %110 : vector<1x32xf32>
    %112 = vector.extract_strided_slice %107 {offsets = [0, 32], sizes = [1, 32], strides = [1, 1]} : vector<1x512xf32> to vector<1x32xf32>
    %113 = arith.addf %109, %112 : vector<1x32xf32>
    %114 = vector.extract_strided_slice %104 {offsets = [0, 64], sizes = [1, 32], strides = [1, 1]} : vector<1x512xf32> to vector<1x32xf32>
    %115 = arith.addf %111, %114 : vector<1x32xf32>
    %116 = vector.extract_strided_slice %107 {offsets = [0, 64], sizes = [1, 32], strides = [1, 1]} : vector<1x512xf32> to vector<1x32xf32>
    %117 = arith.addf %113, %116 : vector<1x32xf32>
    %118 = vector.extract_strided_slice %104 {offsets = [0, 96], sizes = [1, 32], strides = [1, 1]} : vector<1x512xf32> to vector<1x32xf32>
    %119 = arith.addf %115, %118 : vector<1x32xf32>
    %120 = vector.extract_strided_slice %107 {offsets = [0, 96], sizes = [1, 32], strides = [1, 1]} : vector<1x512xf32> to vector<1x32xf32>
    %121 = arith.addf %117, %120 : vector<1x32xf32>
    %122 = vector.extract_strided_slice %104 {offsets = [0, 128], sizes = [1, 32], strides = [1, 1]} : vector<1x512xf32> to vector<1x32xf32>
    %123 = arith.addf %119, %122 : vector<1x32xf32>
    %124 = vector.extract_strided_slice %107 {offsets = [0, 128], sizes = [1, 32], strides = [1, 1]} : vector<1x512xf32> to vector<1x32xf32>
    %125 = arith.addf %121, %124 : vector<1x32xf32>
    %126 = vector.extract_strided_slice %104 {offsets = [0, 160], sizes = [1, 32], strides = [1, 1]} : vector<1x512xf32> to vector<1x32xf32>
    %127 = arith.addf %123, %126 : vector<1x32xf32>
    %128 = vector.extract_strided_slice %107 {offsets = [0, 160], sizes = [1, 32], strides = [1, 1]} : vector<1x512xf32> to vector<1x32xf32>
    %129 = arith.addf %125, %128 : vector<1x32xf32>
    %130 = vector.extract_strided_slice %104 {offsets = [0, 192], sizes = [1, 32], strides = [1, 1]} : vector<1x512xf32> to vector<1x32xf32>
    %131 = arith.addf %127, %130 : vector<1x32xf32>
    %132 = vector.extract_strided_slice %107 {offsets = [0, 192], sizes = [1, 32], strides = [1, 1]} : vector<1x512xf32> to vector<1x32xf32>
    %133 = arith.addf %129, %132 : vector<1x32xf32>
    %134 = vector.extract_strided_slice %104 {offsets = [0, 224], sizes = [1, 32], strides = [1, 1]} : vector<1x512xf32> to vector<1x32xf32>
    %135 = arith.addf %131, %134 : vector<1x32xf32>
    %136 = vector.extract_strided_slice %107 {offsets = [0, 224], sizes = [1, 32], strides = [1, 1]} : vector<1x512xf32> to vector<1x32xf32>
    %137 = arith.addf %133, %136 : vector<1x32xf32>
    %138 = vector.extract_strided_slice %104 {offsets = [0, 256], sizes = [1, 32], strides = [1, 1]} : vector<1x512xf32> to vector<1x32xf32>
    %139 = arith.addf %135, %138 : vector<1x32xf32>
    %140 = vector.extract_strided_slice %107 {offsets = [0, 256], sizes = [1, 32], strides = [1, 1]} : vector<1x512xf32> to vector<1x32xf32>
    %141 = arith.addf %137, %140 : vector<1x32xf32>
    %142 = vector.extract_strided_slice %104 {offsets = [0, 288], sizes = [1, 32], strides = [1, 1]} : vector<1x512xf32> to vector<1x32xf32>
    %143 = arith.addf %139, %142 : vector<1x32xf32>
    %144 = vector.extract_strided_slice %107 {offsets = [0, 288], sizes = [1, 32], strides = [1, 1]} : vector<1x512xf32> to vector<1x32xf32>
    %145 = arith.addf %141, %144 : vector<1x32xf32>
    %146 = vector.extract_strided_slice %104 {offsets = [0, 320], sizes = [1, 32], strides = [1, 1]} : vector<1x512xf32> to vector<1x32xf32>
    %147 = arith.addf %143, %146 : vector<1x32xf32>
    %148 = vector.extract_strided_slice %107 {offsets = [0, 320], sizes = [1, 32], strides = [1, 1]} : vector<1x512xf32> to vector<1x32xf32>
    %149 = arith.addf %145, %148 : vector<1x32xf32>
    %150 = vector.extract_strided_slice %104 {offsets = [0, 352], sizes = [1, 32], strides = [1, 1]} : vector<1x512xf32> to vector<1x32xf32>
    %151 = arith.addf %147, %150 : vector<1x32xf32>
    %152 = vector.extract_strided_slice %107 {offsets = [0, 352], sizes = [1, 32], strides = [1, 1]} : vector<1x512xf32> to vector<1x32xf32>
    %153 = arith.addf %149, %152 : vector<1x32xf32>
    %154 = vector.extract_strided_slice %104 {offsets = [0, 384], sizes = [1, 32], strides = [1, 1]} : vector<1x512xf32> to vector<1x32xf32>
    %155 = arith.addf %151, %154 : vector<1x32xf32>
    %156 = vector.extract_strided_slice %107 {offsets = [0, 384], sizes = [1, 32], strides = [1, 1]} : vector<1x512xf32> to vector<1x32xf32>
    %157 = arith.addf %153, %156 : vector<1x32xf32>
    %158 = vector.extract_strided_slice %104 {offsets = [0, 416], sizes = [1, 32], strides = [1, 1]} : vector<1x512xf32> to vector<1x32xf32>
    %159 = arith.addf %155, %158 : vector<1x32xf32>
    %160 = vector.extract_strided_slice %107 {offsets = [0, 416], sizes = [1, 32], strides = [1, 1]} : vector<1x512xf32> to vector<1x32xf32>
    %161 = arith.addf %157, %160 : vector<1x32xf32>
    %162 = vector.extract_strided_slice %104 {offsets = [0, 448], sizes = [1, 32], strides = [1, 1]} : vector<1x512xf32> to vector<1x32xf32>
    %163 = arith.addf %159, %162 : vector<1x32xf32>
    %164 = vector.extract_strided_slice %107 {offsets = [0, 448], sizes = [1, 32], strides = [1, 1]} : vector<1x512xf32> to vector<1x32xf32>
    %165 = arith.addf %161, %164 : vector<1x32xf32>
    %166 = vector.extract_strided_slice %104 {offsets = [0, 480], sizes = [1, 32], strides = [1, 1]} : vector<1x512xf32> to vector<1x32xf32>
    %167 = arith.addf %163, %166 : vector<1x32xf32>
    %168 = vector.extract_strided_slice %107 {offsets = [0, 480], sizes = [1, 32], strides = [1, 1]} : vector<1x512xf32> to vector<1x32xf32>
    %169 = arith.addf %165, %168 : vector<1x32xf32>
    %cst_25 = arith.constant 3.125000e-02 : f32
    %170 = vector.broadcast %cst_25 : f32 to vector<1x32xf32>
    %171 = arith.mulf %167, %170 : vector<1x32xf32>
    %cst_26 = arith.constant 3.125000e-02 : f32
    %172 = vector.broadcast %cst_26 : f32 to vector<1x32xf32>
    %173 = arith.mulf %169, %172 : vector<1x32xf32>
    %174 = arith.mulf %171, %171 : vector<1x32xf32>
    %175 = arith.subf %173, %174 : vector<1x32xf32>
    %cst_27 = arith.constant 9.99999974E-6 : f32
    %176 = vector.broadcast %cst_27 : f32 to vector<1x32xf32>
    %177 = arith.addf %175, %176 : vector<1x32xf32>
    %178 = math.rsqrt %177 : vector<1x32xf32>
    %179 = arith.mulf %2, %178 : vector<1x32xf32>
    %180 = arith.mulf %171, %179 : vector<1x32xf32>
    %181 = arith.subf %3, %180 : vector<1x32xf32>
    %182 = tpu.concatenate %179, %179, %179, %179, %179, %179, %179, %179, %179, %179, %179, %179, %179, %179, %179, %179 in 1 : vector<1x32xf32>, vector<1x32xf32>, vector<1x32xf32>, vector<1x32xf32>, vector<1x32xf32>, vector<1x32xf32>, vector<1x32xf32>, vector<1x32xf32>, vector<1x32xf32>, vector<1x32xf32>, vector<1x32xf32>, vector<1x32xf32>, vector<1x32xf32>, vector<1x32xf32>, vector<1x32xf32>, vector<1x32xf32> -> vector<1x512xf32>
    %183 = tpu.concatenate %181, %181, %181, %181, %181, %181, %181, %181, %181, %181, %181, %181, %181, %181, %181, %181 in 1 : vector<1x32xf32>, vector<1x32xf32>, vector<1x32xf32>, vector<1x32xf32>, vector<1x32xf32>, vector<1x32xf32>, vector<1x32xf32>, vector<1x32xf32>, vector<1x32xf32>, vector<1x32xf32>, vector<1x32xf32>, vector<1x32xf32>, vector<1x32xf32>, vector<1x32xf32>, vector<1x32xf32>, vector<1x32xf32> -> vector<1x512xf32>
    %184 = vector.broadcast %182 : vector<1x512xf32> to vector<2x512xf32>
    %185 = arith.mulf %15, %184 : vector<2x512xf32>
    %186 = vector.broadcast %183 : vector<1x512xf32> to vector<2x512xf32>
    %187 = arith.addf %185, %186 : vector<2x512xf32>
    %cst_28 = arith.constant 0.000000e+00 : f32
    %188 = vector.broadcast %cst_28 : f32 to vector<2x512xf32>
    %189 = arith.maximumf %187, %188 : vector<2x512xf32>
    %190 = vector.extract_strided_slice %102 {offsets = [0, 0], sizes = [2, 32], strides = [1, 1]} : vector<2x512xf32> to vector<2x32xf32>
    %191 = vector.extract_strided_slice %189 {offsets = [0, 0], sizes = [2, 32], strides = [1, 1]} : vector<2x512xf32> to vector<2x32xf32>
    %192 = vector.extract_strided_slice %102 {offsets = [0, 32], sizes = [2, 32], strides = [1, 1]} : vector<2x512xf32> to vector<2x32xf32>
    %193 = vector.extract_strided_slice %189 {offsets = [0, 32], sizes = [2, 32], strides = [1, 1]} : vector<2x512xf32> to vector<2x32xf32>
    %194 = vector.extract_strided_slice %102 {offsets = [0, 64], sizes = [2, 32], strides = [1, 1]} : vector<2x512xf32> to vector<2x32xf32>
    %195 = vector.extract_strided_slice %189 {offsets = [0, 64], sizes = [2, 32], strides = [1, 1]} : vector<2x512xf32> to vector<2x32xf32>
    %196 = vector.extract_strided_slice %102 {offsets = [0, 96], sizes = [2, 32], strides = [1, 1]} : vector<2x512xf32> to vector<2x32xf32>
    %197 = vector.extract_strided_slice %189 {offsets = [0, 96], sizes = [2, 32], strides = [1, 1]} : vector<2x512xf32> to vector<2x32xf32>
    %198 = vector.extract_strided_slice %102 {offsets = [0, 128], sizes = [2, 32], strides = [1, 1]} : vector<2x512xf32> to vector<2x32xf32>
    %199 = vector.extract_strided_slice %189 {offsets = [0, 128], sizes = [2, 32], strides = [1, 1]} : vector<2x512xf32> to vector<2x32xf32>
    %200 = vector.extract_strided_slice %102 {offsets = [0, 160], sizes = [2, 32], strides = [1, 1]} : vector<2x512xf32> to vector<2x32xf32>
    %201 = vector.extract_strided_slice %189 {offsets = [0, 160], sizes = [2, 32], strides = [1, 1]} : vector<2x512xf32> to vector<2x32xf32>
    %202 = vector.extract_strided_slice %102 {offsets = [0, 192], sizes = [2, 32], strides = [1, 1]} : vector<2x512xf32> to vector<2x32xf32>
    %203 = vector.extract_strided_slice %189 {offsets = [0, 192], sizes = [2, 32], strides = [1, 1]} : vector<2x512xf32> to vector<2x32xf32>
    %204 = vector.extract_strided_slice %102 {offsets = [0, 224], sizes = [2, 32], strides = [1, 1]} : vector<2x512xf32> to vector<2x32xf32>
    %205 = vector.extract_strided_slice %189 {offsets = [0, 224], sizes = [2, 32], strides = [1, 1]} : vector<2x512xf32> to vector<2x32xf32>
    %206 = vector.extract_strided_slice %102 {offsets = [0, 256], sizes = [2, 32], strides = [1, 1]} : vector<2x512xf32> to vector<2x32xf32>
    %207 = vector.extract_strided_slice %189 {offsets = [0, 256], sizes = [2, 32], strides = [1, 1]} : vector<2x512xf32> to vector<2x32xf32>
    %208 = vector.extract_strided_slice %102 {offsets = [0, 288], sizes = [2, 32], strides = [1, 1]} : vector<2x512xf32> to vector<2x32xf32>
    %209 = vector.extract_strided_slice %189 {offsets = [0, 288], sizes = [2, 32], strides = [1, 1]} : vector<2x512xf32> to vector<2x32xf32>
    %210 = vector.extract_strided_slice %102 {offsets = [0, 320], sizes = [2, 32], strides = [1, 1]} : vector<2x512xf32> to vector<2x32xf32>
    %211 = vector.extract_strided_slice %189 {offsets = [0, 320], sizes = [2, 32], strides = [1, 1]} : vector<2x512xf32> to vector<2x32xf32>
    %212 = vector.extract_strided_slice %102 {offsets = [0, 352], sizes = [2, 32], strides = [1, 1]} : vector<2x512xf32> to vector<2x32xf32>
    %213 = vector.extract_strided_slice %189 {offsets = [0, 352], sizes = [2, 32], strides = [1, 1]} : vector<2x512xf32> to vector<2x32xf32>
    %214 = vector.extract_strided_slice %102 {offsets = [0, 384], sizes = [2, 32], strides = [1, 1]} : vector<2x512xf32> to vector<2x32xf32>
    %215 = vector.extract_strided_slice %189 {offsets = [0, 384], sizes = [2, 32], strides = [1, 1]} : vector<2x512xf32> to vector<2x32xf32>
    %216 = vector.extract_strided_slice %102 {offsets = [0, 416], sizes = [2, 32], strides = [1, 1]} : vector<2x512xf32> to vector<2x32xf32>
    %217 = vector.extract_strided_slice %189 {offsets = [0, 416], sizes = [2, 32], strides = [1, 1]} : vector<2x512xf32> to vector<2x32xf32>
    %218 = vector.extract_strided_slice %102 {offsets = [0, 448], sizes = [2, 32], strides = [1, 1]} : vector<2x512xf32> to vector<2x32xf32>
    %219 = vector.extract_strided_slice %189 {offsets = [0, 448], sizes = [2, 32], strides = [1, 1]} : vector<2x512xf32> to vector<2x32xf32>
    %220 = vector.extract_strided_slice %102 {offsets = [0, 480], sizes = [2, 32], strides = [1, 1]} : vector<2x512xf32> to vector<2x32xf32>
    %221 = vector.extract_strided_slice %189 {offsets = [0, 480], sizes = [2, 32], strides = [1, 1]} : vector<2x512xf32> to vector<2x32xf32>
    %222 = tpu.concatenate %190, %191, %192, %193, %194, %195, %196, %197, %198, %199, %200, %201, %202, %203, %204, %205 in 1 : vector<2x32xf32>, vector<2x32xf32>, vector<2x32xf32>, vector<2x32xf32>, vector<2x32xf32>, vector<2x32xf32>, vector<2x32xf32>, vector<2x32xf32>, vector<2x32xf32>, vector<2x32xf32>, vector<2x32xf32>, vector<2x32xf32>, vector<2x32xf32>, vector<2x32xf32>, vector<2x32xf32>, vector<2x32xf32> -> vector<2x512xf32>
    %223 = tpu.concatenate %206, %207, %208, %209, %210, %211, %212, %213, %214, %215, %216, %217, %218, %219, %220, %221 in 1 : vector<2x32xf32>, vector<2x32xf32>, vector<2x32xf32>, vector<2x32xf32>, vector<2x32xf32>, vector<2x32xf32>, vector<2x32xf32>, vector<2x32xf32>, vector<2x32xf32>, vector<2x32xf32>, vector<2x32xf32>, vector<2x32xf32>, vector<2x32xf32>, vector<2x32xf32>, vector<2x32xf32>, vector<2x32xf32> -> vector<2x512xf32>
    %224 = tpu.concatenate %222, %223 in 1 : vector<2x512xf32>, vector<2x512xf32> -> vector<2x1024xf32>
    %225 = vector.extract_strided_slice %224 {offsets = [0, 0], sizes = [1, 256], strides = [1, 1]} : vector<2x1024xf32> to vector<1x256xf32>
    %226 = vector.extract_strided_slice %224 {offsets = [0, 256], sizes = [1, 256], strides = [1, 1]} : vector<2x1024xf32> to vector<1x256xf32>
    %227 = vector.extract_strided_slice %224 {offsets = [0, 512], sizes = [1, 256], strides = [1, 1]} : vector<2x1024xf32> to vector<1x256xf32>
    %228 = vector.extract_strided_slice %224 {offsets = [0, 768], sizes = [1, 256], strides = [1, 1]} : vector<2x1024xf32> to vector<1x256xf32>
    %229 = vector.extract_strided_slice %224 {offsets = [1, 0], sizes = [1, 256], strides = [1, 1]} : vector<2x1024xf32> to vector<1x256xf32>
    %230 = vector.extract_strided_slice %224 {offsets = [1, 256], sizes = [1, 256], strides = [1, 1]} : vector<2x1024xf32> to vector<1x256xf32>
    %231 = vector.extract_strided_slice %224 {offsets = [1, 512], sizes = [1, 256], strides = [1, 1]} : vector<2x1024xf32> to vector<1x256xf32>
    %232 = vector.extract_strided_slice %224 {offsets = [1, 768], sizes = [1, 256], strides = [1, 1]} : vector<2x1024xf32> to vector<1x256xf32>
    %233 = tpu.concatenate %225, %226, %227, %228, %229, %230, %231, %232 in 0 : vector<1x256xf32>, vector<1x256xf32>, vector<1x256xf32>, vector<1x256xf32>, vector<1x256xf32>, vector<1x256xf32>, vector<1x256xf32>, vector<1x256xf32> -> vector<8x256xf32>
    %cst_29 = arith.constant 0.000000e+00 : f32
    %234 = vector.broadcast %cst_29 : f32 to vector<1x256xf32>
    %235 = vector.extract_strided_slice %233 {offsets = [0, 0], sizes = [4, 256], strides = [1, 1]} : vector<8x256xf32> to vector<4x256xf32>
    %236 = vector.extract_strided_slice %235 {offsets = [0, 0], sizes = [3, 256], strides = [1, 1]} : vector<4x256xf32> to vector<3x256xf32>
    %237 = vector.extract_strided_slice %233 {offsets = [4, 0], sizes = [4, 256], strides = [1, 1]} : vector<8x256xf32> to vector<4x256xf32>
    %238 = vector.extract_strided_slice %237 {offsets = [0, 0], sizes = [3, 256], strides = [1, 1]} : vector<4x256xf32> to vector<3x256xf32>
    %239 = tpu.concatenate %234, %236, %234, %238 in 0 : vector<1x256xf32>, vector<3x256xf32>, vector<1x256xf32>, vector<3x256xf32> -> vector<8x256xf32>
    %cst_30 = arith.constant 0.000000e+00 : f32
    %240 = vector.broadcast %cst_30 : f32 to vector<1x256xf32>
    %241 = vector.extract_strided_slice %233 {offsets = [0, 0], sizes = [4, 256], strides = [1, 1]} : vector<8x256xf32> to vector<4x256xf32>
    %242 = vector.extract_strided_slice %241 {offsets = [1, 0], sizes = [3, 256], strides = [1, 1]} : vector<4x256xf32> to vector<3x256xf32>
    %243 = vector.extract_strided_slice %233 {offsets = [4, 0], sizes = [4, 256], strides = [1, 1]} : vector<8x256xf32> to vector<4x256xf32>
    %244 = vector.extract_strided_slice %243 {offsets = [1, 0], sizes = [3, 256], strides = [1, 1]} : vector<4x256xf32> to vector<3x256xf32>
    %245 = tpu.concatenate %242, %240, %244, %240 in 0 : vector<3x256xf32>, vector<1x256xf32>, vector<3x256xf32>, vector<1x256xf32> -> vector<8x256xf32>
    %246 = tpu.concatenate %239, %233 in 1 : vector<8x256xf32>, vector<8x256xf32> -> vector<8x512xf32>
    %247 = arith.truncf %246 : vector<8x512xf32> to vector<8x512xbf16>
    %c0_31 = arith.constant 0 : index
    %c0_32 = arith.constant 0 : index
    %248 = vector.load %arg4[%c0_31, %c0_32] : memref<512x256xbf16, #tpu.memory_space<vmem>>, vector<512x256xbf16>
    %cst_33 = arith.constant dense<0.000000e+00> : vector<8x256xf32>
    %249 = tpu.matmul %247, %248, %cst_33 {dimension_numbers = #tpu.dot_dimension_numbers<[1], [0], [0], [1], [0, 0, 1, 1], [], []>} : vector<8x512xbf16>, vector<512x256xbf16>, vector<8x256xf32> -> vector<8x256xf32>
    %250 = tpu.concatenate %233, %245 in 1 : vector<8x256xf32>, vector<8x256xf32> -> vector<8x512xf32>
    %251 = arith.truncf %250 : vector<8x512xf32> to vector<8x512xbf16>
    %c0_34 = arith.constant 0 : index
    %c0_35 = arith.constant 0 : index
    %252 = vector.load %arg5[%c0_34, %c0_35] : memref<512x256xbf16, #tpu.memory_space<vmem>>, vector<512x256xbf16>
    %cst_36 = arith.constant dense<0.000000e+00> : vector<8x256xf32>
    %253 = tpu.matmul %251, %252, %cst_36 {dimension_numbers = #tpu.dot_dimension_numbers<[1], [0], [0], [1], [0, 0, 1, 1], [], []>} : vector<8x512xbf16>, vector<512x256xbf16>, vector<8x256xf32> -> vector<8x256xf32>
    %cst_37 = arith.constant dense<0.000000e+00> : vector<256xf32>
    %254 = vector.multi_reduction <add>, %249, %cst_37 [0] : vector<8x256xf32> to vector<256xf32>
    %255 = vector.shape_cast %254 : vector<256xf32> to vector<1x256xf32>
    %256 = arith.mulf %249, %249 : vector<8x256xf32>
    %cst_38 = arith.constant dense<0.000000e+00> : vector<256xf32>
    %257 = vector.multi_reduction <add>, %256, %cst_38 [0] : vector<8x256xf32> to vector<256xf32>
    %258 = vector.shape_cast %257 : vector<256xf32> to vector<1x256xf32>
    %cst_39 = arith.constant dense<0.000000e+00> : vector<256xf32>
    %259 = vector.multi_reduction <add>, %253, %cst_39 [0] : vector<8x256xf32> to vector<256xf32>
    %260 = vector.shape_cast %259 : vector<256xf32> to vector<1x256xf32>
    %261 = arith.mulf %253, %253 : vector<8x256xf32>
    %cst_40 = arith.constant dense<0.000000e+00> : vector<256xf32>
    %262 = vector.multi_reduction <add>, %261, %cst_40 [0] : vector<8x256xf32> to vector<256xf32>
    %263 = vector.shape_cast %262 : vector<256xf32> to vector<1x256xf32>
    %264 = arith.addf %255, %260 : vector<1x256xf32>
    %265 = arith.addf %258, %263 : vector<1x256xf32>
    %266 = vector.extract_strided_slice %264 {offsets = [0, 0], sizes = [1, 32], strides = [1, 1]} : vector<1x256xf32> to vector<1x32xf32>
    %267 = vector.extract_strided_slice %265 {offsets = [0, 0], sizes = [1, 32], strides = [1, 1]} : vector<1x256xf32> to vector<1x32xf32>
    %268 = vector.extract_strided_slice %264 {offsets = [0, 32], sizes = [1, 32], strides = [1, 1]} : vector<1x256xf32> to vector<1x32xf32>
    %269 = arith.addf %266, %268 : vector<1x32xf32>
    %270 = vector.extract_strided_slice %265 {offsets = [0, 32], sizes = [1, 32], strides = [1, 1]} : vector<1x256xf32> to vector<1x32xf32>
    %271 = arith.addf %267, %270 : vector<1x32xf32>
    %272 = vector.extract_strided_slice %264 {offsets = [0, 64], sizes = [1, 32], strides = [1, 1]} : vector<1x256xf32> to vector<1x32xf32>
    %273 = arith.addf %269, %272 : vector<1x32xf32>
    %274 = vector.extract_strided_slice %265 {offsets = [0, 64], sizes = [1, 32], strides = [1, 1]} : vector<1x256xf32> to vector<1x32xf32>
    %275 = arith.addf %271, %274 : vector<1x32xf32>
    %276 = vector.extract_strided_slice %264 {offsets = [0, 96], sizes = [1, 32], strides = [1, 1]} : vector<1x256xf32> to vector<1x32xf32>
    %277 = arith.addf %273, %276 : vector<1x32xf32>
    %278 = vector.extract_strided_slice %265 {offsets = [0, 96], sizes = [1, 32], strides = [1, 1]} : vector<1x256xf32> to vector<1x32xf32>
    %279 = arith.addf %275, %278 : vector<1x32xf32>
    %280 = vector.extract_strided_slice %264 {offsets = [0, 128], sizes = [1, 32], strides = [1, 1]} : vector<1x256xf32> to vector<1x32xf32>
    %281 = arith.addf %277, %280 : vector<1x32xf32>
    %282 = vector.extract_strided_slice %265 {offsets = [0, 128], sizes = [1, 32], strides = [1, 1]} : vector<1x256xf32> to vector<1x32xf32>
    %283 = arith.addf %279, %282 : vector<1x32xf32>
    %284 = vector.extract_strided_slice %264 {offsets = [0, 160], sizes = [1, 32], strides = [1, 1]} : vector<1x256xf32> to vector<1x32xf32>
    %285 = arith.addf %281, %284 : vector<1x32xf32>
    %286 = vector.extract_strided_slice %265 {offsets = [0, 160], sizes = [1, 32], strides = [1, 1]} : vector<1x256xf32> to vector<1x32xf32>
    %287 = arith.addf %283, %286 : vector<1x32xf32>
    %288 = vector.extract_strided_slice %264 {offsets = [0, 192], sizes = [1, 32], strides = [1, 1]} : vector<1x256xf32> to vector<1x32xf32>
    %289 = arith.addf %285, %288 : vector<1x32xf32>
    %290 = vector.extract_strided_slice %265 {offsets = [0, 192], sizes = [1, 32], strides = [1, 1]} : vector<1x256xf32> to vector<1x32xf32>
    %291 = arith.addf %287, %290 : vector<1x32xf32>
    %292 = vector.extract_strided_slice %264 {offsets = [0, 224], sizes = [1, 32], strides = [1, 1]} : vector<1x256xf32> to vector<1x32xf32>
    %293 = arith.addf %289, %292 : vector<1x32xf32>
    %294 = vector.extract_strided_slice %265 {offsets = [0, 224], sizes = [1, 32], strides = [1, 1]} : vector<1x256xf32> to vector<1x32xf32>
    %295 = arith.addf %291, %294 : vector<1x32xf32>
    %cst_41 = arith.constant 7.812500e-03 : f32
    %296 = vector.broadcast %cst_41 : f32 to vector<1x32xf32>
    %297 = arith.mulf %293, %296 : vector<1x32xf32>
    %cst_42 = arith.constant 7.812500e-03 : f32
    %298 = vector.broadcast %cst_42 : f32 to vector<1x32xf32>
    %299 = arith.mulf %295, %298 : vector<1x32xf32>
    %300 = arith.mulf %297, %297 : vector<1x32xf32>
    %301 = arith.subf %299, %300 : vector<1x32xf32>
    %cst_43 = arith.constant 9.99999974E-6 : f32
    %302 = vector.broadcast %cst_43 : f32 to vector<1x32xf32>
    %303 = arith.addf %301, %302 : vector<1x32xf32>
    %304 = math.rsqrt %303 : vector<1x32xf32>
    %305 = arith.mulf %4, %304 : vector<1x32xf32>
    %306 = arith.mulf %297, %305 : vector<1x32xf32>
    %307 = arith.subf %5, %306 : vector<1x32xf32>
    %308 = tpu.concatenate %305, %305, %305, %305, %305, %305, %305, %305 in 1 : vector<1x32xf32>, vector<1x32xf32>, vector<1x32xf32>, vector<1x32xf32>, vector<1x32xf32>, vector<1x32xf32>, vector<1x32xf32>, vector<1x32xf32> -> vector<1x256xf32>
    %309 = tpu.concatenate %307, %307, %307, %307, %307, %307, %307, %307 in 1 : vector<1x32xf32>, vector<1x32xf32>, vector<1x32xf32>, vector<1x32xf32>, vector<1x32xf32>, vector<1x32xf32>, vector<1x32xf32>, vector<1x32xf32> -> vector<1x256xf32>
    %310 = vector.broadcast %308 : vector<1x256xf32> to vector<8x256xf32>
    %311 = arith.mulf %249, %310 : vector<8x256xf32>
    %312 = vector.broadcast %309 : vector<1x256xf32> to vector<8x256xf32>
    %313 = arith.addf %311, %312 : vector<8x256xf32>
    %cst_44 = arith.constant 0.000000e+00 : f32
    %314 = vector.broadcast %cst_44 : f32 to vector<8x256xf32>
    %315 = arith.maximumf %313, %314 : vector<8x256xf32>
    %316 = vector.broadcast %308 : vector<1x256xf32> to vector<8x256xf32>
    %317 = arith.mulf %253, %316 : vector<8x256xf32>
    %318 = vector.broadcast %309 : vector<1x256xf32> to vector<8x256xf32>
    %319 = arith.addf %317, %318 : vector<8x256xf32>
    %cst_45 = arith.constant 0.000000e+00 : f32
    %320 = vector.broadcast %cst_45 : f32 to vector<8x256xf32>
    %321 = arith.maximumf %319, %320 : vector<8x256xf32>
    %322 = vector.extract_strided_slice %315 {offsets = [0, 0], sizes = [1, 256], strides = [1, 1]} : vector<8x256xf32> to vector<1x256xf32>
    %323 = vector.extract_strided_slice %321 {offsets = [0, 0], sizes = [1, 256], strides = [1, 1]} : vector<8x256xf32> to vector<1x256xf32>
    %324 = vector.extract_strided_slice %315 {offsets = [1, 0], sizes = [1, 256], strides = [1, 1]} : vector<8x256xf32> to vector<1x256xf32>
    %325 = vector.extract_strided_slice %321 {offsets = [1, 0], sizes = [1, 256], strides = [1, 1]} : vector<8x256xf32> to vector<1x256xf32>
    %326 = vector.extract_strided_slice %315 {offsets = [2, 0], sizes = [1, 256], strides = [1, 1]} : vector<8x256xf32> to vector<1x256xf32>
    %327 = vector.extract_strided_slice %321 {offsets = [2, 0], sizes = [1, 256], strides = [1, 1]} : vector<8x256xf32> to vector<1x256xf32>
    %328 = vector.extract_strided_slice %315 {offsets = [3, 0], sizes = [1, 256], strides = [1, 1]} : vector<8x256xf32> to vector<1x256xf32>
    %329 = vector.extract_strided_slice %321 {offsets = [3, 0], sizes = [1, 256], strides = [1, 1]} : vector<8x256xf32> to vector<1x256xf32>
    %330 = vector.extract_strided_slice %315 {offsets = [4, 0], sizes = [1, 256], strides = [1, 1]} : vector<8x256xf32> to vector<1x256xf32>
    %331 = vector.extract_strided_slice %321 {offsets = [4, 0], sizes = [1, 256], strides = [1, 1]} : vector<8x256xf32> to vector<1x256xf32>
    %332 = vector.extract_strided_slice %315 {offsets = [5, 0], sizes = [1, 256], strides = [1, 1]} : vector<8x256xf32> to vector<1x256xf32>
    %333 = vector.extract_strided_slice %321 {offsets = [5, 0], sizes = [1, 256], strides = [1, 1]} : vector<8x256xf32> to vector<1x256xf32>
    %334 = vector.extract_strided_slice %315 {offsets = [6, 0], sizes = [1, 256], strides = [1, 1]} : vector<8x256xf32> to vector<1x256xf32>
    %335 = vector.extract_strided_slice %321 {offsets = [6, 0], sizes = [1, 256], strides = [1, 1]} : vector<8x256xf32> to vector<1x256xf32>
    %336 = vector.extract_strided_slice %315 {offsets = [7, 0], sizes = [1, 256], strides = [1, 1]} : vector<8x256xf32> to vector<1x256xf32>
    %337 = vector.extract_strided_slice %321 {offsets = [7, 0], sizes = [1, 256], strides = [1, 1]} : vector<8x256xf32> to vector<1x256xf32>
    %338 = tpu.concatenate %322, %323, %324, %325, %326, %327, %328, %329, %330, %331, %332, %333, %334, %335, %336, %337 in 0 : vector<1x256xf32>, vector<1x256xf32>, vector<1x256xf32>, vector<1x256xf32>, vector<1x256xf32>, vector<1x256xf32>, vector<1x256xf32>, vector<1x256xf32>, vector<1x256xf32>, vector<1x256xf32>, vector<1x256xf32>, vector<1x256xf32>, vector<1x256xf32>, vector<1x256xf32>, vector<1x256xf32>, vector<1x256xf32> -> vector<16x256xf32>
    %cst_46 = arith.constant 0.000000e+00 : f32
    %339 = vector.broadcast %cst_46 : f32 to vector<1x256xf32>
    %340 = vector.extract_strided_slice %338 {offsets = [0, 0], sizes = [8, 256], strides = [1, 1]} : vector<16x256xf32> to vector<8x256xf32>
    %341 = vector.extract_strided_slice %340 {offsets = [0, 0], sizes = [7, 256], strides = [1, 1]} : vector<8x256xf32> to vector<7x256xf32>
    %342 = vector.extract_strided_slice %338 {offsets = [8, 0], sizes = [8, 256], strides = [1, 1]} : vector<16x256xf32> to vector<8x256xf32>
    %343 = vector.extract_strided_slice %342 {offsets = [0, 0], sizes = [7, 256], strides = [1, 1]} : vector<8x256xf32> to vector<7x256xf32>
    %344 = tpu.concatenate %339, %341, %339, %343 in 0 : vector<1x256xf32>, vector<7x256xf32>, vector<1x256xf32>, vector<7x256xf32> -> vector<16x256xf32>
    %cst_47 = arith.constant 0.000000e+00 : f32
    %345 = vector.broadcast %cst_47 : f32 to vector<1x256xf32>
    %346 = vector.extract_strided_slice %338 {offsets = [0, 0], sizes = [8, 256], strides = [1, 1]} : vector<16x256xf32> to vector<8x256xf32>
    %347 = vector.extract_strided_slice %346 {offsets = [1, 0], sizes = [7, 256], strides = [1, 1]} : vector<8x256xf32> to vector<7x256xf32>
    %348 = vector.extract_strided_slice %338 {offsets = [8, 0], sizes = [8, 256], strides = [1, 1]} : vector<16x256xf32> to vector<8x256xf32>
    %349 = vector.extract_strided_slice %348 {offsets = [1, 0], sizes = [7, 256], strides = [1, 1]} : vector<8x256xf32> to vector<7x256xf32>
    %350 = tpu.concatenate %347, %345, %349, %345 in 0 : vector<7x256xf32>, vector<1x256xf32>, vector<7x256xf32>, vector<1x256xf32> -> vector<16x256xf32>
    %351 = tpu.concatenate %344, %338 in 1 : vector<16x256xf32>, vector<16x256xf32> -> vector<16x512xf32>
    %352 = arith.truncf %351 : vector<16x512xf32> to vector<16x512xbf16>
    %c0_48 = arith.constant 0 : index
    %c0_49 = arith.constant 0 : index
    %353 = vector.load %arg6[%c0_48, %c0_49] : memref<512x256xbf16, #tpu.memory_space<vmem>>, vector<512x256xbf16>
    %cst_50 = arith.constant dense<0.000000e+00> : vector<16x256xf32>
    %354 = tpu.matmul %352, %353, %cst_50 {dimension_numbers = #tpu.dot_dimension_numbers<[1], [0], [0], [1], [0, 0, 1, 1], [], []>} : vector<16x512xbf16>, vector<512x256xbf16>, vector<16x256xf32> -> vector<16x256xf32>
    %355 = tpu.concatenate %338, %350 in 1 : vector<16x256xf32>, vector<16x256xf32> -> vector<16x512xf32>
    %356 = arith.truncf %355 : vector<16x512xf32> to vector<16x512xbf16>
    %c0_51 = arith.constant 0 : index
    %c0_52 = arith.constant 0 : index
    %357 = vector.load %arg7[%c0_51, %c0_52] : memref<512x256xbf16, #tpu.memory_space<vmem>>, vector<512x256xbf16>
    %cst_53 = arith.constant dense<0.000000e+00> : vector<16x256xf32>
    %358 = tpu.matmul %356, %357, %cst_53 {dimension_numbers = #tpu.dot_dimension_numbers<[1], [0], [0], [1], [0, 0, 1, 1], [], []>} : vector<16x512xbf16>, vector<512x256xbf16>, vector<16x256xf32> -> vector<16x256xf32>
    %cst_54 = arith.constant dense<0.000000e+00> : vector<256xf32>
    %359 = vector.multi_reduction <add>, %354, %cst_54 [0] : vector<16x256xf32> to vector<256xf32>
    %360 = vector.shape_cast %359 : vector<256xf32> to vector<1x256xf32>
    %361 = arith.mulf %354, %354 : vector<16x256xf32>
    %cst_55 = arith.constant dense<0.000000e+00> : vector<256xf32>
    %362 = vector.multi_reduction <add>, %361, %cst_55 [0] : vector<16x256xf32> to vector<256xf32>
    %363 = vector.shape_cast %362 : vector<256xf32> to vector<1x256xf32>
    %cst_56 = arith.constant dense<0.000000e+00> : vector<256xf32>
    %364 = vector.multi_reduction <add>, %358, %cst_56 [0] : vector<16x256xf32> to vector<256xf32>
    %365 = vector.shape_cast %364 : vector<256xf32> to vector<1x256xf32>
    %366 = arith.mulf %358, %358 : vector<16x256xf32>
    %cst_57 = arith.constant dense<0.000000e+00> : vector<256xf32>
    %367 = vector.multi_reduction <add>, %366, %cst_57 [0] : vector<16x256xf32> to vector<256xf32>
    %368 = vector.shape_cast %367 : vector<256xf32> to vector<1x256xf32>
    %369 = arith.addf %360, %365 : vector<1x256xf32>
    %370 = arith.addf %363, %368 : vector<1x256xf32>
    %371 = vector.extract_strided_slice %369 {offsets = [0, 0], sizes = [1, 16], strides = [1, 1]} : vector<1x256xf32> to vector<1x16xf32>
    %372 = vector.extract_strided_slice %370 {offsets = [0, 0], sizes = [1, 16], strides = [1, 1]} : vector<1x256xf32> to vector<1x16xf32>
    %373 = vector.extract_strided_slice %369 {offsets = [0, 16], sizes = [1, 16], strides = [1, 1]} : vector<1x256xf32> to vector<1x16xf32>
    %374 = arith.addf %371, %373 : vector<1x16xf32>
    %375 = vector.extract_strided_slice %370 {offsets = [0, 16], sizes = [1, 16], strides = [1, 1]} : vector<1x256xf32> to vector<1x16xf32>
    %376 = arith.addf %372, %375 : vector<1x16xf32>
    %377 = vector.extract_strided_slice %369 {offsets = [0, 32], sizes = [1, 16], strides = [1, 1]} : vector<1x256xf32> to vector<1x16xf32>
    %378 = arith.addf %374, %377 : vector<1x16xf32>
    %379 = vector.extract_strided_slice %370 {offsets = [0, 32], sizes = [1, 16], strides = [1, 1]} : vector<1x256xf32> to vector<1x16xf32>
    %380 = arith.addf %376, %379 : vector<1x16xf32>
    %381 = vector.extract_strided_slice %369 {offsets = [0, 48], sizes = [1, 16], strides = [1, 1]} : vector<1x256xf32> to vector<1x16xf32>
    %382 = arith.addf %378, %381 : vector<1x16xf32>
    %383 = vector.extract_strided_slice %370 {offsets = [0, 48], sizes = [1, 16], strides = [1, 1]} : vector<1x256xf32> to vector<1x16xf32>
    %384 = arith.addf %380, %383 : vector<1x16xf32>
    %385 = vector.extract_strided_slice %369 {offsets = [0, 64], sizes = [1, 16], strides = [1, 1]} : vector<1x256xf32> to vector<1x16xf32>
    %386 = arith.addf %382, %385 : vector<1x16xf32>
    %387 = vector.extract_strided_slice %370 {offsets = [0, 64], sizes = [1, 16], strides = [1, 1]} : vector<1x256xf32> to vector<1x16xf32>
    %388 = arith.addf %384, %387 : vector<1x16xf32>
    %389 = vector.extract_strided_slice %369 {offsets = [0, 80], sizes = [1, 16], strides = [1, 1]} : vector<1x256xf32> to vector<1x16xf32>
    %390 = arith.addf %386, %389 : vector<1x16xf32>
    %391 = vector.extract_strided_slice %370 {offsets = [0, 80], sizes = [1, 16], strides = [1, 1]} : vector<1x256xf32> to vector<1x16xf32>
    %392 = arith.addf %388, %391 : vector<1x16xf32>
    %393 = vector.extract_strided_slice %369 {offsets = [0, 96], sizes = [1, 16], strides = [1, 1]} : vector<1x256xf32> to vector<1x16xf32>
    %394 = arith.addf %390, %393 : vector<1x16xf32>
    %395 = vector.extract_strided_slice %370 {offsets = [0, 96], sizes = [1, 16], strides = [1, 1]} : vector<1x256xf32> to vector<1x16xf32>
    %396 = arith.addf %392, %395 : vector<1x16xf32>
    %397 = vector.extract_strided_slice %369 {offsets = [0, 112], sizes = [1, 16], strides = [1, 1]} : vector<1x256xf32> to vector<1x16xf32>
    %398 = arith.addf %394, %397 : vector<1x16xf32>
    %399 = vector.extract_strided_slice %370 {offsets = [0, 112], sizes = [1, 16], strides = [1, 1]} : vector<1x256xf32> to vector<1x16xf32>
    %400 = arith.addf %396, %399 : vector<1x16xf32>
    %401 = vector.extract_strided_slice %369 {offsets = [0, 128], sizes = [1, 16], strides = [1, 1]} : vector<1x256xf32> to vector<1x16xf32>
    %402 = arith.addf %398, %401 : vector<1x16xf32>
    %403 = vector.extract_strided_slice %370 {offsets = [0, 128], sizes = [1, 16], strides = [1, 1]} : vector<1x256xf32> to vector<1x16xf32>
    %404 = arith.addf %400, %403 : vector<1x16xf32>
    %405 = vector.extract_strided_slice %369 {offsets = [0, 144], sizes = [1, 16], strides = [1, 1]} : vector<1x256xf32> to vector<1x16xf32>
    %406 = arith.addf %402, %405 : vector<1x16xf32>
    %407 = vector.extract_strided_slice %370 {offsets = [0, 144], sizes = [1, 16], strides = [1, 1]} : vector<1x256xf32> to vector<1x16xf32>
    %408 = arith.addf %404, %407 : vector<1x16xf32>
    %409 = vector.extract_strided_slice %369 {offsets = [0, 160], sizes = [1, 16], strides = [1, 1]} : vector<1x256xf32> to vector<1x16xf32>
    %410 = arith.addf %406, %409 : vector<1x16xf32>
    %411 = vector.extract_strided_slice %370 {offsets = [0, 160], sizes = [1, 16], strides = [1, 1]} : vector<1x256xf32> to vector<1x16xf32>
    %412 = arith.addf %408, %411 : vector<1x16xf32>
    %413 = vector.extract_strided_slice %369 {offsets = [0, 176], sizes = [1, 16], strides = [1, 1]} : vector<1x256xf32> to vector<1x16xf32>
    %414 = arith.addf %410, %413 : vector<1x16xf32>
    %415 = vector.extract_strided_slice %370 {offsets = [0, 176], sizes = [1, 16], strides = [1, 1]} : vector<1x256xf32> to vector<1x16xf32>
    %416 = arith.addf %412, %415 : vector<1x16xf32>
    %417 = vector.extract_strided_slice %369 {offsets = [0, 192], sizes = [1, 16], strides = [1, 1]} : vector<1x256xf32> to vector<1x16xf32>
    %418 = arith.addf %414, %417 : vector<1x16xf32>
    %419 = vector.extract_strided_slice %370 {offsets = [0, 192], sizes = [1, 16], strides = [1, 1]} : vector<1x256xf32> to vector<1x16xf32>
    %420 = arith.addf %416, %419 : vector<1x16xf32>
    %421 = vector.extract_strided_slice %369 {offsets = [0, 208], sizes = [1, 16], strides = [1, 1]} : vector<1x256xf32> to vector<1x16xf32>
    %422 = arith.addf %418, %421 : vector<1x16xf32>
    %423 = vector.extract_strided_slice %370 {offsets = [0, 208], sizes = [1, 16], strides = [1, 1]} : vector<1x256xf32> to vector<1x16xf32>
    %424 = arith.addf %420, %423 : vector<1x16xf32>
    %425 = vector.extract_strided_slice %369 {offsets = [0, 224], sizes = [1, 16], strides = [1, 1]} : vector<1x256xf32> to vector<1x16xf32>
    %426 = arith.addf %422, %425 : vector<1x16xf32>
    %427 = vector.extract_strided_slice %370 {offsets = [0, 224], sizes = [1, 16], strides = [1, 1]} : vector<1x256xf32> to vector<1x16xf32>
    %428 = arith.addf %424, %427 : vector<1x16xf32>
    %429 = vector.extract_strided_slice %369 {offsets = [0, 240], sizes = [1, 16], strides = [1, 1]} : vector<1x256xf32> to vector<1x16xf32>
    %430 = arith.addf %426, %429 : vector<1x16xf32>
    %431 = vector.extract_strided_slice %370 {offsets = [0, 240], sizes = [1, 16], strides = [1, 1]} : vector<1x256xf32> to vector<1x16xf32>
    %432 = arith.addf %428, %431 : vector<1x16xf32>
    %cst_58 = arith.constant 0.001953125 : f32
    %433 = vector.broadcast %cst_58 : f32 to vector<1x16xf32>
    %434 = arith.mulf %430, %433 : vector<1x16xf32>
    %cst_59 = arith.constant 0.001953125 : f32
    %435 = vector.broadcast %cst_59 : f32 to vector<1x16xf32>
    %436 = arith.mulf %432, %435 : vector<1x16xf32>
    %437 = arith.mulf %434, %434 : vector<1x16xf32>
    %438 = arith.subf %436, %437 : vector<1x16xf32>
    %cst_60 = arith.constant 9.99999974E-6 : f32
    %439 = vector.broadcast %cst_60 : f32 to vector<1x16xf32>
    %440 = arith.addf %438, %439 : vector<1x16xf32>
    %441 = math.rsqrt %440 : vector<1x16xf32>
    %442 = arith.mulf %6, %441 : vector<1x16xf32>
    %443 = arith.mulf %434, %442 : vector<1x16xf32>
    %444 = arith.subf %7, %443 : vector<1x16xf32>
    %445 = tpu.concatenate %442, %442, %442, %442, %442, %442, %442, %442, %442, %442, %442, %442, %442, %442, %442, %442 in 1 : vector<1x16xf32>, vector<1x16xf32>, vector<1x16xf32>, vector<1x16xf32>, vector<1x16xf32>, vector<1x16xf32>, vector<1x16xf32>, vector<1x16xf32>, vector<1x16xf32>, vector<1x16xf32>, vector<1x16xf32>, vector<1x16xf32>, vector<1x16xf32>, vector<1x16xf32>, vector<1x16xf32>, vector<1x16xf32> -> vector<1x256xf32>
    %446 = tpu.concatenate %444, %444, %444, %444, %444, %444, %444, %444, %444, %444, %444, %444, %444, %444, %444, %444 in 1 : vector<1x16xf32>, vector<1x16xf32>, vector<1x16xf32>, vector<1x16xf32>, vector<1x16xf32>, vector<1x16xf32>, vector<1x16xf32>, vector<1x16xf32>, vector<1x16xf32>, vector<1x16xf32>, vector<1x16xf32>, vector<1x16xf32>, vector<1x16xf32>, vector<1x16xf32>, vector<1x16xf32>, vector<1x16xf32> -> vector<1x256xf32>
    %447 = vector.broadcast %445 : vector<1x256xf32> to vector<16x256xf32>
    %448 = arith.mulf %354, %447 : vector<16x256xf32>
    %449 = vector.broadcast %446 : vector<1x256xf32> to vector<16x256xf32>
    %450 = arith.addf %448, %449 : vector<16x256xf32>
    %cst_61 = arith.constant 0.000000e+00 : f32
    %451 = vector.broadcast %cst_61 : f32 to vector<16x256xf32>
    %452 = arith.maximumf %450, %451 : vector<16x256xf32>
    %453 = vector.broadcast %445 : vector<1x256xf32> to vector<16x256xf32>
    %454 = arith.mulf %358, %453 : vector<16x256xf32>
    %455 = vector.broadcast %446 : vector<1x256xf32> to vector<16x256xf32>
    %456 = arith.addf %454, %455 : vector<16x256xf32>
    %cst_62 = arith.constant 0.000000e+00 : f32
    %457 = vector.broadcast %cst_62 : f32 to vector<16x256xf32>
    %458 = arith.maximumf %456, %457 : vector<16x256xf32>
    %459 = vector.extract_strided_slice %452 {offsets = [0, 0], sizes = [1, 256], strides = [1, 1]} : vector<16x256xf32> to vector<1x256xf32>
    %460 = vector.extract_strided_slice %458 {offsets = [0, 0], sizes = [1, 256], strides = [1, 1]} : vector<16x256xf32> to vector<1x256xf32>
    %461 = vector.extract_strided_slice %452 {offsets = [1, 0], sizes = [1, 256], strides = [1, 1]} : vector<16x256xf32> to vector<1x256xf32>
    %462 = vector.extract_strided_slice %458 {offsets = [1, 0], sizes = [1, 256], strides = [1, 1]} : vector<16x256xf32> to vector<1x256xf32>
    %463 = vector.extract_strided_slice %452 {offsets = [2, 0], sizes = [1, 256], strides = [1, 1]} : vector<16x256xf32> to vector<1x256xf32>
    %464 = vector.extract_strided_slice %458 {offsets = [2, 0], sizes = [1, 256], strides = [1, 1]} : vector<16x256xf32> to vector<1x256xf32>
    %465 = vector.extract_strided_slice %452 {offsets = [3, 0], sizes = [1, 256], strides = [1, 1]} : vector<16x256xf32> to vector<1x256xf32>
    %466 = vector.extract_strided_slice %458 {offsets = [3, 0], sizes = [1, 256], strides = [1, 1]} : vector<16x256xf32> to vector<1x256xf32>
    %467 = vector.extract_strided_slice %452 {offsets = [4, 0], sizes = [1, 256], strides = [1, 1]} : vector<16x256xf32> to vector<1x256xf32>
    %468 = vector.extract_strided_slice %458 {offsets = [4, 0], sizes = [1, 256], strides = [1, 1]} : vector<16x256xf32> to vector<1x256xf32>
    %469 = vector.extract_strided_slice %452 {offsets = [5, 0], sizes = [1, 256], strides = [1, 1]} : vector<16x256xf32> to vector<1x256xf32>
    %470 = vector.extract_strided_slice %458 {offsets = [5, 0], sizes = [1, 256], strides = [1, 1]} : vector<16x256xf32> to vector<1x256xf32>
    %471 = vector.extract_strided_slice %452 {offsets = [6, 0], sizes = [1, 256], strides = [1, 1]} : vector<16x256xf32> to vector<1x256xf32>
    %472 = vector.extract_strided_slice %458 {offsets = [6, 0], sizes = [1, 256], strides = [1, 1]} : vector<16x256xf32> to vector<1x256xf32>
    %473 = vector.extract_strided_slice %452 {offsets = [7, 0], sizes = [1, 256], strides = [1, 1]} : vector<16x256xf32> to vector<1x256xf32>
    %474 = vector.extract_strided_slice %458 {offsets = [7, 0], sizes = [1, 256], strides = [1, 1]} : vector<16x256xf32> to vector<1x256xf32>
    %475 = vector.extract_strided_slice %452 {offsets = [8, 0], sizes = [1, 256], strides = [1, 1]} : vector<16x256xf32> to vector<1x256xf32>
    %476 = vector.extract_strided_slice %458 {offsets = [8, 0], sizes = [1, 256], strides = [1, 1]} : vector<16x256xf32> to vector<1x256xf32>
    %477 = vector.extract_strided_slice %452 {offsets = [9, 0], sizes = [1, 256], strides = [1, 1]} : vector<16x256xf32> to vector<1x256xf32>
    %478 = vector.extract_strided_slice %458 {offsets = [9, 0], sizes = [1, 256], strides = [1, 1]} : vector<16x256xf32> to vector<1x256xf32>
    %479 = vector.extract_strided_slice %452 {offsets = [10, 0], sizes = [1, 256], strides = [1, 1]} : vector<16x256xf32> to vector<1x256xf32>
    %480 = vector.extract_strided_slice %458 {offsets = [10, 0], sizes = [1, 256], strides = [1, 1]} : vector<16x256xf32> to vector<1x256xf32>
    %481 = vector.extract_strided_slice %452 {offsets = [11, 0], sizes = [1, 256], strides = [1, 1]} : vector<16x256xf32> to vector<1x256xf32>
    %482 = vector.extract_strided_slice %458 {offsets = [11, 0], sizes = [1, 256], strides = [1, 1]} : vector<16x256xf32> to vector<1x256xf32>
    %483 = vector.extract_strided_slice %452 {offsets = [12, 0], sizes = [1, 256], strides = [1, 1]} : vector<16x256xf32> to vector<1x256xf32>
    %484 = vector.extract_strided_slice %458 {offsets = [12, 0], sizes = [1, 256], strides = [1, 1]} : vector<16x256xf32> to vector<1x256xf32>
    %485 = vector.extract_strided_slice %452 {offsets = [13, 0], sizes = [1, 256], strides = [1, 1]} : vector<16x256xf32> to vector<1x256xf32>
    %486 = vector.extract_strided_slice %458 {offsets = [13, 0], sizes = [1, 256], strides = [1, 1]} : vector<16x256xf32> to vector<1x256xf32>
    %487 = vector.extract_strided_slice %452 {offsets = [14, 0], sizes = [1, 256], strides = [1, 1]} : vector<16x256xf32> to vector<1x256xf32>
    %488 = vector.extract_strided_slice %458 {offsets = [14, 0], sizes = [1, 256], strides = [1, 1]} : vector<16x256xf32> to vector<1x256xf32>
    %489 = vector.extract_strided_slice %452 {offsets = [15, 0], sizes = [1, 256], strides = [1, 1]} : vector<16x256xf32> to vector<1x256xf32>
    %490 = vector.extract_strided_slice %458 {offsets = [15, 0], sizes = [1, 256], strides = [1, 1]} : vector<16x256xf32> to vector<1x256xf32>
    %491 = tpu.concatenate %459, %460, %461, %462, %463, %464, %465, %466, %467, %468, %469, %470, %471, %472, %473, %474 in 0 : vector<1x256xf32>, vector<1x256xf32>, vector<1x256xf32>, vector<1x256xf32>, vector<1x256xf32>, vector<1x256xf32>, vector<1x256xf32>, vector<1x256xf32>, vector<1x256xf32>, vector<1x256xf32>, vector<1x256xf32>, vector<1x256xf32>, vector<1x256xf32>, vector<1x256xf32>, vector<1x256xf32>, vector<1x256xf32> -> vector<16x256xf32>
    %492 = tpu.concatenate %475, %476, %477, %478, %479, %480, %481, %482, %483, %484, %485, %486, %487, %488, %489, %490 in 0 : vector<1x256xf32>, vector<1x256xf32>, vector<1x256xf32>, vector<1x256xf32>, vector<1x256xf32>, vector<1x256xf32>, vector<1x256xf32>, vector<1x256xf32>, vector<1x256xf32>, vector<1x256xf32>, vector<1x256xf32>, vector<1x256xf32>, vector<1x256xf32>, vector<1x256xf32>, vector<1x256xf32>, vector<1x256xf32> -> vector<16x256xf32>
    %493 = tpu.concatenate %491, %492 in 0 : vector<16x256xf32>, vector<16x256xf32> -> vector<32x256xf32>
    %cst_63 = arith.constant 0.000000e+00 : f32
    %494 = vector.broadcast %cst_63 : f32 to vector<1x256xf32>
    %495 = vector.extract_strided_slice %493 {offsets = [0, 0], sizes = [16, 256], strides = [1, 1]} : vector<32x256xf32> to vector<16x256xf32>
    %496 = vector.extract_strided_slice %495 {offsets = [0, 0], sizes = [15, 256], strides = [1, 1]} : vector<16x256xf32> to vector<15x256xf32>
    %497 = vector.extract_strided_slice %493 {offsets = [16, 0], sizes = [16, 256], strides = [1, 1]} : vector<32x256xf32> to vector<16x256xf32>
    %498 = vector.extract_strided_slice %497 {offsets = [0, 0], sizes = [15, 256], strides = [1, 1]} : vector<16x256xf32> to vector<15x256xf32>
    %499 = tpu.concatenate %494, %496, %494, %498 in 0 : vector<1x256xf32>, vector<15x256xf32>, vector<1x256xf32>, vector<15x256xf32> -> vector<32x256xf32>
    %cst_64 = arith.constant 0.000000e+00 : f32
    %500 = vector.broadcast %cst_64 : f32 to vector<1x256xf32>
    %501 = vector.extract_strided_slice %493 {offsets = [0, 0], sizes = [16, 256], strides = [1, 1]} : vector<32x256xf32> to vector<16x256xf32>
    %502 = vector.extract_strided_slice %501 {offsets = [1, 0], sizes = [15, 256], strides = [1, 1]} : vector<16x256xf32> to vector<15x256xf32>
    %503 = vector.extract_strided_slice %493 {offsets = [16, 0], sizes = [16, 256], strides = [1, 1]} : vector<32x256xf32> to vector<16x256xf32>
    %504 = vector.extract_strided_slice %503 {offsets = [1, 0], sizes = [15, 256], strides = [1, 1]} : vector<16x256xf32> to vector<15x256xf32>
    %505 = tpu.concatenate %502, %500, %504, %500 in 0 : vector<15x256xf32>, vector<1x256xf32>, vector<15x256xf32>, vector<1x256xf32> -> vector<32x256xf32>
    %506 = tpu.concatenate %499, %493 in 1 : vector<32x256xf32>, vector<32x256xf32> -> vector<32x512xf32>
    %507 = arith.truncf %506 : vector<32x512xf32> to vector<32x512xbf16>
    %c0_65 = arith.constant 0 : index
    %c0_66 = arith.constant 0 : index
    %508 = vector.load %arg8[%c0_65, %c0_66] : memref<512x32xbf16, #tpu.memory_space<vmem>>, vector<512x32xbf16>
    %cst_67 = arith.constant dense<0.000000e+00> : vector<32x32xf32>
    %509 = tpu.matmul %507, %508, %cst_67 {dimension_numbers = #tpu.dot_dimension_numbers<[1], [0], [0], [1], [0, 0, 1, 1], [], []>} : vector<32x512xbf16>, vector<512x32xbf16>, vector<32x32xf32> -> vector<32x32xf32>
    %510 = tpu.concatenate %493, %505 in 1 : vector<32x256xf32>, vector<32x256xf32> -> vector<32x512xf32>
    %511 = arith.truncf %510 : vector<32x512xf32> to vector<32x512xbf16>
    %c0_68 = arith.constant 0 : index
    %c0_69 = arith.constant 0 : index
    %512 = vector.load %arg9[%c0_68, %c0_69] : memref<512x32xbf16, #tpu.memory_space<vmem>>, vector<512x32xbf16>
    %cst_70 = arith.constant dense<0.000000e+00> : vector<32x32xf32>
    %513 = tpu.matmul %511, %512, %cst_70 {dimension_numbers = #tpu.dot_dimension_numbers<[1], [0], [0], [1], [0, 0, 1, 1], [], []>} : vector<32x512xbf16>, vector<512x32xbf16>, vector<32x32xf32> -> vector<32x32xf32>
    %c0_71 = arith.constant 0 : index
    %c0_72 = arith.constant 0 : index
    %514 = vector.load %arg11[%c0_71, %c0_72] : memref<1x32xf32, #tpu.memory_space<vmem>>, vector<1x32xf32>
    %515 = vector.broadcast %514 : vector<1x32xf32> to vector<32x32xf32>
    %516 = arith.addf %509, %515 : vector<32x32xf32>
    %517 = math.tanh %516 : vector<32x32xf32>
    %518 = vector.broadcast %514 : vector<1x32xf32> to vector<32x32xf32>
    %519 = arith.addf %513, %518 : vector<32x32xf32>
    %520 = math.tanh %519 : vector<32x32xf32>
    %521 = tpu.concatenate %517, %520 in 1 : vector<32x32xf32>, vector<32x32xf32> -> vector<32x64xf32>
    %c0_73 = arith.constant 0 : index
    %c0_74 = arith.constant 0 : index
    %522 = vector.load %arg12[%c0_73, %c0_74] : memref<32x64xf32, #tpu.memory_space<vmem>>, vector<32x64xf32>
    tpu.vector_store %arg12[%c0_73, %c0_74], %521 {strides = array<i32>} : memref<32x64xf32, #tpu.memory_space<vmem>>, vector<32x64xf32>,
    return
  }
}

</mosaic_0001>

<llo_original>
// kernel: generator_forward.1
$region0: #{generator_forward.1}
  #allocation0 [shape = 'u32[]', space=smem, size = 0x4, offset = 0x4, fixed_abs, tag = 'smem constant byte address 0x4 - core index']
  #allocation1 [shape = 'u32[144,128]{1,0:T(1,128)}', space=vmem, size = 0x12000, scoped, tag = 'internal scratch']
  %s0 = inlined_call_operand.vmem [shape: f32[2,100], index: 0, kind: input, shape index: {}]
  %s1 = inlined_call_operand.vmem [shape: f32[2,10], index: 1, kind: input, shape index: {}]
  %s2 = inlined_call_operand.hbm [shape: bf16[100,512], index: 2, kind: input, shape index: {}]
  %s3 = inlined_call_operand.vmem [shape: bf16[10,512], index: 3, kind: input, shape index: {}]
  %s4 = inlined_call_operand.vmem [shape: bf16[512,256], index: 4, kind: input, shape index: {}]
  %s5 = inlined_call_operand.hbm [shape: bf16[512,256], index: 5, kind: input, shape index: {}]
  %s6 = inlined_call_operand.hbm [shape: bf16[512,256], index: 6, kind: input, shape index: {}]
  %s7 = inlined_call_operand.hbm [shape: bf16[512,256], index: 7, kind: input, shape index: {}]
  %s8 = inlined_call_operand.vmem [shape: bf16[512,32], index: 8, kind: input, shape index: {}]
  %s9 = inlined_call_operand.vmem [shape: bf16[512,32], index: 9, kind: input, shape index: {}]
  %s10 = inlined_call_operand.vmem [shape: f32[8,32], index: 10, kind: input, shape index: {}]
  %s11 = inlined_call_operand.vmem [shape: f32[1,32], index: 11, kind: input, shape index: {}]
  %s12 = inlined_call_operand.vmem [shape: f32[32,64], index: 12, kind: output, shape index: {}]
  %s13 = sld [smem:[#allocation0]]
  $region74: #{generator_forward.1} parent=0
    _
  %s15 = ssub.s32 1, %s13
  %s16 = scalar_select 0, %s15, %s13
  $region1: #{generator_forward.1} parent=0
    #allocation2 [shape = 'u8[106496]{0}', space=vmem, size = 0x1a000, scoped, tag = 'input window, operand 2, single buffered']
    #allocation3 [shape = 's32[1]{0}', space=sflag, size = 0x4, scoped, tag = 'scoped memory for generator_forward.1']
    #allocation4 [shape = 'u8[262144]{0}', space=vmem, size = 0x40000, scoped, tag = 'input window, operand 5, single buffered']
    #allocation5 [shape = 's32[1]{0}', space=sflag, size = 0x4, scoped, tag = 'scoped memory for generator_forward.1']
    #allocation6 [shape = 'u8[262144]{0}', space=vmem, size = 0x40000, scoped, tag = 'input window, operand 6, single buffered']
    #allocation7 [shape = 'u8[262144]{0}', space=vmem, size = 0x40000, scoped, tag = 'input window, operand 7, single buffered']
    #allocation8 [shape = 's32[1]{0}', space=sflag, size = 0x4, scoped, tag = 'scoped memory for generator_forward.1']
    %17 = vsyncpa [#allocation3], 0
    %18 = vsyncpa [#allocation5], 0
    %19 = vsyncpa [#allocation8], 0
    // Predicated region
    $region2: #{generator_forward.1} parent=1 // pred_check
      _
    $region3: #{generator_forward.1} parent=1 // pred_check_branch
      %21 = sbr.rel (0) target = $region5
    $region4: #{generator_forward.1} parent=1 // pred_region
      _
    $region5: #{generator_forward.1} parent=1 // pred_fallthru
      _
    // Predicated region
    $region6: #{generator_forward.1} parent=1 // pred_check
      _
    $region7: #{generator_forward.1} parent=1 // pred_check_branch
      %23 = sbr.rel (0) target = $region9
    $region8: #{generator_forward.1} parent=1 // pred_region
      _
    $region9: #{generator_forward.1} parent=1 // pred_fallthru
      _
    // Predicated region
    $region10: #{generator_forward.1} parent=1 // pred_check
      _
    $region11: #{generator_forward.1} parent=1 // pred_check_branch
      %25 = sbr.rel (0) target = $region13
    $region12: #{generator_forward.1} parent=1 // pred_region
      %s27 = ssub.s32 3328, 3328
      %28 = vsyncadd [#allocation3], %s27
      %s29 = sshll.u32 [#allocation2], 4
      %s30 = int_to_ptr.vmem [resolvable:$true] %s29
      %35 = dma.hbm_to_vmem [thread:$0]  %s2, 3328, %s30, [#allocation3], 256, 256, 16
    $region13: #{generator_forward.1} parent=1 // pred_fallthru
      _
    // Predicated region
    $region14: #{generator_forward.1} parent=1 // pred_check
      _
    $region15: #{generator_forward.1} parent=1 // pred_check_branch
      %37 = sbr.rel (0) target = $region17
    $region16: #{generator_forward.1} parent=1 // pred_region
      _
    $region17: #{generator_forward.1} parent=1 // pred_fallthru
      _
    // Predicated region
    $region18: #{generator_forward.1} parent=1 // pred_check
      _
    $region19: #{generator_forward.1} parent=1 // pred_check_branch
      %39 = sbr.rel (0) target = $region21
    $region20: #{generator_forward.1} parent=1 // pred_region
      _
    $region21: #{generator_forward.1} parent=1 // pred_fallthru
      _
    // Predicated region
    $region22: #{generator_forward.1} parent=1 // pred_check
      _
    $region23: #{generator_forward.1} parent=1 // pred_check_branch
      %41 = sbr.rel (0) target = $region25
    $region24: #{generator_forward.1} parent=1 // pred_region
      %s43 = ssub.s32 8192, 8192
      %44 = vsyncadd [#allocation5], %s43
      %s45 = sshll.u32 [#allocation4], 4
      %s46 = int_to_ptr.vmem [resolvable:$true] %s45
      %51 = dma.hbm_to_vmem [thread:$0]  %s5, 8192, %s46, [#allocation5], 128, 128, 8
    $region25: #{generator_forward.1} parent=1 // pred_fallthru
      _
    // Predicated region
    $region26: #{generator_forward.1} parent=1 // pred_check
      _
    $region27: #{generator_forward.1} parent=1 // pred_check_branch
      %53 = sbr.rel (0) target = $region29
    $region28: #{generator_forward.1} parent=1 // pred_region
      %s55 = ssub.s32 8192, 8192
      %56 = vsyncadd [#allocation5], %s55
      %s57 = sshll.u32 [#allocation6], 4
      %s58 = int_to_ptr.vmem [resolvable:$true] %s57
      %63 = dma.hbm_to_vmem [thread:$0]  %s6, 8192, %s58, [#allocation5], 128, 128, 8
    $region29: #{generator_forward.1} parent=1 // pred_fallthru
      _
    // Predicated region
    $region30: #{generator_forward.1} parent=1 // pred_check
      _
    $region31: #{generator_forward.1} parent=1 // pred_check_branch
      %65 = sbr.rel (0) target = $region33
    $region32: #{generator_forward.1} parent=1 // pred_region
      %s67 = ssub.s32 8192, 8192
      %68 = vsyncadd [#allocation8], %s67
      %s69 = sshll.u32 [#allocation7], 4
      %s70 = int_to_ptr.vmem [resolvable:$true] %s69
      %75 = dma.hbm_to_vmem [thread:$0]  %s7, 8192, %s70, [#allocation8], 128, 128, 8
    $region33: #{generator_forward.1} parent=1 // pred_fallthru
      _
    // Predicated region
    $region34: #{generator_forward.1} parent=1 // pred_check
      _
    $region35: #{generator_forward.1} parent=1 // pred_check_branch
      %77 = sbr.rel (0) target = $region37
    $region36: #{generator_forward.1} parent=1 // pred_region
      _
    $region37: #{generator_forward.1} parent=1 // pred_fallthru
      _
    // Predicated region
    $region38: #{generator_forward.1} parent=1 // pred_check
      _
    $region39: #{generator_forward.1} parent=1 // pred_check_branch
      %79 = sbr.rel (0) target = $region41
    $region40: #{generator_forward.1} parent=1 // pred_region
      _
    $region41: #{generator_forward.1} parent=1 // pred_fallthru
      _
    // Predicated region
    $region42: #{generator_forward.1} parent=1 // pred_check
      _
    $region43: #{generator_forward.1} parent=1 // pred_check_branch
      %81 = sbr.rel (0) target = $region45
    $region44: #{generator_forward.1} parent=1 // pred_region
      _
    $region45: #{generator_forward.1} parent=1 // pred_fallthru
      _
    // Predicated region
    $region46: #{generator_forward.1} parent=1 // pred_check
      _
    $region47: #{generator_forward.1} parent=1 // pred_check_branch
      %83 = sbr.rel (0) target = $region49
    $region48: #{generator_forward.1} parent=1 // pred_region
      _
    $region49: #{generator_forward.1} parent=1 // pred_fallthru
      _
    // Predicated region
    $region50: #{generator_forward.1} parent=1 // pred_check
      _
    $region51: #{generator_forward.1} parent=1 // pred_check_branch
      %85 = sbr.rel (0) target = $region53
    $region52: #{generator_forward.1} parent=1 // pred_region
      %86 = dma.done [#allocation3], 3328
    $region53: #{generator_forward.1} parent=1 // pred_fallthru
      _
    // Predicated region
    $region54: #{generator_forward.1} parent=1 // pred_check
      _
    $region55: #{generator_forward.1} parent=1 // pred_check_branch
      %88 = sbr.rel (0) target = $region57
    $region56: #{generator_forward.1} parent=1 // pred_region
      %89 = dma.done [#allocation5], 8192
    $region57: #{generator_forward.1} parent=1 // pred_fallthru
      _
    // Predicated region
    $region58: #{generator_forward.1} parent=1 // pred_check
      _
    $region59: #{generator_forward.1} parent=1 // pred_check_branch
      %91 = sbr.rel (0) target = $region61
    $region60: #{generator_forward.1} parent=1 // pred_region
      %92 = dma.done [#allocation5], 8192
    $region61: #{generator_forward.1} parent=1 // pred_fallthru
      _
    // Predicated region
    $region62: #{generator_forward.1} parent=1 // pred_check
      _
    $region63: #{generator_forward.1} parent=1 // pred_check_branch
      %94 = sbr.rel (0) target = $region65
    $region64: #{generator_forward.1} parent=1 // pred_region
      %95 = dma.done [#allocation8], 8192
    $region65: #{generator_forward.1} parent=1 // pred_fallthru
      _
    %v97 = vld [vmem:[%s10] sm:$0x1]
    %v98 = vld [vmem:[%s10 + $0x1] sm:$0x1]
    %v99 = vld [vmem:[%s10 + $0x2] sm:$0x1]
    %v100 = vld [vmem:[%s10 + $0x3] sm:$0x1]
    %v101 = vld [vmem:[%s10 + $0x4] sm:$0x1]
    %v102 = vld [vmem:[%s10 + $0x5] sm:$0x1]
    %v103 = vld [vmem:[%s10 + $0x6] sm:$0x1]
    %v104 = vld [vmem:[%s10 + $0x7] sm:$0x1]
    %v105 = vld [vmem:[%s0] sm:$0x3]
    %v106 = vpack.c.bf16 %v105, %v105
    %v107 = vld [vmem:[#allocation2] sm:$0xff]
    %v108 = vld [vmem:[#allocation2 + $0x8] sm:$0xff]
    %v109 = vld [vmem:[#allocation2 + $0x10] sm:$0xff]
    %v110 = vld [vmem:[#allocation2 + $0x18] sm:$0xff]
    %v111 = vld [vmem:[#allocation2 + $0x20] sm:$0xff]
    %v112 = vld [vmem:[#allocation2 + $0x28] sm:$0xff]
    %v113 = vld [vmem:[#allocation2 + $0x30] sm:$0xff]
    %v114 = vld [vmem:[#allocation2 + $0x38] sm:$0xff]
    %v115 = vld [vmem:[#allocation2 + $0x40] sm:$0xff]
    %v116 = vld [vmem:[#allocation2 + $0x48] sm:$0xff]
    %v117 = vld [vmem:[#allocation2 + $0x50] sm:$0xff]
    %v118 = vld [vmem:[#allocation2 + $0x58] sm:$0xff]
    %v119 = vld [vmem:[#allocation2 + $0x60] sm:$0xff]
    %v120 = vld [vmem:[#allocation2 + $0x68] sm:$0xff]
    %v121 = vld [vmem:[#allocation2 + $0x70] sm:$0xff]
    %v122 = vld [vmem:[#allocation2 + $0x78] sm:$0xff]
    %v123 = vld [vmem:[#allocation2 + $0x80] sm:$0xff]
    %v124 = vld [vmem:[#allocation2 + $0x88] sm:$0xff]
    %v125 = vld [vmem:[#allocation2 + $0x90] sm:$0xff]
    %v126 = vld [vmem:[#allocation2 + $0x98] sm:$0xff]
    %v127 = vld [vmem:[#allocation2 + $0xa0] sm:$0xff]
    %v128 = vld [vmem:[#allocation2 + $0xa8] sm:$0xff]
    %v129 = vld [vmem:[#allocation2 + $0xb0] sm:$0xff]
    %v130 = vld [vmem:[#allocation2 + $0xb8] sm:$0xff]
    %v131 = vld [vmem:[#allocation2 + $0xc0] sm:$0x33]
    %v132 = vld [vmem:[#allocation2 + $0xc8] sm:$0x33]
    %v159 = vunpack.c.l.b16 %v107
    %v160 = vunpack.c.h.b16 %v107
    %v161 = vunpack.c.l.b16 %v108
    %v162 = vunpack.c.h.b16 %v108
    %v163 = vunpack.c.l.b16 %v109
    %v164 = vunpack.c.h.b16 %v109
    %v165 = vunpack.c.l.b16 %v110
    %v166 = vunpack.c.h.b16 %v110
    %v167 = vunpack.c.l.b16 %v111
    %v168 = vunpack.c.h.b16 %v111
    %v169 = vunpack.c.l.b16 %v112
    %v170 = vunpack.c.h.b16 %v112
    %v171 = vunpack.c.l.b16 %v113
    %v172 = vunpack.c.h.b16 %v113
    %v173 = vunpack.c.l.b16 %v114
    %v174 = vunpack.c.h.b16 %v114
    %v175 = vunpack.c.l.b16 %v115
    %v176 = vunpack.c.h.b16 %v115
    %v177 = vunpack.c.l.b16 %v116
    %v178 = vunpack.c.h.b16 %v116
    %v179 = vunpack.c.l.b16 %v117
    %v180 = vunpack.c.h.b16 %v117
    %v181 = vunpack.c.l.b16 %v118
    %v182 = vunpack.c.h.b16 %v118
    %v183 = vunpack.c.l.b16 %v119
    %v184 = vunpack.c.h.b16 %v119
    %v185 = vunpack.c.l.b16 %v120
    %v186 = vunpack.c.h.b16 %v120
    %v187 = vunpack.c.l.b16 %v121
    %v188 = vunpack.c.h.b16 %v121
    %v189 = vunpack.c.l.b16 %v122
    %v190 = vunpack.c.h.b16 %v122
    %v191 = vunpack.c.l.b16 %v123
    %v192 = vunpack.c.h.b16 %v123
    %v193 = vunpack.c.l.b16 %v124
    %v194 = vunpack.c.h.b16 %v124
    %v195 = vunpack.c.l.b16 %v125
    %v196 = vunpack.c.h.b16 %v125
    %v197 = vunpack.c.l.b16 %v126
    %v198 = vunpack.c.h.b16 %v126
    %v199 = vunpack.c.l.b16 %v127
    %v200 = vunpack.c.h.b16 %v127
    %v201 = vunpack.c.l.b16 %v128
    %v202 = vunpack.c.h.b16 %v128
    %v203 = vunpack.c.l.b16 %v129
    %v204 = vunpack.c.h.b16 %v129
    %v205 = vunpack.c.l.b16 %v130
    %v206 = vunpack.c.h.b16 %v130
    %v207 = vunpack.c.l.b16 %v131
    %v208 = vunpack.c.h.b16 %v131
    %v209 = vunpack.c.l.b16 %v132
    %v210 = vunpack.c.h.b16 %v132
    %v211 = vpack.c.b16 %v163, %v159
    %v212 = vpack.c.b16 %v164, %v160
    %v213 = vpack.c.b16 %v165, %v161
    %v214 = vpack.c.b16 %v166, %v162
    %v215 = vpack.c.b16 %v171, %v167
    %v216 = vpack.c.b16 %v172, %v168
    %v217 = vpack.c.b16 %v173, %v169
    %v218 = vpack.c.b16 %v174, %v170
    %v219 = vpack.c.b16 %v179, %v175
    %v220 = vpack.c.b16 %v180, %v176
    %v221 = vpack.c.b16 %v181, %v177
    %v222 = vpack.c.b16 %v182, %v178
    %v223 = vpack.c.b16 %v187, %v183
    %v224 = vpack.c.b16 %v188, %v184
    %v225 = vpack.c.b16 %v189, %v185
    %v226 = vpack.c.b16 %v190, %v186
    %v227 = vpack.c.b16 %v195, %v191
    %v228 = vpack.c.b16 %v196, %v192
    %v229 = vpack.c.b16 %v197, %v193
    %v230 = vpack.c.b16 %v198, %v194
    %v231 = vpack.c.b16 %v203, %v199
    %v232 = vpack.c.b16 %v204, %v200
    %v233 = vpack.c.b16 %v205, %v201
    %v234 = vpack.c.b16 %v206, %v202
    %v235 = vpack.c.b16 %v207, %v207
    %v236 = vpack.c.b16 %v208, %v208
    %v237 = vpack.c.b16 %v209, %v209
    %v238 = vpack.c.b16 %v210, %v210
    %vm263 = vcmask 818176
    %v265 = vsel %vm263, %v106, 0
    %vm267 = vcmask 1041408
    %v269 = vsel %vm267, %v235, 0
    %v272 = vsel %vm267, %v236, 0
    %v275 = vsel %vm267, %v237, 0
    %v278 = vsel %vm267, %v238, 0
    %280 = vmatprep.subr.bf16.mxu0 0
    %281 = vmatpush1.bf16.msra.mxu0 0
    %282 = vmatprep.subr.bf16.mxu0 %v272
    %283 = vmatpush1.bf16.msra.mxu0 %v269
    %284 = vmatprep.subr.bf16.mxu0 %v232
    %285 = vmatpush1.bf16.msra.mxu0 %v231
    %286 = vmatprep.subr.bf16.mxu0 %v228
    %287 = vmatpush1.bf16.msra.mxu0 %v227
    %288 = vmatprep.subr.bf16.mxu0 %v224
    %289 = vmatpush1.bf16.msra.mxu0 %v223
    %290 = vmatprep.subr.bf16.mxu0 %v220
    %291 = vmatpush1.bf16.msra.mxu0 %v219
    %292 = vmatprep.subr.bf16.mxu0 %v216
    %293 = vmatpush1.bf16.msra.mxu0 %v215
    %294 = vmatprep.subr.bf16.mxu0 %v212
    %295 = vmatpush1.bf16.msra.mxu0 %v211
    %296 = vmatprep.subr.bf16.mxu0 0
    %297 = vmatpush2.bf16.msra.mxu0 0
    %298 = vmatprep.subr.bf16.mxu0 0
    %299 = vmatpush2.bf16.msra.mxu0 0
    %300 = vmatprep.subr.bf16.mxu0 0
    %301 = vmatpush2.bf16.msra.mxu0 0
    %302 = vmatprep.subr.bf16.mxu0 0
    %303 = vmatpush2.bf16.msra.mxu0 0
    %304 = vmatprep.subr.bf16.mxu0 0
    %305 = vmatpush2.bf16.msra.mxu0 0
    %306 = vmatprep.subr.bf16.mxu0 0
    %307 = vmatpush2.bf16.msra.mxu0 0
    %308 = vmatprep.subr.bf16.mxu0 0
    %309 = vmatpush2.bf16.msra.mxu0 0
    %310 = vmatprep.subr.bf16.mxu0 0
    %311 = vmatpush2.bf16.msra.mxu0 0
    %312 = vmatprep.mubr.bf16.mxu0 0
    %313 = vmatmul.mubr.bf16.gmra.mxu0 %v265
    %v314 = vpop.f32.mrf.mxu0
    %v315 = vadd.f32 0.0, %v314
    %v316 = vpop.f32.mrf.mxu0
    %v317 = vadd.f32 0.0, %v316
    %v318 = vpop.f32.mrf.mxu0
    %v319 = vpop.f32.mrf.mxu0
    %320 = vdwg.mxu0
    %321 = vmatprep.subr.bf16.mxu0 0
    %322 = vmatpush1.bf16.msra.mxu0 0
    %323 = vmatprep.subr.bf16.mxu0 %v278
    %324 = vmatpush1.bf16.msra.mxu0 %v275
    %325 = vmatprep.subr.bf16.mxu0 %v234
    %326 = vmatpush1.bf16.msra.mxu0 %v233
    %327 = vmatprep.subr.bf16.mxu0 %v230
    %328 = vmatpush1.bf16.msra.mxu0 %v229
    %329 = vmatprep.subr.bf16.mxu0 %v226
    %330 = vmatpush1.bf16.msra.mxu0 %v225
    %331 = vmatprep.subr.bf16.mxu0 %v222
    %332 = vmatpush1.bf16.msra.mxu0 %v221
    %333 = vmatprep.subr.bf16.mxu0 %v218
    %334 = vmatpush1.bf16.msra.mxu0 %v217
    %335 = vmatprep.subr.bf16.mxu0 %v214
    %336 = vmatpush1.bf16.msra.mxu0 %v213
    %337 = vmatprep.subr.bf16.mxu0 0
    %338 = vmatpush2.bf16.msra.mxu0 0
    %339 = vmatprep.subr.bf16.mxu0 0
    %340 = vmatpush2.bf16.msra.mxu0 0
    %341 = vmatprep.subr.bf16.mxu0 0
    %342 = vmatpush2.bf16.msra.mxu0 0
    %343 = vmatprep.subr.bf16.mxu0 0
    %344 = vmatpush2.bf16.msra.mxu0 0
    %345 = vmatprep.subr.bf16.mxu0 0
    %346 = vmatpush2.bf16.msra.mxu0 0
    %347 = vmatprep.subr.bf16.mxu0 0
    %348 = vmatpush2.bf16.msra.mxu0 0
    %349 = vmatprep.subr.bf16.mxu0 0
    %350 = vmatpush2.bf16.msra.mxu0 0
    %351 = vmatprep.subr.bf16.mxu0 0
    %352 = vmatpush2.bf16.msra.mxu0 0
    %353 = vmatprep.mubr.bf16.mxu0 0
    %354 = vmatmul.mubr.bf16.gmra.mxu0 %v265
    %v355 = vpop.f32.mrf.mxu0
    %v356 = vadd.f32 0.0, %v355
    %v357 = vpop.f32.mrf.mxu0
    %v358 = vadd.f32 0.0, %v357
    %v359 = vpop.f32.mrf.mxu0
    %v360 = vpop.f32.mrf.mxu0
    %361 = vdwg.mxu0
    %v362 = vld [vmem:[%s1] sm:$0x3]
    %v363 = vpack.c.bf16 %v362, %v362
    %v364 = vld [vmem:[%s3] sm:$0xff]
    %v365 = vld [vmem:[%s3 + $0x8] sm:$0xff]
    %v366 = vld [vmem:[%s3 + $0x10] sm:$0x11]
    %v367 = vld [vmem:[%s3 + $0x18] sm:$0x11]
    %v372 = vunpack.c.l.b16 %v364
    %v373 = vunpack.c.h.b16 %v364
    %v374 = vunpack.c.l.b16 %v365
    %v375 = vunpack.c.h.b16 %v365
    %v376 = vunpack.c.l.b16 %v366
    %v377 = vunpack.c.h.b16 %v366
    %v378 = vunpack.c.l.b16 %v367
    %v379 = vunpack.c.h.b16 %v367
    %v380 = vpack.c.b16 %v376, %v372
    %v381 = vpack.c.b16 %v377, %v373
    %v382 = vpack.c.b16 %v378, %v374
    %v383 = vpack.c.b16 %v379, %v375
    %vm384 = vcmask 80896
    %v386 = vsel %vm384, %v363, 0
    %vm388 = vcmask 1044480
    %v390 = vsel %vm388, %v380, 0
    %v393 = vsel %vm388, %v381, 0
    %v396 = vsel %vm388, %v382, 0
    %v399 = vsel %vm388, %v383, 0
    %401 = vmatprep.subr.bf16.mxu0 0
    %402 = vmatpush1.bf16.msra.mxu0 0
    %403 = vmatprep.subr.bf16.mxu0 0
    %404 = vmatpush1.bf16.msra.mxu0 0
    %405 = vmatprep.subr.bf16.mxu0 0
    %406 = vmatpush1.bf16.msra.mxu0 0
    %407 = vmatprep.subr.bf16.mxu0 0
    %408 = vmatpush1.bf16.msra.mxu0 0
    %409 = vmatprep.subr.bf16.mxu0 0
    %410 = vmatpush1.bf16.msra.mxu0 0
    %411 = vmatprep.subr.bf16.mxu0 0
    %412 = vmatpush1.bf16.msra.mxu0 0
    %413 = vmatprep.subr.bf16.mxu0 0
    %414 = vmatpush1.bf16.msra.mxu0 0
    %415 = vmatprep.subr.bf16.mxu0 %v393
    %416 = vmatpush1.bf16.msra.mxu0 %v390
    %417 = vmatprep.subr.bf16.mxu0 0
    %418 = vmatpush2.bf16.msra.mxu0 0
    %419 = vmatprep.subr.bf16.mxu0 0
    %420 = vmatpush2.bf16.msra.mxu0 0
    %421 = vmatprep.subr.bf16.mxu0 0
    %422 = vmatpush2.bf16.msra.mxu0 0
    %423 = vmatprep.subr.bf16.mxu0 0
    %424 = vmatpush2.bf16.msra.mxu0 0
    %425 = vmatprep.subr.bf16.mxu0 0
    %426 = vmatpush2.bf16.msra.mxu0 0
    %427 = vmatprep.subr.bf16.mxu0 0
    %428 = vmatpush2.bf16.msra.mxu0 0
    %429 = vmatprep.subr.bf16.mxu0 0
    %430 = vmatpush2.bf16.msra.mxu0 0
    %431 = vmatprep.subr.bf16.mxu0 0
    %432 = vmatpush2.bf16.msra.mxu0 0
    %433 = vmatprep.mubr.bf16.mxu0 0
    %434 = vmatmul.mubr.bf16.gmra.mxu0 %v386
    %v435 = vpop.f32.mrf.mxu0
    %v436 = vadd.f32 0.0, %v435
    %v437 = vpop.f32.mrf.mxu0
    %v438 = vadd.f32 0.0, %v437
    %v439 = vpop.f32.mrf.mxu0
    %v440 = vpop.f32.mrf.mxu0
    %441 = vdwg.mxu0
    %442 = vmatprep.subr.bf16.mxu0 0
    %443 = vmatpush1.bf16.msra.mxu0 0
    %444 = vmatprep.subr.bf16.mxu0 0
    %445 = vmatpush1.bf16.msra.mxu0 0
    %446 = vmatprep.subr.bf16.mxu0 0
    %447 = vmatpush1.bf16.msra.mxu0 0
    %448 = vmatprep.subr.bf16.mxu0 0
    %449 = vmatpush1.bf16.msra.mxu0 0
    %450 = vmatprep.subr.bf16.mxu0 0
    %451 = vmatpush1.bf16.msra.mxu0 0
    %452 = vmatprep.subr.bf16.mxu0 0
    %453 = vmatpush1.bf16.msra.mxu0 0
    %454 = vmatprep.subr.bf16.mxu0 0
    %455 = vmatpush1.bf16.msra.mxu0 0
    %456 = vmatprep.subr.bf16.mxu0 %v399
    %457 = vmatpush1.bf16.msra.mxu0 %v396
    %458 = vmatprep.subr.bf16.mxu0 0
    %459 = vmatpush2.bf16.msra.mxu0 0
    %460 = vmatprep.subr.bf16.mxu0 0
    %461 = vmatpush2.bf16.msra.mxu0 0
    %462 = vmatprep.subr.bf16.mxu0 0
    %463 = vmatpush2.bf16.msra.mxu0 0
    %464 = vmatprep.subr.bf16.mxu0 0
    %465 = vmatpush2.bf16.msra.mxu0 0
    %466 = vmatprep.subr.bf16.mxu0 0
    %467 = vmatpush2.bf16.msra.mxu0 0
    %468 = vmatprep.subr.bf16.mxu0 0
    %469 = vmatpush2.bf16.msra.mxu0 0
    %470 = vmatprep.subr.bf16.mxu0 0
    %471 = vmatpush2.bf16.msra.mxu0 0
    %472 = vmatprep.subr.bf16.mxu0 0
    %473 = vmatpush2.bf16.msra.mxu0 0
    %474 = vmatprep.mubr.bf16.mxu0 0
    %475 = vmatmul.mubr.bf16.gmra.mxu0 %v386
    %v476 = vpop.f32.mrf.mxu0
    %v477 = vadd.f32 0.0, %v476
    %v478 = vpop.f32.mrf.mxu0
    %v479 = vadd.f32 0.0, %v478
    %v480 = vpop.f32.mrf.mxu0
    %v481 = vpop.f32.mrf.mxu0
    %482 = vdwg.mxu0
    %v483 = vsel %vm267, %v315, 0.0
    %v484 = vrot.slane %v483, 4
    %v485 = vadd.f32 %v483, %v484
    %v486 = vrot.slane %v485, 2
    %v487 = vadd.f32 %v485, %v486
    %v488 = vrot.slane %v487, 1
    %v489 = vadd.f32 %v487, %v488
    %v490 = vsel %vm267, %v317, 0.0
    %v491 = vrot.slane %v490, 4
    %v492 = vadd.f32 %v490, %v491
    %v493 = vrot.slane %v492, 2
    %v494 = vadd.f32 %v492, %v493
    %v495 = vrot.slane %v494, 1
    %v496 = vadd.f32 %v494, %v495
    %v497 = vsel %vm267, %v356, 0.0
    %v498 = vrot.slane %v497, 4
    %v499 = vadd.f32 %v497, %v498
    %v500 = vrot.slane %v499, 2
    %v501 = vadd.f32 %v499, %v500
    %v502 = vrot.slane %v501, 1
    %v503 = vadd.f32 %v501, %v502
    %v504 = vsel %vm267, %v358, 0.0
    %v505 = vrot.slane %v504, 4
    %v506 = vadd.f32 %v504, %v505
    %v507 = vrot.slane %v506, 2
    %v508 = vadd.f32 %v506, %v507
    %v509 = vrot.slane %v508, 1
    %v510 = vadd.f32 %v508, %v509
    %v511 = vmul.f32 %v315, %v315
    %v512 = vmul.f32 %v317, %v317
    %v513 = vmul.f32 %v356, %v356
    %v514 = vmul.f32 %v358, %v358
    %v515 = vsel %vm267, %v511, 0.0
    %v516 = vrot.slane %v515, 4
    %v517 = vadd.f32 %v515, %v516
    %v518 = vrot.slane %v517, 2
    %v519 = vadd.f32 %v517, %v518
    %v520 = vrot.slane %v519, 1
    %v521 = vadd.f32 %v519, %v520
    %v522 = vsel %vm267, %v512, 0.0
    %v523 = vrot.slane %v522, 4
    %v524 = vadd.f32 %v522, %v523
    %v525 = vrot.slane %v524, 2
    %v526 = vadd.f32 %v524, %v525
    %v527 = vrot.slane %v526, 1
    %v528 = vadd.f32 %v526, %v527
    %v529 = vsel %vm267, %v513, 0.0
    %v530 = vrot.slane %v529, 4
    %v531 = vadd.f32 %v529, %v530
    %v532 = vrot.slane %v531, 2
    %v533 = vadd.f32 %v531, %v532
    %v534 = vrot.slane %v533, 1
    %v535 = vadd.f32 %v533, %v534
    %v536 = vsel %vm267, %v514, 0.0
    %v537 = vrot.slane %v536, 4
    %v538 = vadd.f32 %v536, %v537
    %v539 = vrot.slane %v538, 2
    %v540 = vadd.f32 %v538, %v539
    %v541 = vrot.slane %v540, 1
    %v542 = vadd.f32 %v540, %v541
    %544 = vrot.lane.b32.xlu0 %v489, 96
    %v545 = vpop.permute.xlu0 %544
    %v547 = vadd.f32 %v489, %v545
    %549 = vrot.lane.b32.xlu0 %v521, 96
    %v550 = vpop.permute.xlu0 %549
    %v552 = vadd.f32 %v521, %v550
    %553 = vrot.lane.b32.xlu0 %v489, 64
    %v554 = vpop.permute.xlu0 %553
    %v556 = vadd.f32 %v547, %v554
    %557 = vrot.lane.b32.xlu0 %v521, 64
    %v558 = vpop.permute.xlu0 %557
    %v560 = vadd.f32 %v552, %v558
    %561 = vrot.lane.b32.xlu0 %v489, 32
    %v562 = vpop.permute.xlu0 %561
    %v564 = vadd.f32 %v556, %v562
    %565 = vrot.lane.b32.xlu0 %v521, 32
    %v566 = vpop.permute.xlu0 %565
    %v568 = vadd.f32 %v560, %v566
    %v569 = vadd.f32 %v564, %v496
    %v570 = vadd.f32 %v568, %v528
    %572 = vrot.lane.b32.xlu0 %v496, 96
    %v573 = vpop.permute.xlu0 %572
    %v575 = vadd.f32 %v569, %v573
    %577 = vrot.lane.b32.xlu0 %v528, 96
    %v578 = vpop.permute.xlu0 %577
    %v580 = vadd.f32 %v570, %v578
    %581 = vrot.lane.b32.xlu0 %v496, 64
    %v582 = vpop.permute.xlu0 %581
    %v584 = vadd.f32 %v575, %v582
    %585 = vrot.lane.b32.xlu0 %v528, 64
    %v586 = vpop.permute.xlu0 %585
    %v588 = vadd.f32 %v580, %v586
    %589 = vrot.lane.b32.xlu0 %v496, 32
    %v590 = vpop.permute.xlu0 %589
    %v592 = vadd.f32 %v584, %v590
    %593 = vrot.lane.b32.xlu0 %v528, 32
    %v594 = vpop.permute.xlu0 %593
    %v596 = vadd.f32 %v588, %v594
    %v597 = vadd.f32 %v592, %v503
    %v598 = vadd.f32 %v596, %v535
    %600 = vrot.lane.b32.xlu0 %v503, 96
    %v601 = vpop.permute.xlu0 %600
    %v603 = vadd.f32 %v597, %v601
    %605 = vrot.lane.b32.xlu0 %v535, 96
    %v606 = vpop.permute.xlu0 %605
    %v608 = vadd.f32 %v598, %v606
    %609 = vrot.lane.b32.xlu0 %v503, 64
    %v610 = vpop.permute.xlu0 %609
    %v612 = vadd.f32 %v603, %v610
    %613 = vrot.lane.b32.xlu0 %v535, 64
    %v614 = vpop.permute.xlu0 %613
    %v616 = vadd.f32 %v608, %v614
    %617 = vrot.lane.b32.xlu0 %v503, 32
    %v618 = vpop.permute.xlu0 %617
    %v620 = vadd.f32 %v612, %v618
    %621 = vrot.lane.b32.xlu0 %v535, 32
    %v622 = vpop.permute.xlu0 %621
    %v624 = vadd.f32 %v616, %v622
    %v625 = vadd.f32 %v620, %v510
    %v626 = vadd.f32 %v624, %v542
    %628 = vrot.lane.b32.xlu0 %v510, 96
    %v629 = vpop.permute.xlu0 %628
    %v631 = vadd.f32 %v625, %v629
    %633 = vrot.lane.b32.xlu0 %v542, 96
    %v634 = vpop.permute.xlu0 %633
    %v636 = vadd.f32 %v626, %v634
    %637 = vrot.lane.b32.xlu0 %v510, 64
    %v638 = vpop.permute.xlu0 %637
    %v640 = vadd.f32 %v631, %v638
    %641 = vrot.lane.b32.xlu0 %v542, 64
    %v642 = vpop.permute.xlu0 %641
    %v644 = vadd.f32 %v636, %v642
    %645 = vrot.lane.b32.xlu0 %v510, 32
    %v646 = vpop.permute.xlu0 %645
    %v648 = vadd.f32 %v640, %v646
    %649 = vrot.lane.b32.xlu0 %v542, 32
    %v650 = vpop.permute.xlu0 %649
    %v652 = vadd.f32 %v644, %v650
    %v653 = vmul.f32 %v648, 0.03125
    %v654 = vmul.f32 %v652, 0.03125
    %v655 = vmul.f32 %v653, %v653
    %v656 = vsub.f32 %v654, %v655
    %v657 = vadd.f32 %v656, 1e-05
    %v658 = vrsqrt.pop %v657
    %v659 = vmul.f32 %v97, %v658
    %v660 = vmul.f32 %v653, %v659
    %v661 = vsub.f32 %v98, %v660
    %663 = vrot.lane.b32.xlu0 %v659, 32
    %v664 = vpop.permute.xlu0 %663
    %666 = vrot.lane.b32.xlu0 %v659, 64
    %v667 = vpop.permute.xlu0 %666
    %669 = vrot.lane.b32.xlu0 %v659, 96
    %v670 = vpop.permute.xlu0 %669
    %vm672 = vcmask 261120
    %v673 = vsel %vm672, %v659, %v664
    %vm674 = vcmask 523264
    %v675 = vsel %vm674, %v673, %v667
    %vm676 = vcmask 785408
    %v677 = vsel %vm676, %v675, %v670
    %679 = vrot.lane.b32.xlu0 %v661, 32
    %v680 = vpop.permute.xlu0 %679
    %682 = vrot.lane.b32.xlu0 %v661, 64
    %v683 = vpop.permute.xlu0 %682
    %685 = vrot.lane.b32.xlu0 %v661, 96
    %v686 = vpop.permute.xlu0 %685
    %v688 = vsel %vm672, %v661, %v680
    %v689 = vsel %vm674, %v688, %v683
    %v690 = vsel %vm676, %v689, %v686
    %v691 = vlaneseq
    %v692 = vshrl.u32 %v691, 7
    %v693 = vsub.s32 0, %v692
    %v694 = vrot.slane %v677, %v693
    %v695 = vmul.f32 %v315, %v694
    %v696 = vmul.f32 %v317, %v694
    %v697 = vmul.f32 %v356, %v694
    %v698 = vmul.f32 %v358, %v694
    %v699 = vlaneseq
    %v700 = vshrl.u32 %v699, 7
    %v701 = vsub.s32 0, %v700
    %v702 = vrot.slane %v690, %v701
    %v703 = vadd.f32 %v695, %v702
    %v704 = vadd.f32 %v696, %v702
    %v705 = vadd.f32 %v697, %v702
    %v706 = vadd.f32 %v698, %v702
    %v707 = vmax.f32 %v703, 0.0
    %v708 = vmax.f32 %v704, 0.0
    %v709 = vmax.f32 %v705, 0.0
    %v710 = vmax.f32 %v706, 0.0
    %v711 = vsel %vm267, %v436, 0.0
    %v712 = vrot.slane %v711, 4
    %v713 = vadd.f32 %v711, %v712
    %v714 = vrot.slane %v713, 2
    %v715 = vadd.f32 %v713, %v714
    %v716 = vrot.slane %v715, 1
    %v717 = vadd.f32 %v715, %v716
    %v718 = vsel %vm267, %v438, 0.0
    %v719 = vrot.slane %v718, 4
    %v720 = vadd.f32 %v718, %v719
    %v721 = vrot.slane %v720, 2
    %v722 = vadd.f32 %v720, %v721
    %v723 = vrot.slane %v722, 1
    %v724 = vadd.f32 %v722, %v723
    %v725 = vsel %vm267, %v477, 0.0
    %v726 = vrot.slane %v725, 4
    %v727 = vadd.f32 %v725, %v726
    %v728 = vrot.slane %v727, 2
    %v729 = vadd.f32 %v727, %v728
    %v730 = vrot.slane %v729, 1
    %v731 = vadd.f32 %v729, %v730
    %v732 = vsel %vm267, %v479, 0.0
    %v733 = vrot.slane %v732, 4
    %v734 = vadd.f32 %v732, %v733
    %v735 = vrot.slane %v734, 2
    %v736 = vadd.f32 %v734, %v735
    %v737 = vrot.slane %v736, 1
    %v738 = vadd.f32 %v736, %v737
    %v739 = vmul.f32 %v436, %v436
    %v740 = vmul.f32 %v438, %v438
    %v741 = vmul.f32 %v477, %v477
    %v742 = vmul.f32 %v479, %v479
    %v743 = vsel %vm267, %v739, 0.0
    %v744 = vrot.slane %v743, 4
    %v745 = vadd.f32 %v743, %v744
    %v746 = vrot.slane %v745, 2
    %v747 = vadd.f32 %v745, %v746
    %v748 = vrot.slane %v747, 1
    %v749 = vadd.f32 %v747, %v748
    %v750 = vsel %vm267, %v740, 0.0
    %v751 = vrot.slane %v750, 4
    %v752 = vadd.f32 %v750, %v751
    %v753 = vrot.slane %v752, 2
    %v754 = vadd.f32 %v752, %v753
    %v755 = vrot.slane %v754, 1
    %v756 = vadd.f32 %v754, %v755
    %v757 = vsel %vm267, %v741, 0.0
    %v758 = vrot.slane %v757, 4
    %v759 = vadd.f32 %v757, %v758
    %v760 = vrot.slane %v759, 2
    %v761 = vadd.f32 %v759, %v760
    %v762 = vrot.slane %v761, 1
    %v763 = vadd.f32 %v761, %v762
    %v764 = vsel %vm267, %v742, 0.0
    %v765 = vrot.slane %v764, 4
    %v766 = vadd.f32 %v764, %v765
    %v767 = vrot.slane %v766, 2
    %v768 = vadd.f32 %v766, %v767
    %v769 = vrot.slane %v768, 1
    %v770 = vadd.f32 %v768, %v769
    %772 = vrot.lane.b32.xlu0 %v717, 96
    %v773 = vpop.permute.xlu0 %772
    %v775 = vadd.f32 %v717, %v773
    %777 = vrot.lane.b32.xlu0 %v749, 96
    %v778 = vpop.permute.xlu0 %777
    %v780 = vadd.f32 %v749, %v778
    %781 = vrot.lane.b32.xlu0 %v717, 64
    %v782 = vpop.permute.xlu0 %781
    %v784 = vadd.f32 %v775, %v782
    %785 = vrot.lane.b32.xlu0 %v749, 64
    %v786 = vpop.permute.xlu0 %785
    %v788 = vadd.f32 %v780, %v786
    %789 = vrot.lane.b32.xlu0 %v717, 32
    %v790 = vpop.permute.xlu0 %789
    %v792 = vadd.f32 %v784, %v790
    %793 = vrot.lane.b32.xlu0 %v749, 32
    %v794 = vpop.permute.xlu0 %793
    %v796 = vadd.f32 %v788, %v794
    %v797 = vadd.f32 %v792, %v724
    %v798 = vadd.f32 %v796, %v756
    %800 = vrot.lane.b32.xlu0 %v724, 96
    %v801 = vpop.permute.xlu0 %800
    %v803 = vadd.f32 %v797, %v801
    %805 = vrot.lane.b32.xlu0 %v756, 96
    %v806 = vpop.permute.xlu0 %805
    %v808 = vadd.f32 %v798, %v806
    %809 = vrot.lane.b32.xlu0 %v724, 64
    %v810 = vpop.permute.xlu0 %809
    %v812 = vadd.f32 %v803, %v810
    %813 = vrot.lane.b32.xlu0 %v756, 64
    %v814 = vpop.permute.xlu0 %813
    %v816 = vadd.f32 %v808, %v814
    %817 = vrot.lane.b32.xlu0 %v724, 32
    %v818 = vpop.permute.xlu0 %817
    %v820 = vadd.f32 %v812, %v818
    %821 = vrot.lane.b32.xlu0 %v756, 32
    %v822 = vpop.permute.xlu0 %821
    %v824 = vadd.f32 %v816, %v822
    %v825 = vadd.f32 %v820, %v731
    %v826 = vadd.f32 %v824, %v763
    %828 = vrot.lane.b32.xlu0 %v731, 96
    %v829 = vpop.permute.xlu0 %828
    %v831 = vadd.f32 %v825, %v829
    %833 = vrot.lane.b32.xlu0 %v763, 96
    %v834 = vpop.permute.xlu0 %833
    %v836 = vadd.f32 %v826, %v834
    %837 = vrot.lane.b32.xlu0 %v731, 64
    %v838 = vpop.permute.xlu0 %837
    %v840 = vadd.f32 %v831, %v838
    %841 = vrot.lane.b32.xlu0 %v763, 64
    %v842 = vpop.permute.xlu0 %841
    %v844 = vadd.f32 %v836, %v842
    %845 = vrot.lane.b32.xlu0 %v731, 32
    %v846 = vpop.permute.xlu0 %845
    %v848 = vadd.f32 %v840, %v846
    %849 = vrot.lane.b32.xlu0 %v763, 32
    %v850 = vpop.permute.xlu0 %849
    %v852 = vadd.f32 %v844, %v850
    %v853 = vadd.f32 %v848, %v738
    %v854 = vadd.f32 %v852, %v770
    %856 = vrot.lane.b32.xlu0 %v738, 96
    %v857 = vpop.permute.xlu0 %856
    %v859 = vadd.f32 %v853, %v857
    %861 = vrot.lane.b32.xlu0 %v770, 96
    %v862 = vpop.permute.xlu0 %861
    %v864 = vadd.f32 %v854, %v862
    %865 = vrot.lane.b32.xlu0 %v738, 64
    %v866 = vpop.permute.xlu0 %865
    %v868 = vadd.f32 %v859, %v866
    %869 = vrot.lane.b32.xlu0 %v770, 64
    %v870 = vpop.permute.xlu0 %869
    %v872 = vadd.f32 %v864, %v870
    %873 = vrot.lane.b32.xlu0 %v738, 32
    %v874 = vpop.permute.xlu0 %873
    %v876 = vadd.f32 %v868, %v874
    %877 = vrot.lane.b32.xlu0 %v770, 32
    %v878 = vpop.permute.xlu0 %877
    %v880 = vadd.f32 %v872, %v878
    %v881 = vmul.f32 %v876, 0.03125
    %v882 = vmul.f32 %v880, 0.03125
    %v883 = vmul.f32 %v881, %v881
    %v884 = vsub.f32 %v882, %v883
    %v885 = vadd.f32 %v884, 1e-05
    %v886 = vrsqrt.pop %v885
    %v887 = vmul.f32 %v99, %v886
    %v888 = vmul.f32 %v881, %v887
    %v889 = vsub.f32 %v100, %v888
    %891 = vrot.lane.b32.xlu0 %v887, 32
    %v892 = vpop.permute.xlu0 %891
    %894 = vrot.lane.b32.xlu0 %v887, 64
    %v895 = vpop.permute.xlu0 %894
    %897 = vrot.lane.b32.xlu0 %v887, 96
    %v898 = vpop.permute.xlu0 %897
    %v900 = vsel %vm672, %v887, %v892
    %v901 = vsel %vm674, %v900, %v895
    %v902 = vsel %vm676, %v901, %v898
    %904 = vrot.lane.b32.xlu0 %v889, 32
    %v905 = vpop.permute.xlu0 %904
    %907 = vrot.lane.b32.xlu0 %v889, 64
    %v908 = vpop.permute.xlu0 %907
    %910 = vrot.lane.b32.xlu0 %v889, 96
    %v911 = vpop.permute.xlu0 %910
    %v913 = vsel %vm672, %v889, %v905
    %v914 = vsel %vm674, %v913, %v908
    %v915 = vsel %vm676, %v914, %v911
    %v916 = vlaneseq
    %v917 = vshrl.u32 %v916, 7
    %v918 = vsub.s32 0, %v917
    %v919 = vrot.slane %v902, %v918
    %v920 = vmul.f32 %v436, %v919
    %v921 = vmul.f32 %v438, %v919
    %v922 = vmul.f32 %v477, %v919
    %v923 = vmul.f32 %v479, %v919
    %v924 = vlaneseq
    %v925 = vshrl.u32 %v924, 7
    %v926 = vsub.s32 0, %v925
    %v927 = vrot.slane %v915, %v926
    %v928 = vadd.f32 %v920, %v927
    %v929 = vadd.f32 %v921, %v927
    %v930 = vadd.f32 %v922, %v927
    %v931 = vadd.f32 %v923, %v927
    %v932 = vmax.f32 %v928, 0.0
    %v933 = vmax.f32 %v929, 0.0
    %v934 = vmax.f32 %v930, 0.0
    %v935 = vmax.f32 %v931, 0.0
    %937 = vrot.lane.b32.xlu0 %v932, 32
    %v938 = vpop.permute.xlu0 %937
    %941 = vrot.lane.b32.xlu0 %v707, 32
    %v942 = vpop.permute.xlu0 %941
    %944 = vrot.lane.b32.xlu0 %v932, 64
    %v945 = vpop.permute.xlu0 %944
    %947 = vrot.lane.b32.xlu0 %v707, 64
    %v948 = vpop.permute.xlu0 %947
    %950 = vrot.lane.b32.xlu0 %v932, 96
    %v951 = vpop.permute.xlu0 %950
    %953 = vrot.lane.b32.xlu0 %v707, 96
    %v954 = vpop.permute.xlu0 %953
    %957 = vrot.lane.b32.xlu0 %v933, 32
    %v958 = vpop.permute.xlu0 %957
    %961 = vrot.lane.b32.xlu0 %v708, 32
    %v962 = vpop.permute.xlu0 %961
    %964 = vrot.lane.b32.xlu0 %v933, 64
    %v965 = vpop.permute.xlu0 %964
    %967 = vrot.lane.b32.xlu0 %v708, 64
    %v968 = vpop.permute.xlu0 %967
    %970 = vrot.lane.b32.xlu0 %v933, 96
    %v971 = vpop.permute.xlu0 %970
    %973 = vrot.lane.b32.xlu0 %v708, 96
    %v974 = vpop.permute.xlu0 %973
    %v976 = vsel %vm672, %v707, %v938
    %v977 = vsel %vm674, %v976, %v942
    %v978 = vsel %vm676, %v977, %v945
    %v979 = vsel %vm672, %v948, %v951
    %v980 = vsel %vm674, %v979, %v954
    %v981 = vsel %vm676, %v980, %v932
    %v982 = vsel %vm672, %v708, %v958
    %v983 = vsel %vm674, %v982, %v962
    %v984 = vsel %vm676, %v983, %v965
    %v985 = vsel %vm672, %v968, %v971
    %v986 = vsel %vm674, %v985, %v974
    %v987 = vsel %vm676, %v986, %v933
    %989 = vrot.lane.b32.xlu0 %v934, 32
    %v990 = vpop.permute.xlu0 %989
    %993 = vrot.lane.b32.xlu0 %v709, 32
    %v994 = vpop.permute.xlu0 %993
    %996 = vrot.lane.b32.xlu0 %v934, 64
    %v997 = vpop.permute.xlu0 %996
    %999 = vrot.lane.b32.xlu0 %v709, 64
    %v1000 = vpop.permute.xlu0 %999
    %1002 = vrot.lane.b32.xlu0 %v934, 96
    %v1003 = vpop.permute.xlu0 %1002
    %1005 = vrot.lane.b32.xlu0 %v709, 96
    %v1006 = vpop.permute.xlu0 %1005
    %1009 = vrot.lane.b32.xlu0 %v935, 32
    %v1010 = vpop.permute.xlu0 %1009
    %1013 = vrot.lane.b32.xlu0 %v710, 32
    %v1014 = vpop.permute.xlu0 %1013
    %1016 = vrot.lane.b32.xlu0 %v935, 64
    %v1017 = vpop.permute.xlu0 %1016
    %1019 = vrot.lane.b32.xlu0 %v710, 64
    %v1020 = vpop.permute.xlu0 %1019
    %1022 = vrot.lane.b32.xlu0 %v935, 96
    %v1023 = vpop.permute.xlu0 %1022
    %1025 = vrot.lane.b32.xlu0 %v710, 96
    %v1026 = vpop.permute.xlu0 %1025
    %v1028 = vsel %vm672, %v709, %v990
    %v1029 = vsel %vm674, %v1028, %v994
    %v1030 = vsel %vm676, %v1029, %v997
    %v1031 = vsel %vm672, %v1000, %v1003
    %v1032 = vsel %vm674, %v1031, %v1006
    %v1033 = vsel %vm676, %v1032, %v934
    %v1034 = vsel %vm672, %v710, %v1010
    %v1035 = vsel %vm674, %v1034, %v1014
    %v1036 = vsel %vm676, %v1035, %v1017
    %v1037 = vsel %vm672, %v1020, %v1023
    %v1038 = vsel %vm674, %v1037, %v1026
    %v1039 = vsel %vm676, %v1038, %v935
    %v1042 = vrot.slane %v984, 7
    %v1043 = vrot.slane %v987, 7
    %v1048 = vrot.slane %v1030, 6
    %v1049 = vrot.slane %v1033, 6
    %v1054 = vrot.slane %v1036, 5
    %v1055 = vrot.slane %v1039, 5
    %v1060 = vrot.slane %v978, 5
    %v1061 = vrot.slane %v981, 5
    %v1064 = vrot.slane %v984, 4
    %v1065 = vrot.slane %v987, 4
    %v1068 = vrot.slane %v1030, 3
    %v1069 = vrot.slane %v1033, 3
    %v1072 = vrot.slane %v1036, 2
    %v1073 = vrot.slane %v1039, 2
    %vm1076 = vcmask 1040384
    %v1077 = vsel %vm1076, %v978, %v1042
    %v1078 = vsel %vm1076, %v981, %v1043
    %v1079 = vsel %vm267, %v1077, %v1048
    %v1080 = vsel %vm267, %v1078, %v1049
    %vm1081 = vcmask 1042432
    %v1082 = vsel %vm1081, %v1079, %v1054
    %v1083 = vsel %vm1081, %v1080, %v1055
    %vm1084 = vcmask 1043456
    %v1085 = vsel %vm1084, %v1082, %v1060
    %v1086 = vsel %vm1084, %v1083, %v1061
    %v1087 = vsel %vm388, %v1085, %v1064
    %v1088 = vsel %vm388, %v1086, %v1065
    %vm1089 = vcmask 1045504
    %v1090 = vsel %vm1089, %v1087, %v1068
    %v1091 = vsel %vm1089, %v1088, %v1069
    %vm1092 = vcmask 1046528
    %v1093 = vsel %vm1092, %v1090, %v1072
    %v1094 = vsel %vm1092, %v1091, %v1073
    %v1097 = vrot.slane %v1093, 7
    %v1098 = vrot.slane %v1094, 7
    %v1101 = vsel %vm1076, 0.0, %v1097
    %v1102 = vsel %vm1076, 0.0, %v1098
    %v1103 = vsel %vm1084, %v1101, 0.0
    %v1104 = vsel %vm1084, %v1102, 0.0
    %v1105 = vsel %vm388, %v1103, %v1097
    %v1106 = vsel %vm388, %v1104, %v1098
    %v1107 = vrot.slane %v1093, 1
    %v1108 = vrot.slane %v1094, 1
    %v1111 = vsel %vm1081, %v1107, 0.0
    %v1112 = vsel %vm1081, %v1108, 0.0
    %v1113 = vsel %vm1084, %v1111, %v1107
    %v1114 = vsel %vm1084, %v1112, %v1108
    %v1115 = vsel %vm1092, %v1113, 0.0
    %v1116 = vsel %vm1092, %v1114, 0.0
    %v1117 = vpack.c.bf16 %v1105, %v1105
    %v1118 = vpack.c.bf16 %v1106, %v1106
    %v1119 = vpack.c.bf16 %v1093, %v1093
    %v1120 = vpack.c.bf16 %v1094, %v1094
    %v1121 = vld [vmem:[%s4] sm:$0xff]
    %v1122 = vld [vmem:[%s4 + $0x8] sm:$0xff]
    %v1123 = vld [vmem:[%s4 + $0x10] sm:$0xff]
    %v1124 = vld [vmem:[%s4 + $0x18] sm:$0xff]
    %v1125 = vld [vmem:[%s4 + $0x20] sm:$0xff]
    %v1126 = vld [vmem:[%s4 + $0x28] sm:$0xff]
    %v1127 = vld [vmem:[%s4 + $0x30] sm:$0xff]
    %v1128 = vld [vmem:[%s4 + $0x38] sm:$0xff]
    %v1129 = vld [vmem:[%s4 + $0x40] sm:$0xff]
    %v1130 = vld [vmem:[%s4 + $0x48] sm:$0xff]
    %v1131 = vld [vmem:[%s4 + $0x50] sm:$0xff]
    %v1132 = vld [vmem:[%s4 + $0x58] sm:$0xff]
    %v1133 = vld [vmem:[%s4 + $0x60] sm:$0xff]
    %v1134 = vld [vmem:[%s4 + $0x68] sm:$0xff]
    %v1135 = vld [vmem:[%s4 + $0x70] sm:$0xff]
    %v1136 = vld [vmem:[%s4 + $0x78] sm:$0xff]
    %v1137 = vld [vmem:[%s4 + $0x80] sm:$0xff]
    %v1138 = vld [vmem:[%s4 + $0x88] sm:$0xff]
    %v1139 = vld [vmem:[%s4 + $0x90] sm:$0xff]
    %v1140 = vld [vmem:[%s4 + $0x98] sm:$0xff]
    %v1141 = vld [vmem:[%s4 + $0xa0] sm:$0xff]
    %v1142 = vld [vmem:[%s4 + $0xa8] sm:$0xff]
    %v1143 = vld [vmem:[%s4 + $0xb0] sm:$0xff]
    %v1144 = vld [vmem:[%s4 + $0xb8] sm:$0xff]
    %v1145 = vld [vmem:[%s4 + $0xc0] sm:$0xff]
    %v1146 = vld [vmem:[%s4 + $0xc8] sm:$0xff]
    %v1147 = vld [vmem:[%s4 + $0xd0] sm:$0xff]
    %v1148 = vld [vmem:[%s4 + $0xd8] sm:$0xff]
    %v1149 = vld [vmem:[%s4 + $0xe0] sm:$0xff]
    %v1150 = vld [vmem:[%s4 + $0xe8] sm:$0xff]
    %v1151 = vld [vmem:[%s4 + $0xf0] sm:$0xff]
    %v1152 = vld [vmem:[%s4 + $0xf8] sm:$0xff]
    %v1153 = vld [vmem:[%s4 + $0x100] sm:$0xff]
    %v1154 = vld [vmem:[%s4 + $0x108] sm:$0xff]
    %v1155 = vld [vmem:[%s4 + $0x110] sm:$0xff]
    %v1156 = vld [vmem:[%s4 + $0x118] sm:$0xff]
    %v1157 = vld [vmem:[%s4 + $0x120] sm:$0xff]
    %v1158 = vld [vmem:[%s4 + $0x128] sm:$0xff]
    %v1159 = vld [vmem:[%s4 + $0x130] sm:$0xff]
    %v1160 = vld [vmem:[%s4 + $0x138] sm:$0xff]
    %v1161 = vld [vmem:[%s4 + $0x140] sm:$0xff]
    %v1162 = vld [vmem:[%s4 + $0x148] sm:$0xff]
    %v1163 = vld [vmem:[%s4 + $0x150] sm:$0xff]
    %v1164 = vld [vmem:[%s4 + $0x158] sm:$0xff]
    %v1165 = vld [vmem:[%s4 + $0x160] sm:$0xff]
    %v1166 = vld [vmem:[%s4 + $0x168] sm:$0xff]
    %v1167 = vld [vmem:[%s4 + $0x170] sm:$0xff]
    %v1168 = vld [vmem:[%s4 + $0x178] sm:$0xff]
    %v1169 = vld [vmem:[%s4 + $0x180] sm:$0xff]
    %v1170 = vld [vmem:[%s4 + $0x188] sm:$0xff]
    %v1171 = vld [vmem:[%s4 + $0x190] sm:$0xff]
    %v1172 = vld [vmem:[%s4 + $0x198] sm:$0xff]
    %v1173 = vld [vmem:[%s4 + $0x1a0] sm:$0xff]
    %v1174 = vld [vmem:[%s4 + $0x1a8] sm:$0xff]
    %v1175 = vld [vmem:[%s4 + $0x1b0] sm:$0xff]
    %v1176 = vld [vmem:[%s4 + $0x1b8] sm:$0xff]
    %v1177 = vld [vmem:[%s4 + $0x1c0] sm:$0xff]
    %v1178 = vld [vmem:[%s4 + $0x1c8] sm:$0xff]
    %v1179 = vld [vmem:[%s4 + $0x1d0] sm:$0xff]
    %v1180 = vld [vmem:[%s4 + $0x1d8] sm:$0xff]
    %v1181 = vld [vmem:[%s4 + $0x1e0] sm:$0xff]
    %v1182 = vld [vmem:[%s4 + $0x1e8] sm:$0xff]
    %v1183 = vld [vmem:[%s4 + $0x1f0] sm:$0xff]
    %v1184 = vld [vmem:[%s4 + $0x1f8] sm:$0xff]
    %v1249 = vunpack.c.l.b16 %v1121
    %v1250 = vunpack.c.h.b16 %v1121
    %v1251 = vunpack.c.l.b16 %v1122
    %v1252 = vunpack.c.h.b16 %v1122
    %v1253 = vunpack.c.l.b16 %v1123
    %v1254 = vunpack.c.h.b16 %v1123
    %v1255 = vunpack.c.l.b16 %v1124
    %v1256 = vunpack.c.h.b16 %v1124
    %v1257 = vunpack.c.l.b16 %v1125
    %v1258 = vunpack.c.h.b16 %v1125
    %v1259 = vunpack.c.l.b16 %v1126
    %v1260 = vunpack.c.h.b16 %v1126
    %v1261 = vunpack.c.l.b16 %v1127
    %v1262 = vunpack.c.h.b16 %v1127
    %v1263 = vunpack.c.l.b16 %v1128
    %v1264 = vunpack.c.h.b16 %v1128
    %v1265 = vunpack.c.l.b16 %v1129
    %v1266 = vunpack.c.h.b16 %v1129
    %v1267 = vunpack.c.l.b16 %v1130
    %v1268 = vunpack.c.h.b16 %v1130
    %v1269 = vunpack.c.l.b16 %v1131
    %v1270 = vunpack.c.h.b16 %v1131
    %v1271 = vunpack.c.l.b16 %v1132
    %v1272 = vunpack.c.h.b16 %v1132
    %v1273 = vunpack.c.l.b16 %v1133
    %v1274 = vunpack.c.h.b16 %v1133
    %v1275 = vunpack.c.l.b16 %v1134
    %v1276 = vunpack.c.h.b16 %v1134
    %v1277 = vunpack.c.l.b16 %v1135
    %v1278 = vunpack.c.h.b16 %v1135
    %v1279 = vunpack.c.l.b16 %v1136
    %v1280 = vunpack.c.h.b16 %v1136
    %v1281 = vunpack.c.l.b16 %v1137
    %v1282 = vunpack.c.h.b16 %v1137
    %v1283 = vunpack.c.l.b16 %v1138
    %v1284 = vunpack.c.h.b16 %v1138
    %v1285 = vunpack.c.l.b16 %v1139
    %v1286 = vunpack.c.h.b16 %v1139
    %v1287 = vunpack.c.l.b16 %v1140
    %v1288 = vunpack.c.h.b16 %v1140
    %v1289 = vunpack.c.l.b16 %v1141
    %v1290 = vunpack.c.h.b16 %v1141
    %v1291 = vunpack.c.l.b16 %v1142
    %v1292 = vunpack.c.h.b16 %v1142
    %v1293 = vunpack.c.l.b16 %v1143
    %v1294 = vunpack.c.h.b16 %v1143
    %v1295 = vunpack.c.l.b16 %v1144
    %v1296 = vunpack.c.h.b16 %v1144
    %v1297 = vunpack.c.l.b16 %v1145
    %v1298 = vunpack.c.h.b16 %v1145
    %v1299 = vunpack.c.l.b16 %v1146
    %v1300 = vunpack.c.h.b16 %v1146
    %v1301 = vunpack.c.l.b16 %v1147
    %v1302 = vunpack.c.h.b16 %v1147
    %v1303 = vunpack.c.l.b16 %v1148
    %v1304 = vunpack.c.h.b16 %v1148
    %v1305 = vunpack.c.l.b16 %v1149
    %v1306 = vunpack.c.h.b16 %v1149
    %v1307 = vunpack.c.l.b16 %v1150
    %v1308 = vunpack.c.h.b16 %v1150
    %v1309 = vunpack.c.l.b16 %v1151
    %v1310 = vunpack.c.h.b16 %v1151
    %v1311 = vunpack.c.l.b16 %v1152
    %v1312 = vunpack.c.h.b16 %v1152
    %v1313 = vunpack.c.l.b16 %v1153
    %v1314 = vunpack.c.h.b16 %v1153
    %v1315 = vunpack.c.l.b16 %v1154
    %v1316 = vunpack.c.h.b16 %v1154
    %v1317 = vunpack.c.l.b16 %v1155
    %v1318 = vunpack.c.h.b16 %v1155
    %v1319 = vunpack.c.l.b16 %v1156
    %v1320 = vunpack.c.h.b16 %v1156
    %v1321 = vunpack.c.l.b16 %v1157
    %v1322 = vunpack.c.h.b16 %v1157
    %v1323 = vunpack.c.l.b16 %v1158
    %v1324 = vunpack.c.h.b16 %v1158
    %v1325 = vunpack.c.l.b16 %v1159
    %v1326 = vunpack.c.h.b16 %v1159
    %v1327 = vunpack.c.l.b16 %v1160
    %v1328 = vunpack.c.h.b16 %v1160
    %v1329 = vunpack.c.l.b16 %v1161
    %v1330 = vunpack.c.h.b16 %v1161
    %v1331 = vunpack.c.l.b16 %v1162
    %v1332 = vunpack.c.h.b16 %v1162
    %v1333 = vunpack.c.l.b16 %v1163
    %v1334 = vunpack.c.h.b16 %v1163
    %v1335 = vunpack.c.l.b16 %v1164
    %v1336 = vunpack.c.h.b16 %v1164
    %v1337 = vunpack.c.l.b16 %v1165
    %v1338 = vunpack.c.h.b16 %v1165
    %v1339 = vunpack.c.l.b16 %v1166
    %v1340 = vunpack.c.h.b16 %v1166
    %v1341 = vunpack.c.l.b16 %v1167
    %v1342 = vunpack.c.h.b16 %v1167
    %v1343 = vunpack.c.l.b16 %v1168
    %v1344 = vunpack.c.h.b16 %v1168
    %v1345 = vunpack.c.l.b16 %v1169
    %v1346 = vunpack.c.h.b16 %v1169
    %v1347 = vunpack.c.l.b16 %v1170
    %v1348 = vunpack.c.h.b16 %v1170
    %v1349 = vunpack.c.l.b16 %v1171
    %v1350 = vunpack.c.h.b16 %v1171
    %v1351 = vunpack.c.l.b16 %v1172
    %v1352 = vunpack.c.h.b16 %v1172
    %v1353 = vunpack.c.l.b16 %v1173
    %v1354 = vunpack.c.h.b16 %v1173
    %v1355 = vunpack.c.l.b16 %v1174
    %v1356 = vunpack.c.h.b16 %v1174
    %v1357 = vunpack.c.l.b16 %v1175
    %v1358 = vunpack.c.h.b16 %v1175
    %v1359 = vunpack.c.l.b16 %v1176
    %v1360 = vunpack.c.h.b16 %v1176
    %v1361 = vunpack.c.l.b16 %v1177
    %v1362 = vunpack.c.h.b16 %v1177
    %v1363 = vunpack.c.l.b16 %v1178
    %v1364 = vunpack.c.h.b16 %v1178
    %v1365 = vunpack.c.l.b16 %v1179
    %v1366 = vunpack.c.h.b16 %v1179
    %v1367 = vunpack.c.l.b16 %v1180
    %v1368 = vunpack.c.h.b16 %v1180
    %v1369 = vunpack.c.l.b16 %v1181
    %v1370 = vunpack.c.h.b16 %v1181
    %v1371 = vunpack.c.l.b16 %v1182
    %v1372 = vunpack.c.h.b16 %v1182
    %v1373 = vunpack.c.l.b16 %v1183
    %v1374 = vunpack.c.h.b16 %v1183
    %v1375 = vunpack.c.l.b16 %v1184
    %v1376 = vunpack.c.h.b16 %v1184
    %v1377 = vpack.c.b16 %v1251, %v1249
    %v1378 = vpack.c.b16 %v1252, %v1250
    %v1379 = vpack.c.b16 %v1255, %v1253
    %v1380 = vpack.c.b16 %v1256, %v1254
    %v1381 = vpack.c.b16 %v1259, %v1257
    %v1382 = vpack.c.b16 %v1260, %v1258
    %v1383 = vpack.c.b16 %v1263, %v1261
    %v1384 = vpack.c.b16 %v1264, %v1262
    %v1385 = vpack.c.b16 %v1267, %v1265
    %v1386 = vpack.c.b16 %v1268, %v1266
    %v1387 = vpack.c.b16 %v1271, %v1269
    %v1388 = vpack.c.b16 %v1272, %v1270
    %v1389 = vpack.c.b16 %v1275, %v1273
    %v1390 = vpack.c.b16 %v1276, %v1274
    %v1391 = vpack.c.b16 %v1279, %v1277
    %v1392 = vpack.c.b16 %v1280, %v1278
    %v1393 = vpack.c.b16 %v1283, %v1281
    %v1394 = vpack.c.b16 %v1284, %v1282
    %v1395 = vpack.c.b16 %v1287, %v1285
    %v1396 = vpack.c.b16 %v1288, %v1286
    %v1397 = vpack.c.b16 %v1291, %v1289
    %v1398 = vpack.c.b16 %v1292, %v1290
    %v1399 = vpack.c.b16 %v1295, %v1293
    %v1400 = vpack.c.b16 %v1296, %v1294
    %v1401 = vpack.c.b16 %v1299, %v1297
    %v1402 = vpack.c.b16 %v1300, %v1298
    %v1403 = vpack.c.b16 %v1303, %v1301
    %v1404 = vpack.c.b16 %v1304, %v1302
    %v1405 = vpack.c.b16 %v1307, %v1305
    %v1406 = vpack.c.b16 %v1308, %v1306
    %v1407 = vpack.c.b16 %v1311, %v1309
    %v1408 = vpack.c.b16 %v1312, %v1310
    %v1409 = vpack.c.b16 %v1315, %v1313
    %v1410 = vpack.c.b16 %v1316, %v1314
    %v1411 = vpack.c.b16 %v1319, %v1317
    %v1412 = vpack.c.b16 %v1320, %v1318
    %v1413 = vpack.c.b16 %v1323, %v1321
    %v1414 = vpack.c.b16 %v1324, %v1322
    %v1415 = vpack.c.b16 %v1327, %v1325
    %v1416 = vpack.c.b16 %v1328, %v1326
    %v1417 = vpack.c.b16 %v1331, %v1329
    %v1418 = vpack.c.b16 %v1332, %v1330
    %v1419 = vpack.c.b16 %v1335, %v1333
    %v1420 = vpack.c.b16 %v1336, %v1334
    %v1421 = vpack.c.b16 %v1339, %v1337
    %v1422 = vpack.c.b16 %v1340, %v1338
    %v1423 = vpack.c.b16 %v1343, %v1341
    %v1424 = vpack.c.b16 %v1344, %v1342
    %v1425 = vpack.c.b16 %v1347, %v1345
    %v1426 = vpack.c.b16 %v1348, %v1346
    %v1427 = vpack.c.b16 %v1351, %v1349
    %v1428 = vpack.c.b16 %v1352, %v1350
    %v1429 = vpack.c.b16 %v1355, %v1353
    %v1430 = vpack.c.b16 %v1356, %v1354
    %v1431 = vpack.c.b16 %v1359, %v1357
    %v1432 = vpack.c.b16 %v1360, %v1358
    %v1433 = vpack.c.b16 %v1363, %v1361
    %v1434 = vpack.c.b16 %v1364, %v1362
    %v1435 = vpack.c.b16 %v1367, %v1365
    %v1436 = vpack.c.b16 %v1368, %v1366
    %v1437 = vpack.c.b16 %v1371, %v1369
    %v1438 = vpack.c.b16 %v1372, %v1370
    %v1439 = vpack.c.b16 %v1375, %v1373
    %v1440 = vpack.c.b16 %v1376, %v1374
    %1505 = vmatprep.subr.bf16.mxu0 %v1392
    %1506 = vmatpush1.bf16.msra.mxu0 %v1391
    %1507 = vmatprep.subr.bf16.mxu0 %v1390
    %1508 = vmatpush1.bf16.msra.mxu0 %v1389
    %1509 = vmatprep.subr.bf16.mxu0 %v1388
    %1510 = vmatpush1.bf16.msra.mxu0 %v1387
    %1511 = vmatprep.subr.bf16.mxu0 %v1386
    %1512 = vmatpush1.bf16.msra.mxu0 %v1385
    %1513 = vmatprep.subr.bf16.mxu0 %v1384
    %1514 = vmatpush1.bf16.msra.mxu0 %v1383
    %1515 = vmatprep.subr.bf16.mxu0 %v1382
    %1516 = vmatpush1.bf16.msra.mxu0 %v1381
    %1517 = vmatprep.subr.bf16.mxu0 %v1380
    %1518 = vmatpush1.bf16.msra.mxu0 %v1379
    %1519 = vmatprep.subr.bf16.mxu0 %v1378
    %1520 = vmatpush1.bf16.msra.mxu0 %v1377
    %1521 = vmatprep.subr.bf16.mxu0 %v1408
    %1522 = vmatpush2.bf16.msra.mxu0 %v1407
    %1523 = vmatprep.subr.bf16.mxu0 %v1406
    %1524 = vmatpush2.bf16.msra.mxu0 %v1405
    %1525 = vmatprep.subr.bf16.mxu0 %v1404
    %1526 = vmatpush2.bf16.msra.mxu0 %v1403
    %1527 = vmatprep.subr.bf16.mxu0 %v1402
    %1528 = vmatpush2.bf16.msra.mxu0 %v1401
    %1529 = vmatprep.subr.bf16.mxu0 %v1400
    %1530 = vmatpush2.bf16.msra.mxu0 %v1399
    %1531 = vmatprep.subr.bf16.mxu0 %v1398
    %1532 = vmatpush2.bf16.msra.mxu0 %v1397
    %1533 = vmatprep.subr.bf16.mxu0 %v1396
    %1534 = vmatpush2.bf16.msra.mxu0 %v1395
    %1535 = vmatprep.subr.bf16.mxu0 %v1394
    %1536 = vmatpush2.bf16.msra.mxu0 %v1393
    %1537 = vmatprep.mubr.bf16.mxu0 %v1118
    %1538 = vmatmul.mubr.bf16.gmra.mxu0 %v1117
    %v1539 = vpop.f32.mrf.mxu0
    %v1540 = vadd.f32 0.0, %v1539
    %v1541 = vpop.f32.mrf.mxu0
    %v1542 = vadd.f32 0.0, %v1541
    %v1543 = vpop.f32.mrf.mxu0
    %v1544 = vpop.f32.mrf.mxu0
    %1545 = vdwg.mxu0
    %1546 = vmatprep.subr.bf16.mxu0 %v1424
    %1547 = vmatpush1.bf16.msra.mxu0 %v1423
    %1548 = vmatprep.subr.bf16.mxu0 %v1422
    %1549 = vmatpush1.bf16.msra.mxu0 %v1421
    %1550 = vmatprep.subr.bf16.mxu0 %v1420
    %1551 = vmatpush1.bf16.msra.mxu0 %v1419
    %1552 = vmatprep.subr.bf16.mxu0 %v1418
    %1553 = vmatpush1.bf16.msra.mxu0 %v1417
    %1554 = vmatprep.subr.bf16.mxu0 %v1416
    %1555 = vmatpush1.bf16.msra.mxu0 %v1415
    %1556 = vmatprep.subr.bf16.mxu0 %v1414
    %1557 = vmatpush1.bf16.msra.mxu0 %v1413
    %1558 = vmatprep.subr.bf16.mxu0 %v1412
    %1559 = vmatpush1.bf16.msra.mxu0 %v1411
    %1560 = vmatprep.subr.bf16.mxu0 %v1410
    %1561 = vmatpush1.bf16.msra.mxu0 %v1409
    %1562 = vmatprep.subr.bf16.mxu0 %v1440
    %1563 = vmatpush2.bf16.msra.mxu0 %v1439
    %1564 = vmatprep.subr.bf16.mxu0 %v1438
    %1565 = vmatpush2.bf16.msra.mxu0 %v1437
    %1566 = vmatprep.subr.bf16.mxu0 %v1436
    %1567 = vmatpush2.bf16.msra.mxu0 %v1435
    %1568 = vmatprep.subr.bf16.mxu0 %v1434
    %1569 = vmatpush2.bf16.msra.mxu0 %v1433
    %1570 = vmatprep.subr.bf16.mxu0 %v1432
    %1571 = vmatpush2.bf16.msra.mxu0 %v1431
    %1572 = vmatprep.subr.bf16.mxu0 %v1430
    %1573 = vmatpush2.bf16.msra.mxu0 %v1429
    %1574 = vmatprep.subr.bf16.mxu0 %v1428
    %1575 = vmatpush2.bf16.msra.mxu0 %v1427
    %1576 = vmatprep.subr.bf16.mxu0 %v1426
    %1577 = vmatpush2.bf16.msra.mxu0 %v1425
    %1578 = vmatprep.mubr.bf16.mxu0 %v1120
    %1579 = vmatmul.mubr.bf16.gmra.mxu0 %v1119
    %v1580 = vpop.f32.mrf.mxu0
    %v1581 = vadd.f32 %v1540, %v1580
    %v1582 = vpop.f32.mrf.mxu0
    %v1583 = vadd.f32 %v1542, %v1582
    %v1584 = vpop.f32.mrf.mxu0
    %v1585 = vpop.f32.mrf.mxu0
    %1586 = vdwg.mxu0
    %v1587 = vpack.c.bf16 %v1115, %v1115
    %v1588 = vpack.c.bf16 %v1116, %v1116
    %v1589 = vld [vmem:[#allocation4] sm:$0xff]
    %v1590 = vld [vmem:[#allocation4 + $0x8] sm:$0xff]
    %v1591 = vld [vmem:[#allocation4 + $0x10] sm:$0xff]
    %v1592 = vld [vmem:[#allocation4 + $0x18] sm:$0xff]
    %v1593 = vld [vmem:[#allocation4 + $0x20] sm:$0xff]
    %v1594 = vld [vmem:[#allocation4 + $0x28] sm:$0xff]
    %v1595 = vld [vmem:[#allocation4 + $0x30] sm:$0xff]
    %v1596 = vld [vmem:[#allocation4 + $0x38] sm:$0xff]
    %v1597 = vld [vmem:[#allocation4 + $0x40] sm:$0xff]
    %v1598 = vld [vmem:[#allocation4 + $0x48] sm:$0xff]
    %v1599 = vld [vmem:[#allocation4 + $0x50] sm:$0xff]
    %v1600 = vld [vmem:[#allocation4 + $0x58] sm:$0xff]
    %v1601 = vld [vmem:[#allocation4 + $0x60] sm:$0xff]
    %v1602 = vld [vmem:[#allocation4 + $0x68] sm:$0xff]
    %v1603 = vld [vmem:[#allocation4 + $0x70] sm:$0xff]
    %v1604 = vld [vmem:[#allocation4 + $0x78] sm:$0xff]
    %v1605 = vld [vmem:[#allocation4 + $0x80] sm:$0xff]
    %v1606 = vld [vmem:[#allocation4 + $0x88] sm:$0xff]
    %v1607 = vld [vmem:[#allocation4 + $0x90] sm:$0xff]
    %v1608 = vld [vmem:[#allocation4 + $0x98] sm:$0xff]
    %v1609 = vld [vmem:[#allocation4 + $0xa0] sm:$0xff]
    %v1610 = vld [vmem:[#allocation4 + $0xa8] sm:$0xff]
    %v1611 = vld [vmem:[#allocation4 + $0xb0] sm:$0xff]
    %v1612 = vld [vmem:[#allocation4 + $0xb8] sm:$0xff]
    %v1613 = vld [vmem:[#allocation4 + $0xc0] sm:$0xff]
    %v1614 = vld [vmem:[#allocation4 + $0xc8] sm:$0xff]
    %v1615 = vld [vmem:[#allocation4 + $0xd0] sm:$0xff]
    %v1616 = vld [vmem:[#allocation4 + $0xd8] sm:$0xff]
    %v1617 = vld [vmem:[#allocation4 + $0xe0] sm:$0xff]
    %v1618 = vld [vmem:[#allocation4 + $0xe8] sm:$0xff]
    %v1619 = vld [vmem:[#allocation4 + $0xf0] sm:$0xff]
    %v1620 = vld [vmem:[#allocation4 + $0xf8] sm:$0xff]
    %v1621 = vld [vmem:[#allocation4 + $0x100] sm:$0xff]
    %v1622 = vld [vmem:[#allocation4 + $0x108] sm:$0xff]
    %v1623 = vld [vmem:[#allocation4 + $0x110] sm:$0xff]
    %v1624 = vld [vmem:[#allocation4 + $0x118] sm:$0xff]
    %v1625 = vld [vmem:[#allocation4 + $0x120] sm:$0xff]
    %v1626 = vld [vmem:[#allocation4 + $0x128] sm:$0xff]
    %v1627 = vld [vmem:[#allocation4 + $0x130] sm:$0xff]
    %v1628 = vld [vmem:[#allocation4 + $0x138] sm:$0xff]
    %v1629 = vld [vmem:[#allocation4 + $0x140] sm:$0xff]
    %v1630 = vld [vmem:[#allocation4 + $0x148] sm:$0xff]
    %v1631 = vld [vmem:[#allocation4 + $0x150] sm:$0xff]
    %v1632 = vld [vmem:[#allocation4 + $0x158] sm:$0xff]
    %v1633 = vld [vmem:[#allocation4 + $0x160] sm:$0xff]
    %v1634 = vld [vmem:[#allocation4 + $0x168] sm:$0xff]
    %v1635 = vld [vmem:[#allocation4 + $0x170] sm:$0xff]
    %v1636 = vld [vmem:[#allocation4 + $0x178] sm:$0xff]
    %v1637 = vld [vmem:[#allocation4 + $0x180] sm:$0xff]
    %v1638 = vld [vmem:[#allocation4 + $0x188] sm:$0xff]
    %v1639 = vld [vmem:[#allocation4 + $0x190] sm:$0xff]
    %v1640 = vld [vmem:[#allocation4 + $0x198] sm:$0xff]
    %v1641 = vld [vmem:[#allocation4 + $0x1a0] sm:$0xff]
    %v1642 = vld [vmem:[#allocation4 + $0x1a8] sm:$0xff]
    %v1643 = vld [vmem:[#allocation4 + $0x1b0] sm:$0xff]
    %v1644 = vld [vmem:[#allocation4 + $0x1b8] sm:$0xff]
    %v1645 = vld [vmem:[#allocation4 + $0x1c0] sm:$0xff]
    %v1646 = vld [vmem:[#allocation4 + $0x1c8] sm:$0xff]
    %v1647 = vld [vmem:[#allocation4 + $0x1d0] sm:$0xff]
    %v1648 = vld [vmem:[#allocation4 + $0x1d8] sm:$0xff]
    %v1649 = vld [vmem:[#allocation4 + $0x1e0] sm:$0xff]
    %v1650 = vld [vmem:[#allocation4 + $0x1e8] sm:$0xff]
    %v1651 = vld [vmem:[#allocation4 + $0x1f0] sm:$0xff]
    %v1652 = vld [vmem:[#allocation4 + $0x1f8] sm:$0xff]
    %v1717 = vunpack.c.l.b16 %v1589
    %v1718 = vunpack.c.h.b16 %v1589
    %v1719 = vunpack.c.l.b16 %v1590
    %v1720 = vunpack.c.h.b16 %v1590
    %v1721 = vunpack.c.l.b16 %v1591
    %v1722 = vunpack.c.h.b16 %v1591
    %v1723 = vunpack.c.l.b16 %v1592
    %v1724 = vunpack.c.h.b16 %v1592
    %v1725 = vunpack.c.l.b16 %v1593
    %v1726 = vunpack.c.h.b16 %v1593
    %v1727 = vunpack.c.l.b16 %v1594
    %v1728 = vunpack.c.h.b16 %v1594
    %v1729 = vunpack.c.l.b16 %v1595
    %v1730 = vunpack.c.h.b16 %v1595
    %v1731 = vunpack.c.l.b16 %v1596
    %v1732 = vunpack.c.h.b16 %v1596
    %v1733 = vunpack.c.l.b16 %v1597
    %v1734 = vunpack.c.h.b16 %v1597
    %v1735 = vunpack.c.l.b16 %v1598
    %v1736 = vunpack.c.h.b16 %v1598
    %v1737 = vunpack.c.l.b16 %v1599
    %v1738 = vunpack.c.h.b16 %v1599
    %v1739 = vunpack.c.l.b16 %v1600
    %v1740 = vunpack.c.h.b16 %v1600
    %v1741 = vunpack.c.l.b16 %v1601
    %v1742 = vunpack.c.h.b16 %v1601
    %v1743 = vunpack.c.l.b16 %v1602
    %v1744 = vunpack.c.h.b16 %v1602
    %v1745 = vunpack.c.l.b16 %v1603
    %v1746 = vunpack.c.h.b16 %v1603
    %v1747 = vunpack.c.l.b16 %v1604
    %v1748 = vunpack.c.h.b16 %v1604
    %v1749 = vunpack.c.l.b16 %v1605
    %v1750 = vunpack.c.h.b16 %v1605
    %v1751 = vunpack.c.l.b16 %v1606
    %v1752 = vunpack.c.h.b16 %v1606
    %v1753 = vunpack.c.l.b16 %v1607
    %v1754 = vunpack.c.h.b16 %v1607
    %v1755 = vunpack.c.l.b16 %v1608
    %v1756 = vunpack.c.h.b16 %v1608
    %v1757 = vunpack.c.l.b16 %v1609
    %v1758 = vunpack.c.h.b16 %v1609
    %v1759 = vunpack.c.l.b16 %v1610
    %v1760 = vunpack.c.h.b16 %v1610
    %v1761 = vunpack.c.l.b16 %v1611
    %v1762 = vunpack.c.h.b16 %v1611
    %v1763 = vunpack.c.l.b16 %v1612
    %v1764 = vunpack.c.h.b16 %v1612
    %v1765 = vunpack.c.l.b16 %v1613
    %v1766 = vunpack.c.h.b16 %v1613
    %v1767 = vunpack.c.l.b16 %v1614
    %v1768 = vunpack.c.h.b16 %v1614
    %v1769 = vunpack.c.l.b16 %v1615
    %v1770 = vunpack.c.h.b16 %v1615
    %v1771 = vunpack.c.l.b16 %v1616
    %v1772 = vunpack.c.h.b16 %v1616
    %v1773 = vunpack.c.l.b16 %v1617
    %v1774 = vunpack.c.h.b16 %v1617
    %v1775 = vunpack.c.l.b16 %v1618
    %v1776 = vunpack.c.h.b16 %v1618
    %v1777 = vunpack.c.l.b16 %v1619
    %v1778 = vunpack.c.h.b16 %v1619
    %v1779 = vunpack.c.l.b16 %v1620
    %v1780 = vunpack.c.h.b16 %v1620
    %v1781 = vunpack.c.l.b16 %v1621
    %v1782 = vunpack.c.h.b16 %v1621
    %v1783 = vunpack.c.l.b16 %v1622
    %v1784 = vunpack.c.h.b16 %v1622
    %v1785 = vunpack.c.l.b16 %v1623
    %v1786 = vunpack.c.h.b16 %v1623
    %v1787 = vunpack.c.l.b16 %v1624
    %v1788 = vunpack.c.h.b16 %v1624
    %v1789 = vunpack.c.l.b16 %v1625
    %v1790 = vunpack.c.h.b16 %v1625
    %v1791 = vunpack.c.l.b16 %v1626
    %v1792 = vunpack.c.h.b16 %v1626
    %v1793 = vunpack.c.l.b16 %v1627
    %v1794 = vunpack.c.h.b16 %v1627
    %v1795 = vunpack.c.l.b16 %v1628
    %v1796 = vunpack.c.h.b16 %v1628
    %v1797 = vunpack.c.l.b16 %v1629
    %v1798 = vunpack.c.h.b16 %v1629
    %v1799 = vunpack.c.l.b16 %v1630
    %v1800 = vunpack.c.h.b16 %v1630
    %v1801 = vunpack.c.l.b16 %v1631
    %v1802 = vunpack.c.h.b16 %v1631
    %v1803 = vunpack.c.l.b16 %v1632
    %v1804 = vunpack.c.h.b16 %v1632
    %v1805 = vunpack.c.l.b16 %v1633
    %v1806 = vunpack.c.h.b16 %v1633
    %v1807 = vunpack.c.l.b16 %v1634
    %v1808 = vunpack.c.h.b16 %v1634
    %v1809 = vunpack.c.l.b16 %v1635
    %v1810 = vunpack.c.h.b16 %v1635
    %v1811 = vunpack.c.l.b16 %v1636
    %v1812 = vunpack.c.h.b16 %v1636
    %v1813 = vunpack.c.l.b16 %v1637
    %v1814 = vunpack.c.h.b16 %v1637
    %v1815 = vunpack.c.l.b16 %v1638
    %v1816 = vunpack.c.h.b16 %v1638
    %v1817 = vunpack.c.l.b16 %v1639
    %v1818 = vunpack.c.h.b16 %v1639
    %v1819 = vunpack.c.l.b16 %v1640
    %v1820 = vunpack.c.h.b16 %v1640
    %v1821 = vunpack.c.l.b16 %v1641
    %v1822 = vunpack.c.h.b16 %v1641
    %v1823 = vunpack.c.l.b16 %v1642
    %v1824 = vunpack.c.h.b16 %v1642
    %v1825 = vunpack.c.l.b16 %v1643
    %v1826 = vunpack.c.h.b16 %v1643
    %v1827 = vunpack.c.l.b16 %v1644
    %v1828 = vunpack.c.h.b16 %v1644
    %v1829 = vunpack.c.l.b16 %v1645
    %v1830 = vunpack.c.h.b16 %v1645
    %v1831 = vunpack.c.l.b16 %v1646
    %v1832 = vunpack.c.h.b16 %v1646
    %v1833 = vunpack.c.l.b16 %v1647
    %v1834 = vunpack.c.h.b16 %v1647
    %v1835 = vunpack.c.l.b16 %v1648
    %v1836 = vunpack.c.h.b16 %v1648
    %v1837 = vunpack.c.l.b16 %v1649
    %v1838 = vunpack.c.h.b16 %v1649
    %v1839 = vunpack.c.l.b16 %v1650
    %v1840 = vunpack.c.h.b16 %v1650
    %v1841 = vunpack.c.l.b16 %v1651
    %v1842 = vunpack.c.h.b16 %v1651
    %v1843 = vunpack.c.l.b16 %v1652
    %v1844 = vunpack.c.h.b16 %v1652
    %v1845 = vpack.c.b16 %v1719, %v1717
    %v1846 = vpack.c.b16 %v1720, %v1718
    %v1847 = vpack.c.b16 %v1723, %v1721
    %v1848 = vpack.c.b16 %v1724, %v1722
    %v1849 = vpack.c.b16 %v1727, %v1725
    %v1850 = vpack.c.b16 %v1728, %v1726
    %v1851 = vpack.c.b16 %v1731, %v1729
    %v1852 = vpack.c.b16 %v1732, %v1730
    %v1853 = vpack.c.b16 %v1735, %v1733
    %v1854 = vpack.c.b16 %v1736, %v1734
    %v1855 = vpack.c.b16 %v1739, %v1737
    %v1856 = vpack.c.b16 %v1740, %v1738
    %v1857 = vpack.c.b16 %v1743, %v1741
    %v1858 = vpack.c.b16 %v1744, %v1742
    %v1859 = vpack.c.b16 %v1747, %v1745
    %v1860 = vpack.c.b16 %v1748, %v1746
    %v1861 = vpack.c.b16 %v1751, %v1749
    %v1862 = vpack.c.b16 %v1752, %v1750
    %v1863 = vpack.c.b16 %v1755, %v1753
    %v1864 = vpack.c.b16 %v1756, %v1754
    %v1865 = vpack.c.b16 %v1759, %v1757
    %v1866 = vpack.c.b16 %v1760, %v1758
    %v1867 = vpack.c.b16 %v1763, %v1761
    %v1868 = vpack.c.b16 %v1764, %v1762
    %v1869 = vpack.c.b16 %v1767, %v1765
    %v1870 = vpack.c.b16 %v1768, %v1766
    %v1871 = vpack.c.b16 %v1771, %v1769
    %v1872 = vpack.c.b16 %v1772, %v1770
    %v1873 = vpack.c.b16 %v1775, %v1773
    %v1874 = vpack.c.b16 %v1776, %v1774
    %v1875 = vpack.c.b16 %v1779, %v1777
    %v1876 = vpack.c.b16 %v1780, %v1778
    %v1877 = vpack.c.b16 %v1783, %v1781
    %v1878 = vpack.c.b16 %v1784, %v1782
    %v1879 = vpack.c.b16 %v1787, %v1785
    %v1880 = vpack.c.b16 %v1788, %v1786
    %v1881 = vpack.c.b16 %v1791, %v1789
    %v1882 = vpack.c.b16 %v1792, %v1790
    %v1883 = vpack.c.b16 %v1795, %v1793
    %v1884 = vpack.c.b16 %v1796, %v1794
    %v1885 = vpack.c.b16 %v1799, %v1797
    %v1886 = vpack.c.b16 %v1800, %v1798
    %v1887 = vpack.c.b16 %v1803, %v1801
    %v1888 = vpack.c.b16 %v1804, %v1802
    %v1889 = vpack.c.b16 %v1807, %v1805
    %v1890 = vpack.c.b16 %v1808, %v1806
    %v1891 = vpack.c.b16 %v1811, %v1809
    %v1892 = vpack.c.b16 %v1812, %v1810
    %v1893 = vpack.c.b16 %v1815, %v1813
    %v1894 = vpack.c.b16 %v1816, %v1814
    %v1895 = vpack.c.b16 %v1819, %v1817
    %v1896 = vpack.c.b16 %v1820, %v1818
    %v1897 = vpack.c.b16 %v1823, %v1821
    %v1898 = vpack.c.b16 %v1824, %v1822
    %v1899 = vpack.c.b16 %v1827, %v1825
    %v1900 = vpack.c.b16 %v1828, %v1826
    %v1901 = vpack.c.b16 %v1831, %v1829
    %v1902 = vpack.c.b16 %v1832, %v1830
    %v1903 = vpack.c.b16 %v1835, %v1833
    %v1904 = vpack.c.b16 %v1836, %v1834
    %v1905 = vpack.c.b16 %v1839, %v1837
    %v1906 = vpack.c.b16 %v1840, %v1838
    %v1907 = vpack.c.b16 %v1843, %v1841
    %v1908 = vpack.c.b16 %v1844, %v1842
    %1973 = vmatprep.subr.bf16.mxu0 %v1860
    %1974 = vmatpush1.bf16.msra.mxu0 %v1859
    %1975 = vmatprep.subr.bf16.mxu0 %v1858
    %1976 = vmatpush1.bf16.msra.mxu0 %v1857
    %1977 = vmatprep.subr.bf16.mxu0 %v1856
    %1978 = vmatpush1.bf16.msra.mxu0 %v1855
    %1979 = vmatprep.subr.bf16.mxu0 %v1854
    %1980 = vmatpush1.bf16.msra.mxu0 %v1853
    %1981 = vmatprep.subr.bf16.mxu0 %v1852
    %1982 = vmatpush1.bf16.msra.mxu0 %v1851
    %1983 = vmatprep.subr.bf16.mxu0 %v1850
    %1984 = vmatpush1.bf16.msra.mxu0 %v1849
    %1985 = vmatprep.subr.bf16.mxu0 %v1848
    %1986 = vmatpush1.bf16.msra.mxu0 %v1847
    %1987 = vmatprep.subr.bf16.mxu0 %v1846
    %1988 = vmatpush1.bf16.msra.mxu0 %v1845
    %1989 = vmatprep.subr.bf16.mxu0 %v1876
    %1990 = vmatpush2.bf16.msra.mxu0 %v1875
    %1991 = vmatprep.subr.bf16.mxu0 %v1874
    %1992 = vmatpush2.bf16.msra.mxu0 %v1873
    %1993 = vmatprep.subr.bf16.mxu0 %v1872
    %1994 = vmatpush2.bf16.msra.mxu0 %v1871
    %1995 = vmatprep.subr.bf16.mxu0 %v1870
    %1996 = vmatpush2.bf16.msra.mxu0 %v1869
    %1997 = vmatprep.subr.bf16.mxu0 %v1868
    %1998 = vmatpush2.bf16.msra.mxu0 %v1867
    %1999 = vmatprep.subr.bf16.mxu0 %v1866
    %2000 = vmatpush2.bf16.msra.mxu0 %v1865
    %2001 = vmatprep.subr.bf16.mxu0 %v1864
    %2002 = vmatpush2.bf16.msra.mxu0 %v1863
    %2003 = vmatprep.subr.bf16.mxu0 %v1862
    %2004 = vmatpush2.bf16.msra.mxu0 %v1861
    %2005 = vmatprep.mubr.bf16.mxu0 %v1120
    %2006 = vmatmul.mubr.bf16.gmra.mxu0 %v1119
    %v2007 = vpop.f32.mrf.mxu0
    %v2008 = vadd.f32 0.0, %v2007
    %v2009 = vpop.f32.mrf.mxu0
    %v2010 = vadd.f32 0.0, %v2009
    %v2011 = vpop.f32.mrf.mxu0
    %v2012 = vpop.f32.mrf.mxu0
    %2013 = vdwg.mxu0
    %2014 = vmatprep.subr.bf16.mxu0 %v1892
    %2015 = vmatpush1.bf16.msra.mxu0 %v1891
    %2016 = vmatprep.subr.bf16.mxu0 %v1890
    %2017 = vmatpush1.bf16.msra.mxu0 %v1889
    %2018 = vmatprep.subr.bf16.mxu0 %v1888
    %2019 = vmatpush1.bf16.msra.mxu0 %v1887
    %2020 = vmatprep.subr.bf16.mxu0 %v1886
    %2021 = vmatpush1.bf16.msra.mxu0 %v1885
    %2022 = vmatprep.subr.bf16.mxu0 %v1884
    %2023 = vmatpush1.bf16.msra.mxu0 %v1883
    %2024 = vmatprep.subr.bf16.mxu0 %v1882
    %2025 = vmatpush1.bf16.msra.mxu0 %v1881
    %2026 = vmatprep.subr.bf16.mxu0 %v1880
    %2027 = vmatpush1.bf16.msra.mxu0 %v1879
    %2028 = vmatprep.subr.bf16.mxu0 %v1878
    %2029 = vmatpush1.bf16.msra.mxu0 %v1877
    %2030 = vmatprep.subr.bf16.mxu0 %v1908
    %2031 = vmatpush2.bf16.msra.mxu0 %v1907
    %2032 = vmatprep.subr.bf16.mxu0 %v1906
    %2033 = vmatpush2.bf16.msra.mxu0 %v1905
    %2034 = vmatprep.subr.bf16.mxu0 %v1904
    %2035 = vmatpush2.bf16.msra.mxu0 %v1903
    %2036 = vmatprep.subr.bf16.mxu0 %v1902
    %2037 = vmatpush2.bf16.msra.mxu0 %v1901
    %2038 = vmatprep.subr.bf16.mxu0 %v1900
    %2039 = vmatpush2.bf16.msra.mxu0 %v1899
    %2040 = vmatprep.subr.bf16.mxu0 %v1898
    %2041 = vmatpush2.bf16.msra.mxu0 %v1897
    %2042 = vmatprep.subr.bf16.mxu0 %v1896
    %2043 = vmatpush2.bf16.msra.mxu0 %v1895
    %2044 = vmatprep.subr.bf16.mxu0 %v1894
    %2045 = vmatpush2.bf16.msra.mxu0 %v1893
    %2046 = vmatprep.mubr.bf16.mxu0 %v1588
    %2047 = vmatmul.mubr.bf16.gmra.mxu0 %v1587
    %v2048 = vpop.f32.mrf.mxu0
    %v2049 = vadd.f32 %v2008, %v2048
    %v2050 = vpop.f32.mrf.mxu0
    %v2051 = vadd.f32 %v2010, %v2050
    %v2052 = vpop.f32.mrf.mxu0
    %v2053 = vpop.f32.mrf.mxu0
    %2054 = vdwg.mxu0
    %v2055 = vrot.slane %v1581, 4
    %v2056 = vadd.f32 %v1581, %v2055
    %v2057 = vrot.slane %v2056, 2
    %v2058 = vadd.f32 %v2056, %v2057
    %v2059 = vrot.slane %v2058, 1
    %v2060 = vadd.f32 %v2058, %v2059
    %v2061 = vrot.slane %v1583, 4
    %v2062 = vadd.f32 %v1583, %v2061
    %v2063 = vrot.slane %v2062, 2
    %v2064 = vadd.f32 %v2062, %v2063
    %v2065 = vrot.slane %v2064, 1
    %v2066 = vadd.f32 %v2064, %v2065
    %v2067 = vmul.f32 %v1581, %v1581
    %v2068 = vmul.f32 %v1583, %v1583
    %v2069 = vrot.slane %v2067, 4
    %v2070 = vadd.f32 %v2067, %v2069
    %v2071 = vrot.slane %v2070, 2
    %v2072 = vadd.f32 %v2070, %v2071
    %v2073 = vrot.slane %v2072, 1
    %v2074 = vadd.f32 %v2072, %v2073
    %v2075 = vrot.slane %v2068, 4
    %v2076 = vadd.f32 %v2068, %v2075
    %v2077 = vrot.slane %v2076, 2
    %v2078 = vadd.f32 %v2076, %v2077
    %v2079 = vrot.slane %v2078, 1
    %v2080 = vadd.f32 %v2078, %v2079
    %v2081 = vrot.slane %v2049, 4
    %v2082 = vadd.f32 %v2049, %v2081
    %v2083 = vrot.slane %v2082, 2
    %v2084 = vadd.f32 %v2082, %v2083
    %v2085 = vrot.slane %v2084, 1
    %v2086 = vadd.f32 %v2084, %v2085
    %v2087 = vrot.slane %v2051, 4
    %v2088 = vadd.f32 %v2051, %v2087
    %v2089 = vrot.slane %v2088, 2
    %v2090 = vadd.f32 %v2088, %v2089
    %v2091 = vrot.slane %v2090, 1
    %v2092 = vadd.f32 %v2090, %v2091
    %v2093 = vmul.f32 %v2049, %v2049
    %v2094 = vmul.f32 %v2051, %v2051
    %v2095 = vrot.slane %v2093, 4
    %v2096 = vadd.f32 %v2093, %v2095
    %v2097 = vrot.slane %v2096, 2
    %v2098 = vadd.f32 %v2096, %v2097
    %v2099 = vrot.slane %v2098, 1
    %v2100 = vadd.f32 %v2098, %v2099
    %v2101 = vrot.slane %v2094, 4
    %v2102 = vadd.f32 %v2094, %v2101
    %v2103 = vrot.slane %v2102, 2
    %v2104 = vadd.f32 %v2102, %v2103
    %v2105 = vrot.slane %v2104, 1
    %v2106 = vadd.f32 %v2104, %v2105
    %v2107 = vadd.f32 %v2060, %v2086
    %v2108 = vadd.f32 %v2066, %v2092
    %v2109 = vadd.f32 %v2074, %v2100
    %v2110 = vadd.f32 %v2080, %v2106
    %2112 = vrot.lane.b32.xlu0 %v2107, 96
    %v2113 = vpop.permute.xlu0 %2112
    %v2115 = vadd.f32 %v2107, %v2113
    %2117 = vrot.lane.b32.xlu0 %v2109, 96
    %v2118 = vpop.permute.xlu0 %2117
    %v2120 = vadd.f32 %v2109, %v2118
    %2121 = vrot.lane.b32.xlu0 %v2107, 64
    %v2122 = vpop.permute.xlu0 %2121
    %v2124 = vadd.f32 %v2115, %v2122
    %2125 = vrot.lane.b32.xlu0 %v2109, 64
    %v2126 = vpop.permute.xlu0 %2125
    %v2128 = vadd.f32 %v2120, %v2126
    %2129 = vrot.lane.b32.xlu0 %v2107, 32
    %v2130 = vpop.permute.xlu0 %2129
    %v2132 = vadd.f32 %v2124, %v2130
    %2133 = vrot.lane.b32.xlu0 %v2109, 32
    %v2134 = vpop.permute.xlu0 %2133
    %v2136 = vadd.f32 %v2128, %v2134
    %v2137 = vadd.f32 %v2132, %v2108
    %v2138 = vadd.f32 %v2136, %v2110
    %2140 = vrot.lane.b32.xlu0 %v2108, 96
    %v2141 = vpop.permute.xlu0 %2140
    %v2143 = vadd.f32 %v2137, %v2141
    %2145 = vrot.lane.b32.xlu0 %v2110, 96
    %v2146 = vpop.permute.xlu0 %2145
    %v2148 = vadd.f32 %v2138, %v2146
    %2149 = vrot.lane.b32.xlu0 %v2108, 64
    %v2150 = vpop.permute.xlu0 %2149
    %v2152 = vadd.f32 %v2143, %v2150
    %2153 = vrot.lane.b32.xlu0 %v2110, 64
    %v2154 = vpop.permute.xlu0 %2153
    %v2156 = vadd.f32 %v2148, %v2154
    %2157 = vrot.lane.b32.xlu0 %v2108, 32
    %v2158 = vpop.permute.xlu0 %2157
    %v2160 = vadd.f32 %v2152, %v2158
    %2161 = vrot.lane.b32.xlu0 %v2110, 32
    %v2162 = vpop.permute.xlu0 %2161
    %v2164 = vadd.f32 %v2156, %v2162
    %v2165 = vmul.f32 %v2160, 0.0078125
    %v2166 = vmul.f32 %v2164, 0.0078125
    %v2167 = vmul.f32 %v2165, %v2165
    %v2168 = vsub.f32 %v2166, %v2167
    %v2169 = vadd.f32 %v2168, 1e-05
    %v2170 = vrsqrt.pop %v2169
    %v2171 = vmul.f32 %v101, %v2170
    %v2172 = vmul.f32 %v2165, %v2171
    %v2173 = vsub.f32 %v102, %v2172
    %2175 = vrot.lane.b32.xlu0 %v2171, 32
    %v2176 = vpop.permute.xlu0 %2175
    %2178 = vrot.lane.b32.xlu0 %v2171, 64
    %v2179 = vpop.permute.xlu0 %2178
    %2181 = vrot.lane.b32.xlu0 %v2171, 96
    %v2182 = vpop.permute.xlu0 %2181
    %v2184 = vsel %vm672, %v2171, %v2176
    %v2185 = vsel %vm674, %v2184, %v2179
    %v2186 = vsel %vm676, %v2185, %v2182
    %2188 = vrot.lane.b32.xlu0 %v2173, 32
    %v2189 = vpop.permute.xlu0 %2188
    %2191 = vrot.lane.b32.xlu0 %v2173, 64
    %v2192 = vpop.permute.xlu0 %2191
    %2194 = vrot.lane.b32.xlu0 %v2173, 96
    %v2195 = vpop.permute.xlu0 %2194
    %v2197 = vsel %vm672, %v2173, %v2189
    %v2198 = vsel %vm674, %v2197, %v2192
    %v2199 = vsel %vm676, %v2198, %v2195
    %v2200 = vlaneseq
    %v2201 = vshrl.u32 %v2200, 7
    %v2202 = vsub.s32 0, %v2201
    %v2203 = vrot.slane %v2186, %v2202
    %v2204 = vmul.f32 %v1581, %v2203
    %v2205 = vmul.f32 %v1583, %v2203
    %v2206 = vlaneseq
    %v2207 = vshrl.u32 %v2206, 7
    %v2208 = vsub.s32 0, %v2207
    %v2209 = vrot.slane %v2199, %v2208
    %v2210 = vadd.f32 %v2204, %v2209
    %v2211 = vadd.f32 %v2205, %v2209
    %v2212 = vmax.f32 %v2210, 0.0
    %v2213 = vmax.f32 %v2211, 0.0
    %v2214 = vmul.f32 %v2049, %v2203
    %v2215 = vmul.f32 %v2051, %v2203
    %v2216 = vadd.f32 %v2214, %v2209
    %v2217 = vadd.f32 %v2215, %v2209
    %v2218 = vmax.f32 %v2216, 0.0
    %v2219 = vmax.f32 %v2217, 0.0
    %v2222 = vrot.slane %v2218, 7
    %v2223 = vrot.slane %v2219, 7
    %v2228 = vrot.slane %v2212, 7
    %v2229 = vrot.slane %v2213, 7
    %v2232 = vrot.slane %v2218, 6
    %v2233 = vrot.slane %v2219, 6
    %v2236 = vrot.slane %v2212, 6
    %v2237 = vrot.slane %v2213, 6
    %v2240 = vrot.slane %v2218, 5
    %v2241 = vrot.slane %v2219, 5
    %v2244 = vrot.slane %v2212, 5
    %v2245 = vrot.slane %v2213, 5
    %v2248 = vrot.slane %v2218, 4
    %v2249 = vrot.slane %v2219, 4
    %v2252 = vrot.slane %v2212, 4
    %v2253 = vrot.slane %v2213, 4
    %v2256 = vrot.slane %v2218, 3
    %v2257 = vrot.slane %v2219, 3
    %v2260 = vrot.slane %v2212, 3
    %v2261 = vrot.slane %v2213, 3
    %v2264 = vrot.slane %v2218, 2
    %v2265 = vrot.slane %v2219, 2
    %v2268 = vrot.slane %v2212, 2
    %v2269 = vrot.slane %v2213, 2
    %v2272 = vrot.slane %v2218, 1
    %v2273 = vrot.slane %v2219, 1
    %v2276 = vrot.slane %v2212, 1
    %v2277 = vrot.slane %v2213, 1
    %v2280 = vsel %vm1076, %v2212, %v2222
    %v2281 = vsel %vm1076, %v2213, %v2223
    %v2282 = vsel %vm267, %v2280, %v2228
    %v2283 = vsel %vm267, %v2281, %v2229
    %v2284 = vsel %vm1081, %v2282, %v2232
    %v2285 = vsel %vm1081, %v2283, %v2233
    %v2286 = vsel %vm1084, %v2284, %v2236
    %v2287 = vsel %vm1084, %v2285, %v2237
    %v2288 = vsel %vm388, %v2286, %v2240
    %v2289 = vsel %vm388, %v2287, %v2241
    %v2290 = vsel %vm1089, %v2288, %v2244
    %v2291 = vsel %vm1089, %v2289, %v2245
    %v2292 = vsel %vm1092, %v2290, %v2248
    %v2293 = vsel %vm1092, %v2291, %v2249
    %v2294 = vsel %vm1076, %v2252, %v2256
    %v2295 = vsel %vm1076, %v2253, %v2257
    %v2296 = vsel %vm267, %v2294, %v2260
    %v2297 = vsel %vm267, %v2295, %v2261
    %v2298 = vsel %vm1081, %v2296, %v2264
    %v2299 = vsel %vm1081, %v2297, %v2265
    %v2300 = vsel %vm1084, %v2298, %v2268
    %v2301 = vsel %vm1084, %v2299, %v2269
    %v2302 = vsel %vm388, %v2300, %v2272
    %v2303 = vsel %vm388, %v2301, %v2273
    %v2304 = vsel %vm1089, %v2302, %v2276
    %v2305 = vsel %vm1089, %v2303, %v2277
    %v2306 = vsel %vm1092, %v2304, %v2218
    %v2307 = vsel %vm1092, %v2305, %v2219
    %v2310 = vrot.slane %v2292, 7
    %v2311 = vrot.slane %v2293, 7
    %v2316 = vrot.slane %v2306, 7
    %v2317 = vrot.slane %v2307, 7
    %v2320 = vsel %vm1076, 0.0, %v2310
    %v2321 = vsel %vm1076, 0.0, %v2311
    %v2322 = vsel %vm1076, 0.0, %v2316
    %v2323 = vsel %vm1076, 0.0, %v2317
    %v2324 = vrot.slane %v2292, 1
    %v2325 = vrot.slane %v2293, 1
    %v2328 = vrot.slane %v2306, 1
    %v2329 = vrot.slane %v2307, 1
    %v2332 = vsel %vm1092, %v2324, 0.0
    %v2333 = vsel %vm1092, %v2325, 0.0
    %v2334 = vsel %vm1092, %v2328, 0.0
    %v2335 = vsel %vm1092, %v2329, 0.0
    %v2336 = vpack.c.bf16 %v2322, %v2320
    %v2337 = vpack.c.bf16 %v2323, %v2321
    %v2338 = vpack.c.bf16 %v2306, %v2292
    %v2339 = vpack.c.bf16 %v2307, %v2293
    %v2340 = vld [vmem:[#allocation6] sm:$0xff]
    %v2341 = vld [vmem:[#allocation6 + $0x8] sm:$0xff]
    %v2342 = vld [vmem:[#allocation6 + $0x10] sm:$0xff]
    %v2343 = vld [vmem:[#allocation6 + $0x18] sm:$0xff]
    %v2344 = vld [vmem:[#allocation6 + $0x20] sm:$0xff]
    %v2345 = vld [vmem:[#allocation6 + $0x28] sm:$0xff]
    %v2346 = vld [vmem:[#allocation6 + $0x30] sm:$0xff]
    %v2347 = vld [vmem:[#allocation6 + $0x38] sm:$0xff]
    %v2348 = vld [vmem:[#allocation6 + $0x40] sm:$0xff]
    %v2349 = vld [vmem:[#allocation6 + $0x48] sm:$0xff]
    %v2350 = vld [vmem:[#allocation6 + $0x50] sm:$0xff]
    %v2351 = vld [vmem:[#allocation6 + $0x58] sm:$0xff]
    %v2352 = vld [vmem:[#allocation6 + $0x60] sm:$0xff]
    %v2353 = vld [vmem:[#allocation6 + $0x68] sm:$0xff]
    %v2354 = vld [vmem:[#allocation6 + $0x70] sm:$0xff]
    %v2355 = vld [vmem:[#allocation6 + $0x78] sm:$0xff]
    %v2356 = vld [vmem:[#allocation6 + $0x80] sm:$0xff]
    %v2357 = vld [vmem:[#allocation6 + $0x88] sm:$0xff]
    %v2358 = vld [vmem:[#allocation6 + $0x90] sm:$0xff]
    %v2359 = vld [vmem:[#allocation6 + $0x98] sm:$0xff]
    %v2360 = vld [vmem:[#allocation6 + $0xa0] sm:$0xff]
    %v2361 = vld [vmem:[#allocation6 + $0xa8] sm:$0xff]
    %v2362 = vld [vmem:[#allocation6 + $0xb0] sm:$0xff]
    %v2363 = vld [vmem:[#allocation6 + $0xb8] sm:$0xff]
    %v2364 = vld [vmem:[#allocation6 + $0xc0] sm:$0xff]
    %v2365 = vld [vmem:[#allocation6 + $0xc8] sm:$0xff]
    %v2366 = vld [vmem:[#allocation6 + $0xd0] sm:$0xff]
    %v2367 = vld [vmem:[#allocation6 + $0xd8] sm:$0xff]
    %v2368 = vld [vmem:[#allocation6 + $0xe0] sm:$0xff]
    %v2369 = vld [vmem:[#allocation6 + $0xe8] sm:$0xff]
    %v2370 = vld [vmem:[#allocation6 + $0xf0] sm:$0xff]
    %v2371 = vld [vmem:[#allocation6 + $0xf8] sm:$0xff]
    %v2372 = vld [vmem:[#allocation6 + $0x100] sm:$0xff]
    %v2373 = vld [vmem:[#allocation6 + $0x108] sm:$0xff]
    %v2374 = vld [vmem:[#allocation6 + $0x110] sm:$0xff]
    %v2375 = vld [vmem:[#allocation6 + $0x118] sm:$0xff]
    %v2376 = vld [vmem:[#allocation6 + $0x120] sm:$0xff]
    %v2377 = vld [vmem:[#allocation6 + $0x128] sm:$0xff]
    %v2378 = vld [vmem:[#allocation6 + $0x130] sm:$0xff]
    %v2379 = vld [vmem:[#allocation6 + $0x138] sm:$0xff]
    %v2380 = vld [vmem:[#allocation6 + $0x140] sm:$0xff]
    %v2381 = vld [vmem:[#allocation6 + $0x148] sm:$0xff]
    %v2382 = vld [vmem:[#allocation6 + $0x150] sm:$0xff]
    %v2383 = vld [vmem:[#allocation6 + $0x158] sm:$0xff]
    %v2384 = vld [vmem:[#allocation6 + $0x160] sm:$0xff]
    %v2385 = vld [vmem:[#allocation6 + $0x168] sm:$0xff]
    %v2386 = vld [vmem:[#allocation6 + $0x170] sm:$0xff]
    %v2387 = vld [vmem:[#allocation6 + $0x178] sm:$0xff]
    %v2388 = vld [vmem:[#allocation6 + $0x180] sm:$0xff]
    %v2389 = vld [vmem:[#allocation6 + $0x188] sm:$0xff]
    %v2390 = vld [vmem:[#allocation6 + $0x190] sm:$0xff]
    %v2391 = vld [vmem:[#allocation6 + $0x198] sm:$0xff]
    %v2392 = vld [vmem:[#allocation6 + $0x1a0] sm:$0xff]
    %v2393 = vld [vmem:[#allocation6 + $0x1a8] sm:$0xff]
    %v2394 = vld [vmem:[#allocation6 + $0x1b0] sm:$0xff]
    %v2395 = vld [vmem:[#allocation6 + $0x1b8] sm:$0xff]
    %v2396 = vld [vmem:[#allocation6 + $0x1c0] sm:$0xff]
    %v2397 = vld [vmem:[#allocation6 + $0x1c8] sm:$0xff]
    %v2398 = vld [vmem:[#allocation6 + $0x1d0] sm:$0xff]
    %v2399 = vld [vmem:[#allocation6 + $0x1d8] sm:$0xff]
    %v2400 = vld [vmem:[#allocation6 + $0x1e0] sm:$0xff]
    %v2401 = vld [vmem:[#allocation6 + $0x1e8] sm:$0xff]
    %v2402 = vld [vmem:[#allocation6 + $0x1f0] sm:$0xff]
    %v2403 = vld [vmem:[#allocation6 + $0x1f8] sm:$0xff]
    %v2468 = vunpack.c.l.b16 %v2340
    %v2469 = vunpack.c.h.b16 %v2340
    %v2470 = vunpack.c.l.b16 %v2341
    %v2471 = vunpack.c.h.b16 %v2341
    %v2472 = vunpack.c.l.b16 %v2342
    %v2473 = vunpack.c.h.b16 %v2342
    %v2474 = vunpack.c.l.b16 %v2343
    %v2475 = vunpack.c.h.b16 %v2343
    %v2476 = vunpack.c.l.b16 %v2344
    %v2477 = vunpack.c.h.b16 %v2344
    %v2478 = vunpack.c.l.b16 %v2345
    %v2479 = vunpack.c.h.b16 %v2345
    %v2480 = vunpack.c.l.b16 %v2346
    %v2481 = vunpack.c.h.b16 %v2346
    %v2482 = vunpack.c.l.b16 %v2347
    %v2483 = vunpack.c.h.b16 %v2347
    %v2484 = vunpack.c.l.b16 %v2348
    %v2485 = vunpack.c.h.b16 %v2348
    %v2486 = vunpack.c.l.b16 %v2349
    %v2487 = vunpack.c.h.b16 %v2349
    %v2488 = vunpack.c.l.b16 %v2350
    %v2489 = vunpack.c.h.b16 %v2350
    %v2490 = vunpack.c.l.b16 %v2351
    %v2491 = vunpack.c.h.b16 %v2351
    %v2492 = vunpack.c.l.b16 %v2352
    %v2493 = vunpack.c.h.b16 %v2352
    %v2494 = vunpack.c.l.b16 %v2353
    %v2495 = vunpack.c.h.b16 %v2353
    %v2496 = vunpack.c.l.b16 %v2354
    %v2497 = vunpack.c.h.b16 %v2354
    %v2498 = vunpack.c.l.b16 %v2355
    %v2499 = vunpack.c.h.b16 %v2355
    %v2500 = vunpack.c.l.b16 %v2356
    %v2501 = vunpack.c.h.b16 %v2356
    %v2502 = vunpack.c.l.b16 %v2357
    %v2503 = vunpack.c.h.b16 %v2357
    %v2504 = vunpack.c.l.b16 %v2358
    %v2505 = vunpack.c.h.b16 %v2358
    %v2506 = vunpack.c.l.b16 %v2359
    %v2507 = vunpack.c.h.b16 %v2359
    %v2508 = vunpack.c.l.b16 %v2360
    %v2509 = vunpack.c.h.b16 %v2360
    %v2510 = vunpack.c.l.b16 %v2361
    %v2511 = vunpack.c.h.b16 %v2361
    %v2512 = vunpack.c.l.b16 %v2362
    %v2513 = vunpack.c.h.b16 %v2362
    %v2514 = vunpack.c.l.b16 %v2363
    %v2515 = vunpack.c.h.b16 %v2363
    %v2516 = vunpack.c.l.b16 %v2364
    %v2517 = vunpack.c.h.b16 %v2364
    %v2518 = vunpack.c.l.b16 %v2365
    %v2519 = vunpack.c.h.b16 %v2365
    %v2520 = vunpack.c.l.b16 %v2366
    %v2521 = vunpack.c.h.b16 %v2366
    %v2522 = vunpack.c.l.b16 %v2367
    %v2523 = vunpack.c.h.b16 %v2367
    %v2524 = vunpack.c.l.b16 %v2368
    %v2525 = vunpack.c.h.b16 %v2368
    %v2526 = vunpack.c.l.b16 %v2369
    %v2527 = vunpack.c.h.b16 %v2369
    %v2528 = vunpack.c.l.b16 %v2370
    %v2529 = vunpack.c.h.b16 %v2370
    %v2530 = vunpack.c.l.b16 %v2371
    %v2531 = vunpack.c.h.b16 %v2371
    %v2532 = vunpack.c.l.b16 %v2372
    %v2533 = vunpack.c.h.b16 %v2372
    %v2534 = vunpack.c.l.b16 %v2373
    %v2535 = vunpack.c.h.b16 %v2373
    %v2536 = vunpack.c.l.b16 %v2374
    %v2537 = vunpack.c.h.b16 %v2374
    %v2538 = vunpack.c.l.b16 %v2375
    %v2539 = vunpack.c.h.b16 %v2375
    %v2540 = vunpack.c.l.b16 %v2376
    %v2541 = vunpack.c.h.b16 %v2376
    %v2542 = vunpack.c.l.b16 %v2377
    %v2543 = vunpack.c.h.b16 %v2377
    %v2544 = vunpack.c.l.b16 %v2378
    %v2545 = vunpack.c.h.b16 %v2378
    %v2546 = vunpack.c.l.b16 %v2379
    %v2547 = vunpack.c.h.b16 %v2379
    %v2548 = vunpack.c.l.b16 %v2380
    %v2549 = vunpack.c.h.b16 %v2380
    %v2550 = vunpack.c.l.b16 %v2381
    %v2551 = vunpack.c.h.b16 %v2381
    %v2552 = vunpack.c.l.b16 %v2382
    %v2553 = vunpack.c.h.b16 %v2382
    %v2554 = vunpack.c.l.b16 %v2383
    %v2555 = vunpack.c.h.b16 %v2383
    %v2556 = vunpack.c.l.b16 %v2384
    %v2557 = vunpack.c.h.b16 %v2384
    %v2558 = vunpack.c.l.b16 %v2385
    %v2559 = vunpack.c.h.b16 %v2385
    %v2560 = vunpack.c.l.b16 %v2386
    %v2561 = vunpack.c.h.b16 %v2386
    %v2562 = vunpack.c.l.b16 %v2387
    %v2563 = vunpack.c.h.b16 %v2387
    %v2564 = vunpack.c.l.b16 %v2388
    %v2565 = vunpack.c.h.b16 %v2388
    %v2566 = vunpack.c.l.b16 %v2389
    %v2567 = vunpack.c.h.b16 %v2389
    %v2568 = vunpack.c.l.b16 %v2390
    %v2569 = vunpack.c.h.b16 %v2390
    %v2570 = vunpack.c.l.b16 %v2391
    %v2571 = vunpack.c.h.b16 %v2391
    %v2572 = vunpack.c.l.b16 %v2392
    %v2573 = vunpack.c.h.b16 %v2392
    %v2574 = vunpack.c.l.b16 %v2393
    %v2575 = vunpack.c.h.b16 %v2393
    %v2576 = vunpack.c.l.b16 %v2394
    %v2577 = vunpack.c.h.b16 %v2394
    %v2578 = vunpack.c.l.b16 %v2395
    %v2579 = vunpack.c.h.b16 %v2395
    %v2580 = vunpack.c.l.b16 %v2396
    %v2581 = vunpack.c.h.b16 %v2396
    %v2582 = vunpack.c.l.b16 %v2397
    %v2583 = vunpack.c.h.b16 %v2397
    %v2584 = vunpack.c.l.b16 %v2398
    %v2585 = vunpack.c.h.b16 %v2398
    %v2586 = vunpack.c.l.b16 %v2399
    %v2587 = vunpack.c.h.b16 %v2399
    %v2588 = vunpack.c.l.b16 %v2400
    %v2589 = vunpack.c.h.b16 %v2400
    %v2590 = vunpack.c.l.b16 %v2401
    %v2591 = vunpack.c.h.b16 %v2401
    %v2592 = vunpack.c.l.b16 %v2402
    %v2593 = vunpack.c.h.b16 %v2402
    %v2594 = vunpack.c.l.b16 %v2403
    %v2595 = vunpack.c.h.b16 %v2403
    %v2596 = vpack.c.b16 %v2470, %v2468
    %v2597 = vpack.c.b16 %v2471, %v2469
    %v2598 = vpack.c.b16 %v2474, %v2472
    %v2599 = vpack.c.b16 %v2475, %v2473
    %v2600 = vpack.c.b16 %v2478, %v2476
    %v2601 = vpack.c.b16 %v2479, %v2477
    %v2602 = vpack.c.b16 %v2482, %v2480
    %v2603 = vpack.c.b16 %v2483, %v2481
    %v2604 = vpack.c.b16 %v2486, %v2484
    %v2605 = vpack.c.b16 %v2487, %v2485
    %v2606 = vpack.c.b16 %v2490, %v2488
    %v2607 = vpack.c.b16 %v2491, %v2489
    %v2608 = vpack.c.b16 %v2494, %v2492
    %v2609 = vpack.c.b16 %v2495, %v2493
    %v2610 = vpack.c.b16 %v2498, %v2496
    %v2611 = vpack.c.b16 %v2499, %v2497
    %v2612 = vpack.c.b16 %v2502, %v2500
    %v2613 = vpack.c.b16 %v2503, %v2501
    %v2614 = vpack.c.b16 %v2506, %v2504
    %v2615 = vpack.c.b16 %v2507, %v2505
    %v2616 = vpack.c.b16 %v2510, %v2508
    %v2617 = vpack.c.b16 %v2511, %v2509
    %v2618 = vpack.c.b16 %v2514, %v2512
    %v2619 = vpack.c.b16 %v2515, %v2513
    %v2620 = vpack.c.b16 %v2518, %v2516
    %v2621 = vpack.c.b16 %v2519, %v2517
    %v2622 = vpack.c.b16 %v2522, %v2520
    %v2623 = vpack.c.b16 %v2523, %v2521
    %v2624 = vpack.c.b16 %v2526, %v2524
    %v2625 = vpack.c.b16 %v2527, %v2525
    %v2626 = vpack.c.b16 %v2530, %v2528
    %v2627 = vpack.c.b16 %v2531, %v2529
    %v2628 = vpack.c.b16 %v2534, %v2532
    %v2629 = vpack.c.b16 %v2535, %v2533
    %v2630 = vpack.c.b16 %v2538, %v2536
    %v2631 = vpack.c.b16 %v2539, %v2537
    %v2632 = vpack.c.b16 %v2542, %v2540
    %v2633 = vpack.c.b16 %v2543, %v2541
    %v2634 = vpack.c.b16 %v2546, %v2544
    %v2635 = vpack.c.b16 %v2547, %v2545
    %v2636 = vpack.c.b16 %v2550, %v2548
    %v2637 = vpack.c.b16 %v2551, %v2549
    %v2638 = vpack.c.b16 %v2554, %v2552
    %v2639 = vpack.c.b16 %v2555, %v2553
    %v2640 = vpack.c.b16 %v2558, %v2556
    %v2641 = vpack.c.b16 %v2559, %v2557
    %v2642 = vpack.c.b16 %v2562, %v2560
    %v2643 = vpack.c.b16 %v2563, %v2561
    %v2644 = vpack.c.b16 %v2566, %v2564
    %v2645 = vpack.c.b16 %v2567, %v2565
    %v2646 = vpack.c.b16 %v2570, %v2568
    %v2647 = vpack.c.b16 %v2571, %v2569
    %v2648 = vpack.c.b16 %v2574, %v2572
    %v2649 = vpack.c.b16 %v2575, %v2573
    %v2650 = vpack.c.b16 %v2578, %v2576
    %v2651 = vpack.c.b16 %v2579, %v2577
    %v2652 = vpack.c.b16 %v2582, %v2580
    %v2653 = vpack.c.b16 %v2583, %v2581
    %v2654 = vpack.c.b16 %v2586, %v2584
    %v2655 = vpack.c.b16 %v2587, %v2585
    %v2656 = vpack.c.b16 %v2590, %v2588
    %v2657 = vpack.c.b16 %v2591, %v2589
    %v2658 = vpack.c.b16 %v2594, %v2592
    %v2659 = vpack.c.b16 %v2595, %v2593
    %2724 = vmatprep.subr.bf16.mxu0 %v2611
    %2725 = vmatpush1.bf16.msra.mxu0 %v2610
    %2726 = vmatprep.subr.bf16.mxu0 %v2609
    %2727 = vmatpush1.bf16.msra.mxu0 %v2608
    %2728 = vmatprep.subr.bf16.mxu0 %v2607
    %2729 = vmatpush1.bf16.msra.mxu0 %v2606
    %2730 = vmatprep.subr.bf16.mxu0 %v2605
    %2731 = vmatpush1.bf16.msra.mxu0 %v2604
    %2732 = vmatprep.subr.bf16.mxu0 %v2603
    %2733 = vmatpush1.bf16.msra.mxu0 %v2602
    %2734 = vmatprep.subr.bf16.mxu0 %v2601
    %2735 = vmatpush1.bf16.msra.mxu0 %v2600
    %2736 = vmatprep.subr.bf16.mxu0 %v2599
    %2737 = vmatpush1.bf16.msra.mxu0 %v2598
    %2738 = vmatprep.subr.bf16.mxu0 %v2597
    %2739 = vmatpush1.bf16.msra.mxu0 %v2596
    %2740 = vmatprep.subr.bf16.mxu0 %v2627
    %2741 = vmatpush2.bf16.msra.mxu0 %v2626
    %2742 = vmatprep.subr.bf16.mxu0 %v2625
    %2743 = vmatpush2.bf16.msra.mxu0 %v2624
    %2744 = vmatprep.subr.bf16.mxu0 %v2623
    %2745 = vmatpush2.bf16.msra.mxu0 %v2622
    %2746 = vmatprep.subr.bf16.mxu0 %v2621
    %2747 = vmatpush2.bf16.msra.mxu0 %v2620
    %2748 = vmatprep.subr.bf16.mxu0 %v2619
    %2749 = vmatpush2.bf16.msra.mxu0 %v2618
    %2750 = vmatprep.subr.bf16.mxu0 %v2617
    %2751 = vmatpush2.bf16.msra.mxu0 %v2616
    %2752 = vmatprep.subr.bf16.mxu0 %v2615
    %2753 = vmatpush2.bf16.msra.mxu0 %v2614
    %2754 = vmatprep.subr.bf16.mxu0 %v2613
    %2755 = vmatpush2.bf16.msra.mxu0 %v2612
    %2756 = vmatprep.mubr.bf16.mxu0 %v2337
    %2757 = vmatmul.mubr.bf16.gmra.mxu0 %v2336
    %v2758 = vpop.f32.mrf.mxu0
    %v2759 = vadd.f32 0.0, %v2758
    %v2760 = vpop.f32.mrf.mxu0
    %v2761 = vadd.f32 0.0, %v2760
    %v2762 = vpop.f32.mrf.mxu0
    %v2763 = vadd.f32 0.0, %v2762
    %v2764 = vpop.f32.mrf.mxu0
    %v2765 = vadd.f32 0.0, %v2764
    %2766 = vdwg.mxu0
    %2767 = vmatprep.subr.bf16.mxu0 %v2643
    %2768 = vmatpush1.bf16.msra.mxu0 %v2642
    %2769 = vmatprep.subr.bf16.mxu0 %v2641
    %2770 = vmatpush1.bf16.msra.mxu0 %v2640
    %2771 = vmatprep.subr.bf16.mxu0 %v2639
    %2772 = vmatpush1.bf16.msra.mxu0 %v2638
    %2773 = vmatprep.subr.bf16.mxu0 %v2637
    %2774 = vmatpush1.bf16.msra.mxu0 %v2636
    %2775 = vmatprep.subr.bf16.mxu0 %v2635
    %2776 = vmatpush1.bf16.msra.mxu0 %v2634
    %2777 = vmatprep.subr.bf16.mxu0 %v2633
    %2778 = vmatpush1.bf16.msra.mxu0 %v2632
    %2779 = vmatprep.subr.bf16.mxu0 %v2631
    %2780 = vmatpush1.bf16.msra.mxu0 %v2630
    %2781 = vmatprep.subr.bf16.mxu0 %v2629
    %2782 = vmatpush1.bf16.msra.mxu0 %v2628
    %2783 = vmatprep.subr.bf16.mxu0 %v2659
    %2784 = vmatpush2.bf16.msra.mxu0 %v2658
    %2785 = vmatprep.subr.bf16.mxu0 %v2657
    %2786 = vmatpush2.bf16.msra.mxu0 %v2656
    %2787 = vmatprep.subr.bf16.mxu0 %v2655
    %2788 = vmatpush2.bf16.msra.mxu0 %v2654
    %2789 = vmatprep.subr.bf16.mxu0 %v2653
    %2790 = vmatpush2.bf16.msra.mxu0 %v2652
    %2791 = vmatprep.subr.bf16.mxu0 %v2651
    %2792 = vmatpush2.bf16.msra.mxu0 %v2650
    %2793 = vmatprep.subr.bf16.mxu0 %v2649
    %2794 = vmatpush2.bf16.msra.mxu0 %v2648
    %2795 = vmatprep.subr.bf16.mxu0 %v2647
    %2796 = vmatpush2.bf16.msra.mxu0 %v2646
    %2797 = vmatprep.subr.bf16.mxu0 %v2645
    %2798 = vmatpush2.bf16.msra.mxu0 %v2644
    %2799 = vmatprep.mubr.bf16.mxu0 %v2339
    %2800 = vmatmul.mubr.bf16.gmra.mxu0 %v2338
    %v2801 = vpop.f32.mrf.mxu0
    %v2802 = vadd.f32 %v2759, %v2801
    %v2803 = vpop.f32.mrf.mxu0
    %v2804 = vadd.f32 %v2761, %v2803
    %v2805 = vpop.f32.mrf.mxu0
    %v2806 = vadd.f32 %v2763, %v2805
    %v2807 = vpop.f32.mrf.mxu0
    %v2808 = vadd.f32 %v2765, %v2807
    %2809 = vdwg.mxu0
    %v2810 = vpack.c.bf16 %v2334, %v2332
    %v2811 = vpack.c.bf16 %v2335, %v2333
    %v2812 = vld [vmem:[#allocation7] sm:$0xff]
    %v2813 = vld [vmem:[#allocation7 + $0x8] sm:$0xff]
    %v2814 = vld [vmem:[#allocation7 + $0x10] sm:$0xff]
    %v2815 = vld [vmem:[#allocation7 + $0x18] sm:$0xff]
    %v2816 = vld [vmem:[#allocation7 + $0x20] sm:$0xff]
    %v2817 = vld [vmem:[#allocation7 + $0x28] sm:$0xff]
    %v2818 = vld [vmem:[#allocation7 + $0x30] sm:$0xff]
    %v2819 = vld [vmem:[#allocation7 + $0x38] sm:$0xff]
    %v2820 = vld [vmem:[#allocation7 + $0x40] sm:$0xff]
    %v2821 = vld [vmem:[#allocation7 + $0x48] sm:$0xff]
    %v2822 = vld [vmem:[#allocation7 + $0x50] sm:$0xff]
    %v2823 = vld [vmem:[#allocation7 + $0x58] sm:$0xff]
    %v2824 = vld [vmem:[#allocation7 + $0x60] sm:$0xff]
    %v2825 = vld [vmem:[#allocation7 + $0x68] sm:$0xff]
    %v2826 = vld [vmem:[#allocation7 + $0x70] sm:$0xff]
    %v2827 = vld [vmem:[#allocation7 + $0x78] sm:$0xff]
    %v2828 = vld [vmem:[#allocation7 + $0x80] sm:$0xff]
    %v2829 = vld [vmem:[#allocation7 + $0x88] sm:$0xff]
    %v2830 = vld [vmem:[#allocation7 + $0x90] sm:$0xff]
    %v2831 = vld [vmem:[#allocation7 + $0x98] sm:$0xff]
    %v2832 = vld [vmem:[#allocation7 + $0xa0] sm:$0xff]
    %v2833 = vld [vmem:[#allocation7 + $0xa8] sm:$0xff]
    %v2834 = vld [vmem:[#allocation7 + $0xb0] sm:$0xff]
    %v2835 = vld [vmem:[#allocation7 + $0xb8] sm:$0xff]
    %v2836 = vld [vmem:[#allocation7 + $0xc0] sm:$0xff]
    %v2837 = vld [vmem:[#allocation7 + $0xc8] sm:$0xff]
    %v2838 = vld [vmem:[#allocation7 + $0xd0] sm:$0xff]
    %v2839 = vld [vmem:[#allocation7 + $0xd8] sm:$0xff]
    %v2840 = vld [vmem:[#allocation7 + $0xe0] sm:$0xff]
    %v2841 = vld [vmem:[#allocation7 + $0xe8] sm:$0xff]
    %v2842 = vld [vmem:[#allocation7 + $0xf0] sm:$0xff]
    %v2843 = vld [vmem:[#allocation7 + $0xf8] sm:$0xff]
    %v2844 = vld [vmem:[#allocation7 + $0x100] sm:$0xff]
    %v2845 = vld [vmem:[#allocation7 + $0x108] sm:$0xff]
    %v2846 = vld [vmem:[#allocation7 + $0x110] sm:$0xff]
    %v2847 = vld [vmem:[#allocation7 + $0x118] sm:$0xff]
    %v2848 = vld [vmem:[#allocation7 + $0x120] sm:$0xff]
    %v2849 = vld [vmem:[#allocation7 + $0x128] sm:$0xff]
    %v2850 = vld [vmem:[#allocation7 + $0x130] sm:$0xff]
    %v2851 = vld [vmem:[#allocation7 + $0x138] sm:$0xff]
    %v2852 = vld [vmem:[#allocation7 + $0x140] sm:$0xff]
    %v2853 = vld [vmem:[#allocation7 + $0x148] sm:$0xff]
    %v2854 = vld [vmem:[#allocation7 + $0x150] sm:$0xff]
    %v2855 = vld [vmem:[#allocation7 + $0x158] sm:$0xff]
    %v2856 = vld [vmem:[#allocation7 + $0x160] sm:$0xff]
    %v2857 = vld [vmem:[#allocation7 + $0x168] sm:$0xff]
    %v2858 = vld [vmem:[#allocation7 + $0x170] sm:$0xff]
    %v2859 = vld [vmem:[#allocation7 + $0x178] sm:$0xff]
    %v2860 = vld [vmem:[#allocation7 + $0x180] sm:$0xff]
    %v2861 = vld [vmem:[#allocation7 + $0x188] sm:$0xff]
    %v2862 = vld [vmem:[#allocation7 + $0x190] sm:$0xff]
    %v2863 = vld [vmem:[#allocation7 + $0x198] sm:$0xff]
    %v2864 = vld [vmem:[#allocation7 + $0x1a0] sm:$0xff]
    %v2865 = vld [vmem:[#allocation7 + $0x1a8] sm:$0xff]
    %v2866 = vld [vmem:[#allocation7 + $0x1b0] sm:$0xff]
    %v2867 = vld [vmem:[#allocation7 + $0x1b8] sm:$0xff]
    %v2868 = vld [vmem:[#allocation7 + $0x1c0] sm:$0xff]
    %v2869 = vld [vmem:[#allocation7 + $0x1c8] sm:$0xff]
    %v2870 = vld [vmem:[#allocation7 + $0x1d0] sm:$0xff]
    %v2871 = vld [vmem:[#allocation7 + $0x1d8] sm:$0xff]
    %v2872 = vld [vmem:[#allocation7 + $0x1e0] sm:$0xff]
    %v2873 = vld [vmem:[#allocation7 + $0x1e8] sm:$0xff]
    %v2874 = vld [vmem:[#allocation7 + $0x1f0] sm:$0xff]
    %v2875 = vld [vmem:[#allocation7 + $0x1f8] sm:$0xff]
    %v2940 = vunpack.c.l.b16 %v2812
    %v2941 = vunpack.c.h.b16 %v2812
    %v2942 = vunpack.c.l.b16 %v2813
    %v2943 = vunpack.c.h.b16 %v2813
    %v2944 = vunpack.c.l.b16 %v2814
    %v2945 = vunpack.c.h.b16 %v2814
    %v2946 = vunpack.c.l.b16 %v2815
    %v2947 = vunpack.c.h.b16 %v2815
    %v2948 = vunpack.c.l.b16 %v2816
    %v2949 = vunpack.c.h.b16 %v2816
    %v2950 = vunpack.c.l.b16 %v2817
    %v2951 = vunpack.c.h.b16 %v2817
    %v2952 = vunpack.c.l.b16 %v2818
    %v2953 = vunpack.c.h.b16 %v2818
    %v2954 = vunpack.c.l.b16 %v2819
    %v2955 = vunpack.c.h.b16 %v2819
    %v2956 = vunpack.c.l.b16 %v2820
    %v2957 = vunpack.c.h.b16 %v2820
    %v2958 = vunpack.c.l.b16 %v2821
    %v2959 = vunpack.c.h.b16 %v2821
    %v2960 = vunpack.c.l.b16 %v2822
    %v2961 = vunpack.c.h.b16 %v2822
    %v2962 = vunpack.c.l.b16 %v2823
    %v2963 = vunpack.c.h.b16 %v2823
    %v2964 = vunpack.c.l.b16 %v2824
    %v2965 = vunpack.c.h.b16 %v2824
    %v2966 = vunpack.c.l.b16 %v2825
    %v2967 = vunpack.c.h.b16 %v2825
    %v2968 = vunpack.c.l.b16 %v2826
    %v2969 = vunpack.c.h.b16 %v2826
    %v2970 = vunpack.c.l.b16 %v2827
    %v2971 = vunpack.c.h.b16 %v2827
    %v2972 = vunpack.c.l.b16 %v2828
    %v2973 = vunpack.c.h.b16 %v2828
    %v2974 = vunpack.c.l.b16 %v2829
    %v2975 = vunpack.c.h.b16 %v2829
    %v2976 = vunpack.c.l.b16 %v2830
    %v2977 = vunpack.c.h.b16 %v2830
    %v2978 = vunpack.c.l.b16 %v2831
    %v2979 = vunpack.c.h.b16 %v2831
    %v2980 = vunpack.c.l.b16 %v2832
    %v2981 = vunpack.c.h.b16 %v2832
    %v2982 = vunpack.c.l.b16 %v2833
    %v2983 = vunpack.c.h.b16 %v2833
    %v2984 = vunpack.c.l.b16 %v2834
    %v2985 = vunpack.c.h.b16 %v2834
    %v2986 = vunpack.c.l.b16 %v2835
    %v2987 = vunpack.c.h.b16 %v2835
    %v2988 = vunpack.c.l.b16 %v2836
    %v2989 = vunpack.c.h.b16 %v2836
    %v2990 = vunpack.c.l.b16 %v2837
    %v2991 = vunpack.c.h.b16 %v2837
    %v2992 = vunpack.c.l.b16 %v2838
    %v2993 = vunpack.c.h.b16 %v2838
    %v2994 = vunpack.c.l.b16 %v2839
    %v2995 = vunpack.c.h.b16 %v2839
    %v2996 = vunpack.c.l.b16 %v2840
    %v2997 = vunpack.c.h.b16 %v2840
    %v2998 = vunpack.c.l.b16 %v2841
    %v2999 = vunpack.c.h.b16 %v2841
    %v3000 = vunpack.c.l.b16 %v2842
    %v3001 = vunpack.c.h.b16 %v2842
    %v3002 = vunpack.c.l.b16 %v2843
    %v3003 = vunpack.c.h.b16 %v2843
    %v3004 = vunpack.c.l.b16 %v2844
    %v3005 = vunpack.c.h.b16 %v2844
    %v3006 = vunpack.c.l.b16 %v2845
    %v3007 = vunpack.c.h.b16 %v2845
    %v3008 = vunpack.c.l.b16 %v2846
    %v3009 = vunpack.c.h.b16 %v2846
    %v3010 = vunpack.c.l.b16 %v2847
    %v3011 = vunpack.c.h.b16 %v2847
    %v3012 = vunpack.c.l.b16 %v2848
    %v3013 = vunpack.c.h.b16 %v2848
    %v3014 = vunpack.c.l.b16 %v2849
    %v3015 = vunpack.c.h.b16 %v2849
    %v3016 = vunpack.c.l.b16 %v2850
    %v3017 = vunpack.c.h.b16 %v2850
    %v3018 = vunpack.c.l.b16 %v2851
    %v3019 = vunpack.c.h.b16 %v2851
    %v3020 = vunpack.c.l.b16 %v2852
    %v3021 = vunpack.c.h.b16 %v2852
    %v3022 = vunpack.c.l.b16 %v2853
    %v3023 = vunpack.c.h.b16 %v2853
    %v3024 = vunpack.c.l.b16 %v2854
    %v3025 = vunpack.c.h.b16 %v2854
    %v3026 = vunpack.c.l.b16 %v2855
    %v3027 = vunpack.c.h.b16 %v2855
    %v3028 = vunpack.c.l.b16 %v2856
    %v3029 = vunpack.c.h.b16 %v2856
    %v3030 = vunpack.c.l.b16 %v2857
    %v3031 = vunpack.c.h.b16 %v2857
    %v3032 = vunpack.c.l.b16 %v2858
    %v3033 = vunpack.c.h.b16 %v2858
    %v3034 = vunpack.c.l.b16 %v2859
    %v3035 = vunpack.c.h.b16 %v2859
    %v3036 = vunpack.c.l.b16 %v2860
    %v3037 = vunpack.c.h.b16 %v2860
    %v3038 = vunpack.c.l.b16 %v2861
    %v3039 = vunpack.c.h.b16 %v2861
    %v3040 = vunpack.c.l.b16 %v2862
    %v3041 = vunpack.c.h.b16 %v2862
    %v3042 = vunpack.c.l.b16 %v2863
    %v3043 = vunpack.c.h.b16 %v2863
    %v3044 = vunpack.c.l.b16 %v2864
    %v3045 = vunpack.c.h.b16 %v2864
    %v3046 = vunpack.c.l.b16 %v2865
    %v3047 = vunpack.c.h.b16 %v2865
    %v3048 = vunpack.c.l.b16 %v2866
    %v3049 = vunpack.c.h.b16 %v2866
    %v3050 = vunpack.c.l.b16 %v2867
    %v3051 = vunpack.c.h.b16 %v2867
    %v3052 = vunpack.c.l.b16 %v2868
    %v3053 = vunpack.c.h.b16 %v2868
    %v3054 = vunpack.c.l.b16 %v2869
    %v3055 = vunpack.c.h.b16 %v2869
    %v3056 = vunpack.c.l.b16 %v2870
    %v3057 = vunpack.c.h.b16 %v2870
    %v3058 = vunpack.c.l.b16 %v2871
    %v3059 = vunpack.c.h.b16 %v2871
    %v3060 = vunpack.c.l.b16 %v2872
    %v3061 = vunpack.c.h.b16 %v2872
    %v3062 = vunpack.c.l.b16 %v2873
    %v3063 = vunpack.c.h.b16 %v2873
    %v3064 = vunpack.c.l.b16 %v2874
    %v3065 = vunpack.c.h.b16 %v2874
    %v3066 = vunpack.c.l.b16 %v2875
    %v3067 = vunpack.c.h.b16 %v2875
    %v3068 = vpack.c.b16 %v2942, %v2940
    %v3069 = vpack.c.b16 %v2943, %v2941
    %v3070 = vpack.c.b16 %v2946, %v2944
    %v3071 = vpack.c.b16 %v2947, %v2945
    %v3072 = vpack.c.b16 %v2950, %v2948
    %v3073 = vpack.c.b16 %v2951, %v2949
    %v3074 = vpack.c.b16 %v2954, %v2952
    %v3075 = vpack.c.b16 %v2955, %v2953
    %v3076 = vpack.c.b16 %v2958, %v2956
    %v3077 = vpack.c.b16 %v2959, %v2957
    %v3078 = vpack.c.b16 %v2962, %v2960
    %v3079 = vpack.c.b16 %v2963, %v2961
    %v3080 = vpack.c.b16 %v2966, %v2964
    %v3081 = vpack.c.b16 %v2967, %v2965
    %v3082 = vpack.c.b16 %v2970, %v2968
    %v3083 = vpack.c.b16 %v2971, %v2969
    %v3084 = vpack.c.b16 %v2974, %v2972
    %v3085 = vpack.c.b16 %v2975, %v2973
    %v3086 = vpack.c.b16 %v2978, %v2976
    %v3087 = vpack.c.b16 %v2979, %v2977
    %v3088 = vpack.c.b16 %v2982, %v2980
    %v3089 = vpack.c.b16 %v2983, %v2981
    %v3090 = vpack.c.b16 %v2986, %v2984
    %v3091 = vpack.c.b16 %v2987, %v2985
    %v3092 = vpack.c.b16 %v2990, %v2988
    %v3093 = vpack.c.b16 %v2991, %v2989
    %v3094 = vpack.c.b16 %v2994, %v2992
    %v3095 = vpack.c.b16 %v2995, %v2993
    %v3096 = vpack.c.b16 %v2998, %v2996
    %v3097 = vpack.c.b16 %v2999, %v2997
    %v3098 = vpack.c.b16 %v3002, %v3000
    %v3099 = vpack.c.b16 %v3003, %v3001
    %v3100 = vpack.c.b16 %v3006, %v3004
    %v3101 = vpack.c.b16 %v3007, %v3005
    %v3102 = vpack.c.b16 %v3010, %v3008
    %v3103 = vpack.c.b16 %v3011, %v3009
    %v3104 = vpack.c.b16 %v3014, %v3012
    %v3105 = vpack.c.b16 %v3015, %v3013
    %v3106 = vpack.c.b16 %v3018, %v3016
    %v3107 = vpack.c.b16 %v3019, %v3017
    %v3108 = vpack.c.b16 %v3022, %v3020
    %v3109 = vpack.c.b16 %v3023, %v3021
    %v3110 = vpack.c.b16 %v3026, %v3024
    %v3111 = vpack.c.b16 %v3027, %v3025
    %v3112 = vpack.c.b16 %v3030, %v3028
    %v3113 = vpack.c.b16 %v3031, %v3029
    %v3114 = vpack.c.b16 %v3034, %v3032
    %v3115 = vpack.c.b16 %v3035, %v3033
    %v3116 = vpack.c.b16 %v3038, %v3036
    %v3117 = vpack.c.b16 %v3039, %v3037
    %v3118 = vpack.c.b16 %v3042, %v3040
    %v3119 = vpack.c.b16 %v3043, %v3041
    %v3120 = vpack.c.b16 %v3046, %v3044
    %v3121 = vpack.c.b16 %v3047, %v3045
    %v3122 = vpack.c.b16 %v3050, %v3048
    %v3123 = vpack.c.b16 %v3051, %v3049
    %v3124 = vpack.c.b16 %v3054, %v3052
    %v3125 = vpack.c.b16 %v3055, %v3053
    %v3126 = vpack.c.b16 %v3058, %v3056
    %v3127 = vpack.c.b16 %v3059, %v3057
    %v3128 = vpack.c.b16 %v3062, %v3060
    %v3129 = vpack.c.b16 %v3063, %v3061
    %v3130 = vpack.c.b16 %v3066, %v3064
    %v3131 = vpack.c.b16 %v3067, %v3065
    %3196 = vmatprep.subr.bf16.mxu0 %v3083
    %3197 = vmatpush1.bf16.msra.mxu0 %v3082
    %3198 = vmatprep.subr.bf16.mxu0 %v3081
    %3199 = vmatpush1.bf16.msra.mxu0 %v3080
    %3200 = vmatprep.subr.bf16.mxu0 %v3079
    %3201 = vmatpush1.bf16.msra.mxu0 %v3078
    %3202 = vmatprep.subr.bf16.mxu0 %v3077
    %3203 = vmatpush1.bf16.msra.mxu0 %v3076
    %3204 = vmatprep.subr.bf16.mxu0 %v3075
    %3205 = vmatpush1.bf16.msra.mxu0 %v3074
    %3206 = vmatprep.subr.bf16.mxu0 %v3073
    %3207 = vmatpush1.bf16.msra.mxu0 %v3072
    %3208 = vmatprep.subr.bf16.mxu0 %v3071
    %3209 = vmatpush1.bf16.msra.mxu0 %v3070
    %3210 = vmatprep.subr.bf16.mxu0 %v3069
    %3211 = vmatpush1.bf16.msra.mxu0 %v3068
    %3212 = vmatprep.subr.bf16.mxu0 %v3099
    %3213 = vmatpush2.bf16.msra.mxu0 %v3098
    %3214 = vmatprep.subr.bf16.mxu0 %v3097
    %3215 = vmatpush2.bf16.msra.mxu0 %v3096
    %3216 = vmatprep.subr.bf16.mxu0 %v3095
    %3217 = vmatpush2.bf16.msra.mxu0 %v3094
    %3218 = vmatprep.subr.bf16.mxu0 %v3093
    %3219 = vmatpush2.bf16.msra.mxu0 %v3092
    %3220 = vmatprep.subr.bf16.mxu0 %v3091
    %3221 = vmatpush2.bf16.msra.mxu0 %v3090
    %3222 = vmatprep.subr.bf16.mxu0 %v3089
    %3223 = vmatpush2.bf16.msra.mxu0 %v3088
    %3224 = vmatprep.subr.bf16.mxu0 %v3087
    %3225 = vmatpush2.bf16.msra.mxu0 %v3086
    %3226 = vmatprep.subr.bf16.mxu0 %v3085
    %3227 = vmatpush2.bf16.msra.mxu0 %v3084
    %3228 = vmatprep.mubr.bf16.mxu0 %v2339
    %3229 = vmatmul.mubr.bf16.gmra.mxu0 %v2338
    %v3230 = vpop.f32.mrf.mxu0
    %v3231 = vadd.f32 0.0, %v3230
    %v3232 = vpop.f32.mrf.mxu0
    %v3233 = vadd.f32 0.0, %v3232
    %v3234 = vpop.f32.mrf.mxu0
    %v3235 = vadd.f32 0.0, %v3234
    %v3236 = vpop.f32.mrf.mxu0
    %v3237 = vadd.f32 0.0, %v3236
    %3238 = vdwg.mxu0
    %3239 = vmatprep.subr.bf16.mxu0 %v3115
    %3240 = vmatpush1.bf16.msra.mxu0 %v3114
    %3241 = vmatprep.subr.bf16.mxu0 %v3113
    %3242 = vmatpush1.bf16.msra.mxu0 %v3112
    %3243 = vmatprep.subr.bf16.mxu0 %v3111
    %3244 = vmatpush1.bf16.msra.mxu0 %v3110
    %3245 = vmatprep.subr.bf16.mxu0 %v3109
    %3246 = vmatpush1.bf16.msra.mxu0 %v3108
    %3247 = vmatprep.subr.bf16.mxu0 %v3107
    %3248 = vmatpush1.bf16.msra.mxu0 %v3106
    %3249 = vmatprep.subr.bf16.mxu0 %v3105
    %3250 = vmatpush1.bf16.msra.mxu0 %v3104
    %3251 = vmatprep.subr.bf16.mxu0 %v3103
    %3252 = vmatpush1.bf16.msra.mxu0 %v3102
    %3253 = vmatprep.subr.bf16.mxu0 %v3101
    %3254 = vmatpush1.bf16.msra.mxu0 %v3100
    %3255 = vmatprep.subr.bf16.mxu0 %v3131
    %3256 = vmatpush2.bf16.msra.mxu0 %v3130
    %3257 = vmatprep.subr.bf16.mxu0 %v3129
    %3258 = vmatpush2.bf16.msra.mxu0 %v3128
    %3259 = vmatprep.subr.bf16.mxu0 %v3127
    %3260 = vmatpush2.bf16.msra.mxu0 %v3126
    %3261 = vmatprep.subr.bf16.mxu0 %v3125
    %3262 = vmatpush2.bf16.msra.mxu0 %v3124
    %3263 = vmatprep.subr.bf16.mxu0 %v3123
    %3264 = vmatpush2.bf16.msra.mxu0 %v3122
    %3265 = vmatprep.subr.bf16.mxu0 %v3121
    %3266 = vmatpush2.bf16.msra.mxu0 %v3120
    %3267 = vmatprep.subr.bf16.mxu0 %v3119
    %3268 = vmatpush2.bf16.msra.mxu0 %v3118
    %3269 = vmatprep.subr.bf16.mxu0 %v3117
    %3270 = vmatpush2.bf16.msra.mxu0 %v3116
    %3271 = vmatprep.mubr.bf16.mxu0 %v2811
    %3272 = vmatmul.mubr.bf16.gmra.mxu0 %v2810
    %v3273 = vpop.f32.mrf.mxu0
    %v3274 = vadd.f32 %v3231, %v3273
    %v3275 = vpop.f32.mrf.mxu0
    %v3276 = vadd.f32 %v3233, %v3275
    %v3277 = vpop.f32.mrf.mxu0
    %v3278 = vadd.f32 %v3235, %v3277
    %v3279 = vpop.f32.mrf.mxu0
    %v3280 = vadd.f32 %v3237, %v3279
    %3281 = vdwg.mxu0
    %v3282 = vadd.f32 %v2802, %v2806
    %v3283 = vrot.slane %v3282, 4
    %v3284 = vadd.f32 %v3282, %v3283
    %v3285 = vrot.slane %v3284, 2
    %v3286 = vadd.f32 %v3284, %v3285
    %v3287 = vrot.slane %v3286, 1
    %v3288 = vadd.f32 %v3286, %v3287
    %v3289 = vadd.f32 %v2804, %v2808
    %v3290 = vrot.slane %v3289, 4
    %v3291 = vadd.f32 %v3289, %v3290
    %v3292 = vrot.slane %v3291, 2
    %v3293 = vadd.f32 %v3291, %v3292
    %v3294 = vrot.slane %v3293, 1
    %v3295 = vadd.f32 %v3293, %v3294
    %v3296 = vmul.f32 %v2802, %v2802
    %v3297 = vmul.f32 %v2804, %v2804
    %v3298 = vmul.f32 %v2806, %v2806
    %v3299 = vmul.f32 %v2808, %v2808
    %v3300 = vadd.f32 %v3296, %v3298
    %v3301 = vrot.slane %v3300, 4
    %v3302 = vadd.f32 %v3300, %v3301
    %v3303 = vrot.slane %v3302, 2
    %v3304 = vadd.f32 %v3302, %v3303
    %v3305 = vrot.slane %v3304, 1
    %v3306 = vadd.f32 %v3304, %v3305
    %v3307 = vadd.f32 %v3297, %v3299
    %v3308 = vrot.slane %v3307, 4
    %v3309 = vadd.f32 %v3307, %v3308
    %v3310 = vrot.slane %v3309, 2
    %v3311 = vadd.f32 %v3309, %v3310
    %v3312 = vrot.slane %v3311, 1
    %v3313 = vadd.f32 %v3311, %v3312
    %v3314 = vadd.f32 %v3274, %v3278
    %v3315 = vrot.slane %v3314, 4
    %v3316 = vadd.f32 %v3314, %v3315
    %v3317 = vrot.slane %v3316, 2
    %v3318 = vadd.f32 %v3316, %v3317
    %v3319 = vrot.slane %v3318, 1
    %v3320 = vadd.f32 %v3318, %v3319
    %v3321 = vadd.f32 %v3276, %v3280
    %v3322 = vrot.slane %v3321, 4
    %v3323 = vadd.f32 %v3321, %v3322
    %v3324 = vrot.slane %v3323, 2
    %v3325 = vadd.f32 %v3323, %v3324
    %v3326 = vrot.slane %v3325, 1
    %v3327 = vadd.f32 %v3325, %v3326
    %v3328 = vmul.f32 %v3274, %v3274
    %v3329 = vmul.f32 %v3276, %v3276
    %v3330 = vmul.f32 %v3278, %v3278
    %v3331 = vmul.f32 %v3280, %v3280
    %v3332 = vadd.f32 %v3328, %v3330
    %v3333 = vrot.slane %v3332, 4
    %v3334 = vadd.f32 %v3332, %v3333
    %v3335 = vrot.slane %v3334, 2
    %v3336 = vadd.f32 %v3334, %v3335
    %v3337 = vrot.slane %v3336, 1
    %v3338 = vadd.f32 %v3336, %v3337
    %v3339 = vadd.f32 %v3329, %v3331
    %v3340 = vrot.slane %v3339, 4
    %v3341 = vadd.f32 %v3339, %v3340
    %v3342 = vrot.slane %v3341, 2
    %v3343 = vadd.f32 %v3341, %v3342
    %v3344 = vrot.slane %v3343, 1
    %v3345 = vadd.f32 %v3343, %v3344
    %v3346 = vadd.f32 %v3288, %v3320
    %v3347 = vadd.f32 %v3295, %v3327
    %v3348 = vadd.f32 %v3306, %v3338
    %v3349 = vadd.f32 %v3313, %v3345
    %3351 = vrot.lane.b32.xlu0 %v3346, 112
    %v3352 = vpop.permute.xlu0 %3351
    %v3354 = vadd.f32 %v3346, %v3352
    %3356 = vrot.lane.b32.xlu0 %v3348, 112
    %v3357 = vpop.permute.xlu0 %3356
    %v3359 = vadd.f32 %v3348, %v3357
    %3360 = vrot.lane.b32.xlu0 %v3346, 96
    %v3361 = vpop.permute.xlu0 %3360
    %v3363 = vadd.f32 %v3354, %v3361
    %3364 = vrot.lane.b32.xlu0 %v3348, 96
    %v3365 = vpop.permute.xlu0 %3364
    %v3367 = vadd.f32 %v3359, %v3365
    %3368 = vrot.lane.b32.xlu0 %v3346, 80
    %v3369 = vpop.permute.xlu0 %3368
    %v3371 = vadd.f32 %v3363, %v3369
    %3372 = vrot.lane.b32.xlu0 %v3348, 80
    %v3373 = vpop.permute.xlu0 %3372
    %v3375 = vadd.f32 %v3367, %v3373
    %3376 = vrot.lane.b32.xlu0 %v3346, 64
    %v3377 = vpop.permute.xlu0 %3376
    %v3379 = vadd.f32 %v3371, %v3377
    %3380 = vrot.lane.b32.xlu0 %v3348, 64
    %v3381 = vpop.permute.xlu0 %3380
    %v3383 = vadd.f32 %v3375, %v3381
    %3384 = vrot.lane.b32.xlu0 %v3346, 48
    %v3385 = vpop.permute.xlu0 %3384
    %v3387 = vadd.f32 %v3379, %v3385
    %3388 = vrot.lane.b32.xlu0 %v3348, 48
    %v3389 = vpop.permute.xlu0 %3388
    %v3391 = vadd.f32 %v3383, %v3389
    %3392 = vrot.lane.b32.xlu0 %v3346, 32
    %v3393 = vpop.permute.xlu0 %3392
    %v3395 = vadd.f32 %v3387, %v3393
    %3396 = vrot.lane.b32.xlu0 %v3348, 32
    %v3397 = vpop.permute.xlu0 %3396
    %v3399 = vadd.f32 %v3391, %v3397
    %3400 = vrot.lane.b32.xlu0 %v3346, 16
    %v3401 = vpop.permute.xlu0 %3400
    %v3403 = vadd.f32 %v3395, %v3401
    %3404 = vrot.lane.b32.xlu0 %v3348, 16
    %v3405 = vpop.permute.xlu0 %3404
    %v3407 = vadd.f32 %v3399, %v3405
    %v3408 = vadd.f32 %v3403, %v3347
    %v3409 = vadd.f32 %v3407, %v3349
    %3411 = vrot.lane.b32.xlu0 %v3347, 112
    %v3412 = vpop.permute.xlu0 %3411
    %v3414 = vadd.f32 %v3408, %v3412
    %3416 = vrot.lane.b32.xlu0 %v3349, 112
    %v3417 = vpop.permute.xlu0 %3416
    %v3419 = vadd.f32 %v3409, %v3417
    %3420 = vrot.lane.b32.xlu0 %v3347, 96
    %v3421 = vpop.permute.xlu0 %3420
    %v3423 = vadd.f32 %v3414, %v3421
    %3424 = vrot.lane.b32.xlu0 %v3349, 96
    %v3425 = vpop.permute.xlu0 %3424
    %v3427 = vadd.f32 %v3419, %v3425
    %3428 = vrot.lane.b32.xlu0 %v3347, 80
    %v3429 = vpop.permute.xlu0 %3428
    %v3431 = vadd.f32 %v3423, %v3429
    %3432 = vrot.lane.b32.xlu0 %v3349, 80
    %v3433 = vpop.permute.xlu0 %3432
    %v3435 = vadd.f32 %v3427, %v3433
    %3436 = vrot.lane.b32.xlu0 %v3347, 64
    %v3437 = vpop.permute.xlu0 %3436
    %v3439 = vadd.f32 %v3431, %v3437
    %3440 = vrot.lane.b32.xlu0 %v3349, 64
    %v3441 = vpop.permute.xlu0 %3440
    %v3443 = vadd.f32 %v3435, %v3441
    %3444 = vrot.lane.b32.xlu0 %v3347, 48
    %v3445 = vpop.permute.xlu0 %3444
    %v3447 = vadd.f32 %v3439, %v3445
    %3448 = vrot.lane.b32.xlu0 %v3349, 48
    %v3449 = vpop.permute.xlu0 %3448
    %v3451 = vadd.f32 %v3443, %v3449
    %3452 = vrot.lane.b32.xlu0 %v3347, 32
    %v3453 = vpop.permute.xlu0 %3452
    %v3455 = vadd.f32 %v3447, %v3453
    %3456 = vrot.lane.b32.xlu0 %v3349, 32
    %v3457 = vpop.permute.xlu0 %3456
    %v3459 = vadd.f32 %v3451, %v3457
    %3460 = vrot.lane.b32.xlu0 %v3347, 16
    %v3461 = vpop.permute.xlu0 %3460
    %v3463 = vadd.f32 %v3455, %v3461
    %3464 = vrot.lane.b32.xlu0 %v3349, 16
    %v3465 = vpop.permute.xlu0 %3464
    %v3467 = vadd.f32 %v3459, %v3465
    %v3468 = vmul.f32 %v3463, 0.001953125
    %v3469 = vmul.f32 %v3467, 0.001953125
    %v3470 = vmul.f32 %v3468, %v3468
    %v3471 = vsub.f32 %v3469, %v3470
    %v3472 = vadd.f32 %v3471, 1e-05
    %v3473 = vrsqrt.pop %v3472
    %v3474 = vmul.f32 %v103, %v3473
    %v3475 = vmul.f32 %v3468, %v3474
    %v3476 = vsub.f32 %v104, %v3475
    %3478 = vrot.lane.b32.xlu0 %v3474, 16
    %v3479 = vpop.permute.xlu0 %3478
    %3481 = vrot.lane.b32.xlu0 %v3474, 32
    %v3482 = vpop.permute.xlu0 %3481
    %3484 = vrot.lane.b32.xlu0 %v3474, 48
    %v3485 = vpop.permute.xlu0 %3484
    %3487 = vrot.lane.b32.xlu0 %v3474, 64
    %v3488 = vpop.permute.xlu0 %3487
    %3490 = vrot.lane.b32.xlu0 %v3474, 80
    %v3491 = vpop.permute.xlu0 %3490
    %3493 = vrot.lane.b32.xlu0 %v3474, 96
    %v3494 = vpop.permute.xlu0 %3493
    %3496 = vrot.lane.b32.xlu0 %v3474, 112
    %v3497 = vpop.permute.xlu0 %3496
    %vm3499 = vcmask 130048
    %v3500 = vsel %vm3499, %v3474, %v3479
    %v3501 = vsel %vm672, %v3500, %v3482
    %vm3502 = vcmask 392192
    %v3503 = vsel %vm3502, %v3501, %v3485
    %v3504 = vsel %vm674, %v3503, %v3488
    %vm3505 = vcmask 654336
    %v3506 = vsel %vm3505, %v3504, %v3491
    %v3507 = vsel %vm676, %v3506, %v3494
    %vm3508 = vcmask 916480
    %v3509 = vsel %vm3508, %v3507, %v3497
    %3511 = vrot.lane.b32.xlu0 %v3476, 16
    %v3512 = vpop.permute.xlu0 %3511
    %3514 = vrot.lane.b32.xlu0 %v3476, 32
    %v3515 = vpop.permute.xlu0 %3514
    %3517 = vrot.lane.b32.xlu0 %v3476, 48
    %v3518 = vpop.permute.xlu0 %3517
    %3520 = vrot.lane.b32.xlu0 %v3476, 64
    %v3521 = vpop.permute.xlu0 %3520
    %3523 = vrot.lane.b32.xlu0 %v3476, 80
    %v3524 = vpop.permute.xlu0 %3523
    %3526 = vrot.lane.b32.xlu0 %v3476, 96
    %v3527 = vpop.permute.xlu0 %3526
    %3529 = vrot.lane.b32.xlu0 %v3476, 112
    %v3530 = vpop.permute.xlu0 %3529
    %v3532 = vsel %vm3499, %v3476, %v3512
    %v3533 = vsel %vm672, %v3532, %v3515
    %v3534 = vsel %vm3502, %v3533, %v3518
    %v3535 = vsel %vm674, %v3534, %v3521
    %v3536 = vsel %vm3505, %v3535, %v3524
    %v3537 = vsel %vm676, %v3536, %v3527
    %v3538 = vsel %vm3508, %v3537, %v3530
    %v3539 = vlaneseq
    %v3540 = vshrl.u32 %v3539, 7
    %v3541 = vsub.s32 0, %v3540
    %v3542 = vrot.slane %v3509, %v3541
    %v3543 = vmul.f32 %v2802, %v3542
    %v3544 = vmul.f32 %v2804, %v3542
    %v3545 = vmul.f32 %v2806, %v3542
    %v3546 = vmul.f32 %v2808, %v3542
    %v3547 = vlaneseq
    %v3548 = vshrl.u32 %v3547, 7
    %v3549 = vsub.s32 0, %v3548
    %v3550 = vrot.slane %v3538, %v3549
    %v3551 = vadd.f32 %v3543, %v3550
    %v3552 = vadd.f32 %v3544, %v3550
    %v3553 = vadd.f32 %v3545, %v3550
    %v3554 = vadd.f32 %v3546, %v3550
    %v3555 = vmax.f32 %v3551, 0.0
    %v3556 = vmax.f32 %v3552, 0.0
    %v3557 = vmax.f32 %v3553, 0.0
    %v3558 = vmax.f32 %v3554, 0.0
    %v3559 = vmul.f32 %v3274, %v3542
    %v3560 = vmul.f32 %v3276, %v3542
    %v3561 = vmul.f32 %v3278, %v3542
    %v3562 = vmul.f32 %v3280, %v3542
    %v3563 = vadd.f32 %v3559, %v3550
    %v3564 = vadd.f32 %v3560, %v3550
    %v3565 = vadd.f32 %v3561, %v3550
    %v3566 = vadd.f32 %v3562, %v3550
    %v3567 = vmax.f32 %v3563, 0.0
    %v3568 = vmax.f32 %v3564, 0.0
    %v3569 = vmax.f32 %v3565, 0.0
    %v3570 = vmax.f32 %v3566, 0.0
    %v3573 = vrot.slane %v3567, 7
    %v3574 = vrot.slane %v3568, 7
    %v3579 = vrot.slane %v3555, 7
    %v3580 = vrot.slane %v3556, 7
    %v3583 = vrot.slane %v3567, 6
    %v3584 = vrot.slane %v3568, 6
    %v3587 = vrot.slane %v3555, 6
    %v3588 = vrot.slane %v3556, 6
    %v3591 = vrot.slane %v3567, 5
    %v3592 = vrot.slane %v3568, 5
    %v3595 = vrot.slane %v3555, 5
    %v3596 = vrot.slane %v3556, 5
    %v3599 = vrot.slane %v3567, 4
    %v3600 = vrot.slane %v3568, 4
    %v3603 = vrot.slane %v3555, 4
    %v3604 = vrot.slane %v3556, 4
    %v3607 = vrot.slane %v3567, 3
    %v3608 = vrot.slane %v3568, 3
    %v3611 = vrot.slane %v3555, 3
    %v3612 = vrot.slane %v3556, 3
    %v3615 = vrot.slane %v3567, 2
    %v3616 = vrot.slane %v3568, 2
    %v3619 = vrot.slane %v3555, 2
    %v3620 = vrot.slane %v3556, 2
    %v3623 = vrot.slane %v3567, 1
    %v3624 = vrot.slane %v3568, 1
    %v3627 = vrot.slane %v3555, 1
    %v3628 = vrot.slane %v3556, 1
    %v3631 = vsel %vm1076, %v3555, %v3573
    %v3632 = vsel %vm1076, %v3556, %v3574
    %v3633 = vsel %vm267, %v3631, %v3579
    %v3634 = vsel %vm267, %v3632, %v3580
    %v3635 = vsel %vm1081, %v3633, %v3583
    %v3636 = vsel %vm1081, %v3634, %v3584
    %v3637 = vsel %vm1084, %v3635, %v3587
    %v3638 = vsel %vm1084, %v3636, %v3588
    %v3639 = vsel %vm388, %v3637, %v3591
    %v3640 = vsel %vm388, %v3638, %v3592
    %v3641 = vsel %vm1089, %v3639, %v3595
    %v3642 = vsel %vm1089, %v3640, %v3596
    %v3643 = vsel %vm1092, %v3641, %v3599
    %v3644 = vsel %vm1092, %v3642, %v3600
    %v3645 = vsel %vm1076, %v3603, %v3607
    %v3646 = vsel %vm1076, %v3604, %v3608
    %v3647 = vsel %vm267, %v3645, %v3611
    %v3648 = vsel %vm267, %v3646, %v3612
    %v3649 = vsel %vm1081, %v3647, %v3615
    %v3650 = vsel %vm1081, %v3648, %v3616
    %v3651 = vsel %vm1084, %v3649, %v3619
    %v3652 = vsel %vm1084, %v3650, %v3620
    %v3653 = vsel %vm388, %v3651, %v3623
    %v3654 = vsel %vm388, %v3652, %v3624
    %v3655 = vsel %vm1089, %v3653, %v3627
    %v3656 = vsel %vm1089, %v3654, %v3628
    %v3657 = vsel %vm1092, %v3655, %v3567
    %v3658 = vsel %vm1092, %v3656, %v3568
    %v3661 = vrot.slane %v3569, 7
    %v3662 = vrot.slane %v3570, 7
    %v3667 = vrot.slane %v3557, 7
    %v3668 = vrot.slane %v3558, 7
    %v3671 = vrot.slane %v3569, 6
    %v3672 = vrot.slane %v3570, 6
    %v3675 = vrot.slane %v3557, 6
    %v3676 = vrot.slane %v3558, 6
    %v3679 = vrot.slane %v3569, 5
    %v3680 = vrot.slane %v3570, 5
    %v3683 = vrot.slane %v3557, 5
    %v3684 = vrot.slane %v3558, 5
    %v3687 = vrot.slane %v3569, 4
    %v3688 = vrot.slane %v3570, 4
    %v3691 = vrot.slane %v3557, 4
    %v3692 = vrot.slane %v3558, 4
    %v3695 = vrot.slane %v3569, 3
    %v3696 = vrot.slane %v3570, 3
    %v3699 = vrot.slane %v3557, 3
    %v3700 = vrot.slane %v3558, 3
    %v3703 = vrot.slane %v3569, 2
    %v3704 = vrot.slane %v3570, 2
    %v3707 = vrot.slane %v3557, 2
    %v3708 = vrot.slane %v3558, 2
    %v3711 = vrot.slane %v3569, 1
    %v3712 = vrot.slane %v3570, 1
    %v3715 = vrot.slane %v3557, 1
    %v3716 = vrot.slane %v3558, 1
    %v3719 = vsel %vm1076, %v3557, %v3661
    %v3720 = vsel %vm1076, %v3558, %v3662
    %v3721 = vsel %vm267, %v3719, %v3667
    %v3722 = vsel %vm267, %v3720, %v3668
    %v3723 = vsel %vm1081, %v3721, %v3671
    %v3724 = vsel %vm1081, %v3722, %v3672
    %v3725 = vsel %vm1084, %v3723, %v3675
    %v3726 = vsel %vm1084, %v3724, %v3676
    %v3727 = vsel %vm388, %v3725, %v3679
    %v3728 = vsel %vm388, %v3726, %v3680
    %v3729 = vsel %vm1089, %v3727, %v3683
    %v3730 = vsel %vm1089, %v3728, %v3684
    %v3731 = vsel %vm1092, %v3729, %v3687
    %v3732 = vsel %vm1092, %v3730, %v3688
    %v3733 = vsel %vm1076, %v3691, %v3695
    %v3734 = vsel %vm1076, %v3692, %v3696
    %v3735 = vsel %vm267, %v3733, %v3699
    %v3736 = vsel %vm267, %v3734, %v3700
    %v3737 = vsel %vm1081, %v3735, %v3703
    %v3738 = vsel %vm1081, %v3736, %v3704
    %v3739 = vsel %vm1084, %v3737, %v3707
    %v3740 = vsel %vm1084, %v3738, %v3708
    %v3741 = vsel %vm388, %v3739, %v3711
    %v3742 = vsel %vm388, %v3740, %v3712
    %v3743 = vsel %vm1089, %v3741, %v3715
    %v3744 = vsel %vm1089, %v3742, %v3716
    %v3745 = vsel %vm1092, %v3743, %v3569
    %v3746 = vsel %vm1092, %v3744, %v3570
    %v3751 = vrot.slane %v3643, 7
    %v3752 = vrot.slane %v3644, 7
    %v3753 = vrot.slane %v3657, 7
    %v3754 = vsel %vm1076, %v3751, %v3753
    %v3755 = vrot.slane %v3658, 7
    %v3756 = vsel %vm1076, %v3752, %v3755
    %v3765 = vrot.slane %v3731, 7
    %v3766 = vrot.slane %v3732, 7
    %v3767 = vrot.slane %v3745, 7
    %v3768 = vsel %vm1076, %v3765, %v3767
    %v3769 = vrot.slane %v3746, 7
    %v3770 = vsel %vm1076, %v3766, %v3769
    %v3775 = vsel %vm1076, 0.0, %v3751
    %v3776 = vsel %vm1076, 0.0, %v3752
    %v3777 = vsel %vm1076, 0.0, %v3765
    %v3778 = vsel %vm1076, 0.0, %v3766
    %v3779 = vrot.slane %v3643, 1
    %v3780 = vrot.slane %v3657, 1
    %v3781 = vsel %vm1092, %v3779, %v3780
    %v3782 = vrot.slane %v3644, 1
    %v3783 = vrot.slane %v3658, 1
    %v3784 = vsel %vm1092, %v3782, %v3783
    %v3789 = vrot.slane %v3731, 1
    %v3790 = vrot.slane %v3745, 1
    %v3791 = vsel %vm1092, %v3789, %v3790
    %v3792 = vrot.slane %v3732, 1
    %v3793 = vrot.slane %v3746, 1
    %v3794 = vsel %vm1092, %v3792, %v3793
    %v3799 = vsel %vm1092, %v3780, 0.0
    %v3800 = vsel %vm1092, %v3783, 0.0
    %v3801 = vsel %vm1092, %v3790, 0.0
    %v3802 = vsel %vm1092, %v3793, 0.0
    %v3803 = vpack.c.bf16 %v3754, %v3775
    %v3804 = vpack.c.bf16 %v3756, %v3776
    %v3805 = vpack.c.bf16 %v3657, %v3643
    %v3806 = vpack.c.bf16 %v3658, %v3644
    %v3807 = vpack.c.bf16 %v3768, %v3777
    %v3808 = vpack.c.bf16 %v3770, %v3778
    %v3809 = vpack.c.bf16 %v3745, %v3731
    %v3810 = vpack.c.bf16 %v3746, %v3732
    %v3811 = vld [vmem:[%s8] sm:$0xf]
    %v3812 = vld [vmem:[%s8 + $0x4] sm:$0xf]
    %v3813 = vld [vmem:[%s8 + $0x8] sm:$0xf]
    %v3814 = vld [vmem:[%s8 + $0xc] sm:$0xf]
    %v3815 = vld [vmem:[%s8 + $0x10] sm:$0xf]
    %v3816 = vld [vmem:[%s8 + $0x14] sm:$0xf]
    %v3817 = vld [vmem:[%s8 + $0x18] sm:$0xf]
    %v3818 = vld [vmem:[%s8 + $0x1c] sm:$0xf]
    %v3819 = vld [vmem:[%s8 + $0x20] sm:$0xf]
    %v3820 = vld [vmem:[%s8 + $0x24] sm:$0xf]
    %v3821 = vld [vmem:[%s8 + $0x28] sm:$0xf]
    %v3822 = vld [vmem:[%s8 + $0x2c] sm:$0xf]
    %v3823 = vld [vmem:[%s8 + $0x30] sm:$0xf]
    %v3824 = vld [vmem:[%s8 + $0x34] sm:$0xf]
    %v3825 = vld [vmem:[%s8 + $0x38] sm:$0xf]
    %v3826 = vld [vmem:[%s8 + $0x3c] sm:$0xf]
    %v3827 = vld [vmem:[%s8 + $0x40] sm:$0xf]
    %v3828 = vld [vmem:[%s8 + $0x44] sm:$0xf]
    %v3829 = vld [vmem:[%s8 + $0x48] sm:$0xf]
    %v3830 = vld [vmem:[%s8 + $0x4c] sm:$0xf]
    %v3831 = vld [vmem:[%s8 + $0x50] sm:$0xf]
    %v3832 = vld [vmem:[%s8 + $0x54] sm:$0xf]
    %v3833 = vld [vmem:[%s8 + $0x58] sm:$0xf]
    %v3834 = vld [vmem:[%s8 + $0x5c] sm:$0xf]
    %v3835 = vld [vmem:[%s8 + $0x60] sm:$0xf]
    %v3836 = vld [vmem:[%s8 + $0x64] sm:$0xf]
    %v3837 = vld [vmem:[%s8 + $0x68] sm:$0xf]
    %v3838 = vld [vmem:[%s8 + $0x6c] sm:$0xf]
    %v3839 = vld [vmem:[%s8 + $0x70] sm:$0xf]
    %v3840 = vld [vmem:[%s8 + $0x74] sm:$0xf]
    %v3841 = vld [vmem:[%s8 + $0x78] sm:$0xf]
    %v3842 = vld [vmem:[%s8 + $0x7c] sm:$0xf]
    %v3843 = vld [vmem:[%s8 + $0x80] sm:$0xf]
    %v3844 = vld [vmem:[%s8 + $0x84] sm:$0xf]
    %v3845 = vld [vmem:[%s8 + $0x88] sm:$0xf]
    %v3846 = vld [vmem:[%s8 + $0x8c] sm:$0xf]
    %v3847 = vld [vmem:[%s8 + $0x90] sm:$0xf]
    %v3848 = vld [vmem:[%s8 + $0x94] sm:$0xf]
    %v3849 = vld [vmem:[%s8 + $0x98] sm:$0xf]
    %v3850 = vld [vmem:[%s8 + $0x9c] sm:$0xf]
    %v3851 = vld [vmem:[%s8 + $0xa0] sm:$0xf]
    %v3852 = vld [vmem:[%s8 + $0xa4] sm:$0xf]
    %v3853 = vld [vmem:[%s8 + $0xa8] sm:$0xf]
    %v3854 = vld [vmem:[%s8 + $0xac] sm:$0xf]
    %v3855 = vld [vmem:[%s8 + $0xb0] sm:$0xf]
    %v3856 = vld [vmem:[%s8 + $0xb4] sm:$0xf]
    %v3857 = vld [vmem:[%s8 + $0xb8] sm:$0xf]
    %v3858 = vld [vmem:[%s8 + $0xbc] sm:$0xf]
    %v3859 = vld [vmem:[%s8 + $0xc0] sm:$0xf]
    %v3860 = vld [vmem:[%s8 + $0xc4] sm:$0xf]
    %v3861 = vld [vmem:[%s8 + $0xc8] sm:$0xf]
    %v3862 = vld [vmem:[%s8 + $0xcc] sm:$0xf]
    %v3863 = vld [vmem:[%s8 + $0xd0] sm:$0xf]
    %v3864 = vld [vmem:[%s8 + $0xd4] sm:$0xf]
    %v3865 = vld [vmem:[%s8 + $0xd8] sm:$0xf]
    %v3866 = vld [vmem:[%s8 + $0xdc] sm:$0xf]
    %v3867 = vld [vmem:[%s8 + $0xe0] sm:$0xf]
    %v3868 = vld [vmem:[%s8 + $0xe4] sm:$0xf]
    %v3869 = vld [vmem:[%s8 + $0xe8] sm:$0xf]
    %v3870 = vld [vmem:[%s8 + $0xec] sm:$0xf]
    %v3871 = vld [vmem:[%s8 + $0xf0] sm:$0xf]
    %v3872 = vld [vmem:[%s8 + $0xf4] sm:$0xf]
    %v3873 = vld [vmem:[%s8 + $0xf8] sm:$0xf]
    %v3874 = vld [vmem:[%s8 + $0xfc] sm:$0xf]
    %v3875 = vpack.c.bf16 %v3799, %v3781
    %v3876 = vpack.c.bf16 %v3800, %v3784
    %v3877 = vpack.c.bf16 %v3801, %v3791
    %v3878 = vpack.c.bf16 %v3802, %v3794
    %v3879 = vld [vmem:[%s9] sm:$0xf]
    %v3880 = vld [vmem:[%s9 + $0x4] sm:$0xf]
    %v3881 = vld [vmem:[%s9 + $0x8] sm:$0xf]
    %v3882 = vld [vmem:[%s9 + $0xc] sm:$0xf]
    %v3883 = vld [vmem:[%s9 + $0x10] sm:$0xf]
    %v3884 = vld [vmem:[%s9 + $0x14] sm:$0xf]
    %v3885 = vld [vmem:[%s9 + $0x18] sm:$0xf]
    %v3886 = vld [vmem:[%s9 + $0x1c] sm:$0xf]
    %v3887 = vld [vmem:[%s9 + $0x20] sm:$0xf]
    %v3888 = vld [vmem:[%s9 + $0x24] sm:$0xf]
    %v3889 = vld [vmem:[%s9 + $0x28] sm:$0xf]
    %v3890 = vld [vmem:[%s9 + $0x2c] sm:$0xf]
    %v3891 = vld [vmem:[%s9 + $0x30] sm:$0xf]
    %v3892 = vld [vmem:[%s9 + $0x34] sm:$0xf]
    %v3893 = vld [vmem:[%s9 + $0x38] sm:$0xf]
    %v3894 = vld [vmem:[%s9 + $0x3c] sm:$0xf]
    %v3895 = vld [vmem:[%s9 + $0x40] sm:$0xf]
    %v3896 = vld [vmem:[%s9 + $0x44] sm:$0xf]
    %v3897 = vld [vmem:[%s9 + $0x48] sm:$0xf]
    %v3898 = vld [vmem:[%s9 + $0x4c] sm:$0xf]
    %v3899 = vld [vmem:[%s9 + $0x50] sm:$0xf]
    %v3900 = vld [vmem:[%s9 + $0x54] sm:$0xf]
    %v3901 = vld [vmem:[%s9 + $0x58] sm:$0xf]
    %v3902 = vld [vmem:[%s9 + $0x5c] sm:$0xf]
    %v3903 = vld [vmem:[%s9 + $0x60] sm:$0xf]
    %v3904 = vld [vmem:[%s9 + $0x64] sm:$0xf]
    %v3905 = vld [vmem:[%s9 + $0x68] sm:$0xf]
    %v3906 = vld [vmem:[%s9 + $0x6c] sm:$0xf]
    %v3907 = vld [vmem:[%s9 + $0x70] sm:$0xf]
    %v3908 = vld [vmem:[%s9 + $0x74] sm:$0xf]
    %v3909 = vld [vmem:[%s9 + $0x78] sm:$0xf]
    %v3910 = vld [vmem:[%s9 + $0x7c] sm:$0xf]
    %v3911 = vld [vmem:[%s9 + $0x80] sm:$0xf]
    %v3912 = vld [vmem:[%s9 + $0x84] sm:$0xf]
    %v3913 = vld [vmem:[%s9 + $0x88] sm:$0xf]
    %v3914 = vld [vmem:[%s9 + $0x8c] sm:$0xf]
    %v3915 = vld [vmem:[%s9 + $0x90] sm:$0xf]
    %v3916 = vld [vmem:[%s9 + $0x94] sm:$0xf]
    %v3917 = vld [vmem:[%s9 + $0x98] sm:$0xf]
    %v3918 = vld [vmem:[%s9 + $0x9c] sm:$0xf]
    %v3919 = vld [vmem:[%s9 + $0xa0] sm:$0xf]
    %v3920 = vld [vmem:[%s9 + $0xa4] sm:$0xf]
    %v3921 = vld [vmem:[%s9 + $0xa8] sm:$0xf]
    %v3922 = vld [vmem:[%s9 + $0xac] sm:$0xf]
    %v3923 = vld [vmem:[%s9 + $0xb0] sm:$0xf]
    %v3924 = vld [vmem:[%s9 + $0xb4] sm:$0xf]
    %v3925 = vld [vmem:[%s9 + $0xb8] sm:$0xf]
    %v3926 = vld [vmem:[%s9 + $0xbc] sm:$0xf]
    %v3927 = vld [vmem:[%s9 + $0xc0] sm:$0xf]
    %v3928 = vld [vmem:[%s9 + $0xc4] sm:$0xf]
    %v3929 = vld [vmem:[%s9 + $0xc8] sm:$0xf]
    %v3930 = vld [vmem:[%s9 + $0xcc] sm:$0xf]
    %v3931 = vld [vmem:[%s9 + $0xd0] sm:$0xf]
    %v3932 = vld [vmem:[%s9 + $0xd4] sm:$0xf]
    %v3933 = vld [vmem:[%s9 + $0xd8] sm:$0xf]
    %v3934 = vld [vmem:[%s9 + $0xdc] sm:$0xf]
    %v3935 = vld [vmem:[%s9 + $0xe0] sm:$0xf]
    %v3936 = vld [vmem:[%s9 + $0xe4] sm:$0xf]
    %v3937 = vld [vmem:[%s9 + $0xe8] sm:$0xf]
    %v3938 = vld [vmem:[%s9 + $0xec] sm:$0xf]
    %v3939 = vld [vmem:[%s9 + $0xf0] sm:$0xf]
    %v3940 = vld [vmem:[%s9 + $0xf4] sm:$0xf]
    %v3941 = vld [vmem:[%s9 + $0xf8] sm:$0xf]
    %v3942 = vld [vmem:[%s9 + $0xfc] sm:$0xf]
    %v3943 = vld [vmem:[%s11] sm:$0x1]
    %v3945 = vlaneseq
    %v3946 = vshrl.u32 %v3945, 7
    %v3947 = vsub.s32 0, %v3946
    %v3948 = vrot.slane %v3943, %v3947
    %v4014 = vunpack.c.l.b16 %v3811
    %v4015 = vunpack.c.l.b16 %v3812
    %v4016 = vunpack.c.l.b16 %v3813
    %v4017 = vunpack.c.l.b16 %v3814
    %v4018 = vunpack.c.l.b16 %v3815
    %v4019 = vunpack.c.l.b16 %v3816
    %v4020 = vunpack.c.l.b16 %v3817
    %v4021 = vunpack.c.l.b16 %v3818
    %v4022 = vunpack.c.l.b16 %v3819
    %v4023 = vunpack.c.l.b16 %v3820
    %v4024 = vunpack.c.l.b16 %v3821
    %v4025 = vunpack.c.l.b16 %v3822
    %v4026 = vunpack.c.l.b16 %v3823
    %v4027 = vunpack.c.l.b16 %v3824
    %v4028 = vunpack.c.l.b16 %v3825
    %v4029 = vunpack.c.l.b16 %v3826
    %v4030 = vunpack.c.l.b16 %v3827
    %v4031 = vunpack.c.l.b16 %v3828
    %v4032 = vunpack.c.l.b16 %v3829
    %v4033 = vunpack.c.l.b16 %v3830
    %v4034 = vunpack.c.l.b16 %v3831
    %v4035 = vunpack.c.l.b16 %v3832
    %v4036 = vunpack.c.l.b16 %v3833
    %v4037 = vunpack.c.l.b16 %v3834
    %v4038 = vunpack.c.l.b16 %v3835
    %v4039 = vunpack.c.l.b16 %v3836
    %v4040 = vunpack.c.l.b16 %v3837
    %v4041 = vunpack.c.l.b16 %v3838
    %v4042 = vunpack.c.l.b16 %v3839
    %v4043 = vunpack.c.l.b16 %v3840
    %v4044 = vunpack.c.l.b16 %v3841
    %v4045 = vunpack.c.l.b16 %v3842
    %v4046 = vunpack.c.l.b16 %v3843
    %v4047 = vunpack.c.l.b16 %v3844
    %v4048 = vunpack.c.l.b16 %v3845
    %v4049 = vunpack.c.l.b16 %v3846
    %v4050 = vunpack.c.l.b16 %v3847
    %v4051 = vunpack.c.l.b16 %v3848
    %v4052 = vunpack.c.l.b16 %v3849
    %v4053 = vunpack.c.l.b16 %v3850
    %v4054 = vunpack.c.l.b16 %v3851
    %v4055 = vunpack.c.l.b16 %v3852
    %v4056 = vunpack.c.l.b16 %v3853
    %v4057 = vunpack.c.l.b16 %v3854
    %v4058 = vunpack.c.l.b16 %v3855
    %v4059 = vunpack.c.l.b16 %v3856
    %v4060 = vunpack.c.l.b16 %v3857
    %v4061 = vunpack.c.l.b16 %v3858
    %v4062 = vunpack.c.l.b16 %v3859
    %v4063 = vunpack.c.l.b16 %v3860
    %v4064 = vunpack.c.l.b16 %v3861
    %v4065 = vunpack.c.l.b16 %v3862
    %v4066 = vunpack.c.l.b16 %v3863
    %v4067 = vunpack.c.l.b16 %v3864
    %v4068 = vunpack.c.l.b16 %v3865
    %v4069 = vunpack.c.l.b16 %v3866
    %v4070 = vunpack.c.l.b16 %v3867
    %v4071 = vunpack.c.l.b16 %v3868
    %v4072 = vunpack.c.l.b16 %v3869
    %v4073 = vunpack.c.l.b16 %v3870
    %v4074 = vunpack.c.l.b16 %v3871
    %v4075 = vunpack.c.l.b16 %v3872
    %v4076 = vunpack.c.l.b16 %v3873
    %v4077 = vunpack.c.l.b16 %v3874
    %v4078 = vpack.c.b16 %v4015, %v4014
    %v4079 = vpack.c.b16 %v4017, %v4016
    %v4080 = vpack.c.b16 %v4019, %v4018
    %v4081 = vpack.c.b16 %v4021, %v4020
    %v4082 = vpack.c.b16 %v4023, %v4022
    %v4083 = vpack.c.b16 %v4025, %v4024
    %v4084 = vpack.c.b16 %v4027, %v4026
    %v4085 = vpack.c.b16 %v4029, %v4028
    %v4086 = vpack.c.b16 %v4031, %v4030
    %v4087 = vpack.c.b16 %v4033, %v4032
    %v4088 = vpack.c.b16 %v4035, %v4034
    %v4089 = vpack.c.b16 %v4037, %v4036
    %v4090 = vpack.c.b16 %v4039, %v4038
    %v4091 = vpack.c.b16 %v4041, %v4040
    %v4092 = vpack.c.b16 %v4043, %v4042
    %v4093 = vpack.c.b16 %v4045, %v4044
    %v4094 = vpack.c.b16 %v4047, %v4046
    %v4095 = vpack.c.b16 %v4049, %v4048
    %v4096 = vpack.c.b16 %v4051, %v4050
    %v4097 = vpack.c.b16 %v4053, %v4052
    %v4098 = vpack.c.b16 %v4055, %v4054
    %v4099 = vpack.c.b16 %v4057, %v4056
    %v4100 = vpack.c.b16 %v4059, %v4058
    %v4101 = vpack.c.b16 %v4061, %v4060
    %v4102 = vpack.c.b16 %v4063, %v4062
    %v4103 = vpack.c.b16 %v4065, %v4064
    %v4104 = vpack.c.b16 %v4067, %v4066
    %v4105 = vpack.c.b16 %v4069, %v4068
    %v4106 = vpack.c.b16 %v4071, %v4070
    %v4107 = vpack.c.b16 %v4073, %v4072
    %v4108 = vpack.c.b16 %v4075, %v4074
    %v4109 = vpack.c.b16 %v4077, %v4076
    %4142 = vmatprep.subr.bf16.mxu0 0
    %4143 = vmatpush1.bf16.msra.mxu0 %v4085
    %4144 = vmatprep.subr.bf16.mxu0 0
    %4145 = vmatpush1.bf16.msra.mxu0 %v4084
    %4146 = vmatprep.subr.bf16.mxu0 0
    %4147 = vmatpush1.bf16.msra.mxu0 %v4083
    %4148 = vmatprep.subr.bf16.mxu0 0
    %4149 = vmatpush1.bf16.msra.mxu0 %v4082
    %4150 = vmatprep.subr.bf16.mxu0 0
    %4151 = vmatpush1.bf16.msra.mxu0 %v4081
    %4152 = vmatprep.subr.bf16.mxu0 0
    %4153 = vmatpush1.bf16.msra.mxu0 %v4080
    %4154 = vmatprep.subr.bf16.mxu0 0
    %4155 = vmatpush1.bf16.msra.mxu0 %v4079
    %4156 = vmatprep.subr.bf16.mxu0 0
    %4157 = vmatpush1.bf16.msra.mxu0 %v4078
    %4158 = vmatprep.subr.bf16.mxu0 0
    %4159 = vmatpush2.bf16.msra.mxu0 %v4093
    %4160 = vmatprep.subr.bf16.mxu0 0
    %4161 = vmatpush2.bf16.msra.mxu0 %v4092
    %4162 = vmatprep.subr.bf16.mxu0 0
    %4163 = vmatpush2.bf16.msra.mxu0 %v4091
    %4164 = vmatprep.subr.bf16.mxu0 0
    %4165 = vmatpush2.bf16.msra.mxu0 %v4090
    %4166 = vmatprep.subr.bf16.mxu0 0
    %4167 = vmatpush2.bf16.msra.mxu0 %v4089
    %4168 = vmatprep.subr.bf16.mxu0 0
    %4169 = vmatpush2.bf16.msra.mxu0 %v4088
    %4170 = vmatprep.subr.bf16.mxu0 0
    %4171 = vmatpush2.bf16.msra.mxu0 %v4087
    %4172 = vmatprep.subr.bf16.mxu0 0
    %4173 = vmatpush2.bf16.msra.mxu0 %v4086
    %4174 = vmatprep.mubr.bf16.mxu0 %v3804
    %4175 = vmatmul.mubr.bf16.gmra.mxu0 %v3803
    %v4176 = vpop.f32.mrf.mxu0
    %v4177 = vadd.f32 %v3948, %v4176
    %v4178 = vpop.f32.mrf.mxu0
    %v4179 = vpop.f32.mrf.mxu0
    %v4180 = vadd.f32 %v3948, %v4179
    %v4181 = vpop.f32.mrf.mxu0
    %4182 = vmatprep.mubr.bf16.mxu0 %v3808
    %4183 = vmatmul.mubr.bf16.gmra.mxu0 %v3807
    %v4184 = vpop.f32.mrf.mxu0
    %v4185 = vadd.f32 %v3948, %v4184
    %v4186 = vpop.f32.mrf.mxu0
    %v4187 = vpop.f32.mrf.mxu0
    %v4188 = vadd.f32 %v3948, %v4187
    %v4189 = vpop.f32.mrf.mxu0
    %4190 = vdwg.mxu0
    %4191 = vmatprep.subr.bf16.mxu0 0
    %4192 = vmatpush1.bf16.msra.mxu0 %v4101
    %4193 = vmatprep.subr.bf16.mxu0 0
    %4194 = vmatpush1.bf16.msra.mxu0 %v4100
    %4195 = vmatprep.subr.bf16.mxu0 0
    %4196 = vmatpush1.bf16.msra.mxu0 %v4099
    %4197 = vmatprep.subr.bf16.mxu0 0
    %4198 = vmatpush1.bf16.msra.mxu0 %v4098
    %4199 = vmatprep.subr.bf16.mxu0 0
    %4200 = vmatpush1.bf16.msra.mxu0 %v4097
    %4201 = vmatprep.subr.bf16.mxu0 0
    %4202 = vmatpush1.bf16.msra.mxu0 %v4096
    %4203 = vmatprep.subr.bf16.mxu0 0
    %4204 = vmatpush1.bf16.msra.mxu0 %v4095
    %4205 = vmatprep.subr.bf16.mxu0 0
    %4206 = vmatpush1.bf16.msra.mxu0 %v4094
    %4207 = vmatprep.subr.bf16.mxu0 0
    %4208 = vmatpush2.bf16.msra.mxu0 %v4109
    %4209 = vmatprep.subr.bf16.mxu0 0
    %4210 = vmatpush2.bf16.msra.mxu0 %v4108
    %4211 = vmatprep.subr.bf16.mxu0 0
    %4212 = vmatpush2.bf16.msra.mxu0 %v4107
    %4213 = vmatprep.subr.bf16.mxu0 0
    %4214 = vmatpush2.bf16.msra.mxu0 %v4106
    %4215 = vmatprep.subr.bf16.mxu0 0
    %4216 = vmatpush2.bf16.msra.mxu0 %v4105
    %4217 = vmatprep.subr.bf16.mxu0 0
    %4218 = vmatpush2.bf16.msra.mxu0 %v4104
    %4219 = vmatprep.subr.bf16.mxu0 0
    %4220 = vmatpush2.bf16.msra.mxu0 %v4103
    %4221 = vmatprep.subr.bf16.mxu0 0
    %4222 = vmatpush2.bf16.msra.mxu0 %v4102
    %4223 = vmatprep.mubr.bf16.mxu0 %v3806
    %4224 = vmatmul.mubr.bf16.gmra.mxu0 %v3805
    %v4225 = vpop.f32.mrf.mxu0
    %v4226 = vadd.f32 %v4177, %v4225
    %v4227 = vpop.f32.mrf.mxu0
    %v4228 = vpop.f32.mrf.mxu0
    %v4229 = vadd.f32 %v4180, %v4228
    %v4230 = vpop.f32.mrf.mxu0
    %4231 = vmatprep.mubr.bf16.mxu0 %v3810
    %4232 = vmatmul.mubr.bf16.gmra.mxu0 %v3809
    %v4233 = vpop.f32.mrf.mxu0
    %v4234 = vadd.f32 %v4185, %v4233
    %v4235 = vpop.f32.mrf.mxu0
    %v4236 = vpop.f32.mrf.mxu0
    %v4237 = vadd.f32 %v4188, %v4236
    %v4238 = vpop.f32.mrf.mxu0
    %4239 = vdwg.mxu0
    %v4240 = vtanh.pop %v4226
    %v4241 = vtanh.pop %v4229
    %v4242 = vtanh.pop %v4234
    %v4243 = vtanh.pop %v4237
    %v4308 = vunpack.c.l.b16 %v3879
    %v4309 = vunpack.c.l.b16 %v3880
    %v4310 = vunpack.c.l.b16 %v3881
    %v4311 = vunpack.c.l.b16 %v3882
    %v4312 = vunpack.c.l.b16 %v3883
    %v4313 = vunpack.c.l.b16 %v3884
    %v4314 = vunpack.c.l.b16 %v3885
    %v4315 = vunpack.c.l.b16 %v3886
    %v4316 = vunpack.c.l.b16 %v3887
    %v4317 = vunpack.c.l.b16 %v3888
    %v4318 = vunpack.c.l.b16 %v3889
    %v4319 = vunpack.c.l.b16 %v3890
    %v4320 = vunpack.c.l.b16 %v3891
    %v4321 = vunpack.c.l.b16 %v3892
    %v4322 = vunpack.c.l.b16 %v3893
    %v4323 = vunpack.c.l.b16 %v3894
    %v4324 = vunpack.c.l.b16 %v3895
    %v4325 = vunpack.c.l.b16 %v3896
    %v4326 = vunpack.c.l.b16 %v3897
    %v4327 = vunpack.c.l.b16 %v3898
    %v4328 = vunpack.c.l.b16 %v3899
    %v4329 = vunpack.c.l.b16 %v3900
    %v4330 = vunpack.c.l.b16 %v3901
    %v4331 = vunpack.c.l.b16 %v3902
    %v4332 = vunpack.c.l.b16 %v3903
    %v4333 = vunpack.c.l.b16 %v3904
    %v4334 = vunpack.c.l.b16 %v3905
    %v4335 = vunpack.c.l.b16 %v3906
    %v4336 = vunpack.c.l.b16 %v3907
    %v4337 = vunpack.c.l.b16 %v3908
    %v4338 = vunpack.c.l.b16 %v3909
    %v4339 = vunpack.c.l.b16 %v3910
    %v4340 = vunpack.c.l.b16 %v3911
    %v4341 = vunpack.c.l.b16 %v3912
    %v4342 = vunpack.c.l.b16 %v3913
    %v4343 = vunpack.c.l.b16 %v3914
    %v4344 = vunpack.c.l.b16 %v3915
    %v4345 = vunpack.c.l.b16 %v3916
    %v4346 = vunpack.c.l.b16 %v3917
    %v4347 = vunpack.c.l.b16 %v3918
    %v4348 = vunpack.c.l.b16 %v3919
    %v4349 = vunpack.c.l.b16 %v3920
    %v4350 = vunpack.c.l.b16 %v3921
    %v4351 = vunpack.c.l.b16 %v3922
    %v4352 = vunpack.c.l.b16 %v3923
    %v4353 = vunpack.c.l.b16 %v3924
    %v4354 = vunpack.c.l.b16 %v3925
    %v4355 = vunpack.c.l.b16 %v3926
    %v4356 = vunpack.c.l.b16 %v3927
    %v4357 = vunpack.c.l.b16 %v3928
    %v4358 = vunpack.c.l.b16 %v3929
    %v4359 = vunpack.c.l.b16 %v3930
    %v4360 = vunpack.c.l.b16 %v3931
    %v4361 = vunpack.c.l.b16 %v3932
    %v4362 = vunpack.c.l.b16 %v3933
    %v4363 = vunpack.c.l.b16 %v3934
    %v4364 = vunpack.c.l.b16 %v3935
    %v4365 = vunpack.c.l.b16 %v3936
    %v4366 = vunpack.c.l.b16 %v3937
    %v4367 = vunpack.c.l.b16 %v3938
    %v4368 = vunpack.c.l.b16 %v3939
    %v4369 = vunpack.c.l.b16 %v3940
    %v4370 = vunpack.c.l.b16 %v3941
    %v4371 = vunpack.c.l.b16 %v3942
    %v4372 = vpack.c.b16 %v4309, %v4308
    %v4373 = vpack.c.b16 %v4311, %v4310
    %v4374 = vpack.c.b16 %v4313, %v4312
    %v4375 = vpack.c.b16 %v4315, %v4314
    %v4376 = vpack.c.b16 %v4317, %v4316
    %v4377 = vpack.c.b16 %v4319, %v4318
    %v4378 = vpack.c.b16 %v4321, %v4320
    %v4379 = vpack.c.b16 %v4323, %v4322
    %v4380 = vpack.c.b16 %v4325, %v4324
    %v4381 = vpack.c.b16 %v4327, %v4326
    %v4382 = vpack.c.b16 %v4329, %v4328
    %v4383 = vpack.c.b16 %v4331, %v4330
    %v4384 = vpack.c.b16 %v4333, %v4332
    %v4385 = vpack.c.b16 %v4335, %v4334
    %v4386 = vpack.c.b16 %v4337, %v4336
    %v4387 = vpack.c.b16 %v4339, %v4338
    %v4388 = vpack.c.b16 %v4341, %v4340
    %v4389 = vpack.c.b16 %v4343, %v4342
    %v4390 = vpack.c.b16 %v4345, %v4344
    %v4391 = vpack.c.b16 %v4347, %v4346
    %v4392 = vpack.c.b16 %v4349, %v4348
    %v4393 = vpack.c.b16 %v4351, %v4350
    %v4394 = vpack.c.b16 %v4353, %v4352
    %v4395 = vpack.c.b16 %v4355, %v4354
    %v4396 = vpack.c.b16 %v4357, %v4356
    %v4397 = vpack.c.b16 %v4359, %v4358
    %v4398 = vpack.c.b16 %v4361, %v4360
    %v4399 = vpack.c.b16 %v4363, %v4362
    %v4400 = vpack.c.b16 %v4365, %v4364
    %v4401 = vpack.c.b16 %v4367, %v4366
    %v4402 = vpack.c.b16 %v4369, %v4368
    %v4403 = vpack.c.b16 %v4371, %v4370
    %4436 = vmatprep.subr.bf16.mxu0 0
    %4437 = vmatpush1.bf16.msra.mxu0 %v4379
    %4438 = vmatprep.subr.bf16.mxu0 0
    %4439 = vmatpush1.bf16.msra.mxu0 %v4378
    %4440 = vmatprep.subr.bf16.mxu0 0
    %4441 = vmatpush1.bf16.msra.mxu0 %v4377
    %4442 = vmatprep.subr.bf16.mxu0 0
    %4443 = vmatpush1.bf16.msra.mxu0 %v4376
    %4444 = vmatprep.subr.bf16.mxu0 0
    %4445 = vmatpush1.bf16.msra.mxu0 %v4375
    %4446 = vmatprep.subr.bf16.mxu0 0
    %4447 = vmatpush1.bf16.msra.mxu0 %v4374
    %4448 = vmatprep.subr.bf16.mxu0 0
    %4449 = vmatpush1.bf16.msra.mxu0 %v4373
    %4450 = vmatprep.subr.bf16.mxu0 0
    %4451 = vmatpush1.bf16.msra.mxu0 %v4372
    %4452 = vmatprep.subr.bf16.mxu0 0
    %4453 = vmatpush2.bf16.msra.mxu0 %v4387
    %4454 = vmatprep.subr.bf16.mxu0 0
    %4455 = vmatpush2.bf16.msra.mxu0 %v4386
    %4456 = vmatprep.subr.bf16.mxu0 0
    %4457 = vmatpush2.bf16.msra.mxu0 %v4385
    %4458 = vmatprep.subr.bf16.mxu0 0
    %4459 = vmatpush2.bf16.msra.mxu0 %v4384
    %4460 = vmatprep.subr.bf16.mxu0 0
    %4461 = vmatpush2.bf16.msra.mxu0 %v4383
    %4462 = vmatprep.subr.bf16.mxu0 0
    %4463 = vmatpush2.bf16.msra.mxu0 %v4382
    %4464 = vmatprep.subr.bf16.mxu0 0
    %4465 = vmatpush2.bf16.msra.mxu0 %v4381
    %4466 = vmatprep.subr.bf16.mxu0 0
    %4467 = vmatpush2.bf16.msra.mxu0 %v4380
    %4468 = vmatprep.mubr.bf16.mxu0 %v3806
    %4469 = vmatmul.mubr.bf16.gmra.mxu0 %v3805
    %v4470 = vpop.f32.mrf.mxu0
    %v4471 = vadd.f32 %v3948, %v4470
    %v4472 = vpop.f32.mrf.mxu0
    %v4473 = vpop.f32.mrf.mxu0
    %v4474 = vadd.f32 %v3948, %v4473
    %v4475 = vpop.f32.mrf.mxu0
    %4476 = vmatprep.mubr.bf16.mxu0 %v3810
    %4477 = vmatmul.mubr.bf16.gmra.mxu0 %v3809
    %v4478 = vpop.f32.mrf.mxu0
    %v4479 = vadd.f32 %v3948, %v4478
    %v4480 = vpop.f32.mrf.mxu0
    %v4481 = vpop.f32.mrf.mxu0
    %v4482 = vadd.f32 %v3948, %v4481
    %v4483 = vpop.f32.mrf.mxu0
    %4484 = vdwg.mxu0
    %4485 = vmatprep.subr.bf16.mxu0 0
    %4486 = vmatpush1.bf16.msra.mxu0 %v4395
    %4487 = vmatprep.subr.bf16.mxu0 0
    %4488 = vmatpush1.bf16.msra.mxu0 %v4394
    %4489 = vmatprep.subr.bf16.mxu0 0
    %4490 = vmatpush1.bf16.msra.mxu0 %v4393
    %4491 = vmatprep.subr.bf16.mxu0 0
    %4492 = vmatpush1.bf16.msra.mxu0 %v4392
    %4493 = vmatprep.subr.bf16.mxu0 0
    %4494 = vmatpush1.bf16.msra.mxu0 %v4391
    %4495 = vmatprep.subr.bf16.mxu0 0
    %4496 = vmatpush1.bf16.msra.mxu0 %v4390
    %4497 = vmatprep.subr.bf16.mxu0 0
    %4498 = vmatpush1.bf16.msra.mxu0 %v4389
    %4499 = vmatprep.subr.bf16.mxu0 0
    %4500 = vmatpush1.bf16.msra.mxu0 %v4388
    %4501 = vmatprep.subr.bf16.mxu0 0
    %4502 = vmatpush2.bf16.msra.mxu0 %v4403
    %4503 = vmatprep.subr.bf16.mxu0 0
    %4504 = vmatpush2.bf16.msra.mxu0 %v4402
    %4505 = vmatprep.subr.bf16.mxu0 0
    %4506 = vmatpush2.bf16.msra.mxu0 %v4401
    %4507 = vmatprep.subr.bf16.mxu0 0
    %4508 = vmatpush2.bf16.msra.mxu0 %v4400
    %4509 = vmatprep.subr.bf16.mxu0 0
    %4510 = vmatpush2.bf16.msra.mxu0 %v4399
    %4511 = vmatprep.subr.bf16.mxu0 0
    %4512 = vmatpush2.bf16.msra.mxu0 %v4398
    %4513 = vmatprep.subr.bf16.mxu0 0
    %4514 = vmatpush2.bf16.msra.mxu0 %v4397
    %4515 = vmatprep.subr.bf16.mxu0 0
    %4516 = vmatpush2.bf16.msra.mxu0 %v4396
    %4517 = vmatprep.mubr.bf16.mxu0 %v3876
    %4518 = vmatmul.mubr.bf16.gmra.mxu0 %v3875
    %v4519 = vpop.f32.mrf.mxu0
    %v4520 = vadd.f32 %v4471, %v4519
    %v4521 = vpop.f32.mrf.mxu0
    %v4522 = vpop.f32.mrf.mxu0
    %v4523 = vadd.f32 %v4474, %v4522
    %v4524 = vpop.f32.mrf.mxu0
    %4525 = vmatprep.mubr.bf16.mxu0 %v3878
    %4526 = vmatmul.mubr.bf16.gmra.mxu0 %v3877
    %v4527 = vpop.f32.mrf.mxu0
    %v4528 = vadd.f32 %v4479, %v4527
    %v4529 = vpop.f32.mrf.mxu0
    %v4530 = vpop.f32.mrf.mxu0
    %v4531 = vadd.f32 %v4482, %v4530
    %v4532 = vpop.f32.mrf.mxu0
    %4533 = vdwg.mxu0
    %v4534 = vtanh.pop %v4520
    %v4535 = vtanh.pop %v4523
    %v4536 = vtanh.pop %v4528
    %v4537 = vtanh.pop %v4531
    %4542 = vrot.lane.b32.xlu0 %v4534, 32
    %v4543 = vpop.permute.xlu0 %4542
    %4544 = vrot.lane.b32.xlu0 %v4535, 32
    %v4545 = vpop.permute.xlu0 %4544
    %4546 = vrot.lane.b32.xlu0 %v4536, 32
    %v4547 = vpop.permute.xlu0 %4546
    %4548 = vrot.lane.b32.xlu0 %v4537, 32
    %v4549 = vpop.permute.xlu0 %4548
    %v4554 = vsel %vm672, %v4240, %v4543
    %v4555 = vsel %vm672, %v4241, %v4545
    %v4556 = vsel %vm672, %v4242, %v4547
    %v4557 = vsel %vm672, %v4243, %v4549
    %4558 = vst.msk [vmem:[%s12] sm:$0xff] %vm674, %v4554
    %4559 = vst.msk [vmem:[%s12 + $0x8] sm:$0xff] %vm674, %v4555
    %4560 = vst.msk [vmem:[%s12 + $0x10] sm:$0xff] %vm674, %v4556
    %4561 = vst.msk [vmem:[%s12 + $0x18] sm:$0xff] %vm674, %v4557
    // Predicated region
    $region66: #{generator_forward.1} parent=1 // pred_check
      _
    $region67: #{generator_forward.1} parent=1 // pred_check_branch
      %4563 = sbr.rel (0) target = $region69
    $region68: #{generator_forward.1} parent=1 // pred_region
      _
    $region69: #{generator_forward.1} parent=1 // pred_fallthru
      _
    // Predicated region
    $region70: #{generator_forward.1} parent=1 // pred_check
      _
    $region71: #{generator_forward.1} parent=1 // pred_check_branch
      %4565 = sbr.rel (0) target = $region73
    $region72: #{generator_forward.1} parent=1 // pred_region
      _
    $region73: #{generator_forward.1} parent=1 // pred_fallthru
      _
    %4566 = vsyncpa [#allocation3], 1
    %4567 = vsyncpa [#allocation5], 1
    %4568 = vsyncpa [#allocation8], 1

</llo_original>
